<compile_context>
chip_gen: v7x
topology: tpu7x:2x2x1
jax: 0.10.0
libtpu: 0.0.40
codegen_flags: <defaults>
</compile_context>

<pallas_src>
import jax
import jax.numpy as jnp
from jax.experimental import pallas as pl
from jax.experimental.pallas import tpu as pltpu

# ---- Problem sizes (from the PyTorch module) --------------------------------
N, CIN, H, W = 3, 58, 2, 5
COUT, K = 29, 6
STRIDE, PAD, OUT_PAD = 1, 1, 1
# NOTE: output_padding=1 with stride=1 is rejected by PyTorch's validator; we keep
# the natural "extra bottom/right padding" semantics used (and cross-checked against
# the XLA conv reference) in the previous submissions.
# TODO(synk): revisit if the intended spec turns out to differ.
OH = (H - 1) * STRIDE - 2 * PAD + (K - 1) + OUT_PAD + 1   # 6
OW = (W - 1) * STRIDE - 2 * PAD + (K - 1) + OUT_PAD + 1   # 9

NEG_SCALE = 0.284

# ---- Padded / tiled sizes used by the kernel --------------------------------
PAD_LO = K - 1 - PAD              # 4    top/left zero padding of the flipped conv
PAD_HI = K - 1 - PAD + OUT_PAD    # 5    bottom/right zero padding
CINP = 64                         # 58 -> 64 channels (per kx copy)
KCIN = K * CINP                   # 384  contraction depth (kx folded into channels)
COP = 32                          # 29 -> 32 COUT rows (sublane/M dim of the dot)
OHP, OWP = 8, 16                  # OH (6) -> 8, OW (9) -> 16
OHWP = OHP * OWP                  # 128  lane-dense output tile per image
HPAD = OHP + K - 1                # 13   padded height  (ky + OHP <= HPAD)
WPAD = OWP + K - 1                # 21   padded width   (kx + OWP <= WPAD)
LQ = HPAD * OWP                   # 208  flattened (h*OWP + w) spatial lane extent


def convt_leaky_kernel(xh_ref, xl_ref, wh_ref, wl_ref, o_ref):
    """One batch image per grid step.

    xh_ref/xl_ref : (1, KCIN, LQ)   bf16  hi/lo halves of the kx-folded activations
    wh_ref/wl_ref : (K, COP, KCIN)  bf16  hi/lo halves of the flipped weight, per ky
    o_ref         : (1, COP, OHWP)  f32   output tile laid out as [co, oh*OWP + ow]
    """
    acc = None
    for ky in range(K):
        # Columns [ky*OWP, ky*OWP + 128) of the flattened (h*OWP + w) axis are exactly
        # the (oh, ow) output window shifted down by ky rows; the kx shifts are already
        # folded into the 384-deep contraction, so no unaligned sublane slicing.
        rhs_hi = xh_ref[0, :, pl.ds(ky * OWP, OHWP)]          # (KCIN, 128) bf16
        rhs_lo = xl_ref[0, :, pl.ds(ky * OWP, OHWP)]
        lhs_hi = wh_ref[ky]                                   # (COP, KCIN) bf16
        lhs_lo = wl_ref[ky]
        # bf16 3-pass split (drop the lo*lo term).  Written as a plain
        # `acc = acc + dot(...)` chain so v7x can fold the adds into MRB in-place
        # accumulation; on v5e/v6e they are cheap (32,128) VPU adds.
        for a, b in ((lhs_hi, rhs_hi), (lhs_hi, rhs_lo), (lhs_lo, rhs_hi)):
            d = jnp.dot(a, b, preferred_element_type=jnp.float32)
            acc = d if acc is None else acc + d
    o_ref[0] = jnp.where(acc > 0, acc, acc * NEG_SCALE)


def prepare_weight(w):
    """Hoisted per-model weight preprocessing (module-init analogue).

    w: (CIN, COUT, K, K) float32, PyTorch ConvTranspose2d layout.
    Returns (w_hi, w_lo), each (K, COP, K*CINP) bf16 with
        w_*[ky][co, kx*CINP + ci] ~= w[ci, co, K-1-ky, K-1-kx]
    i.e. the spatially flipped weight with kx folded into the contraction dim,
    COUT padded to 32 and CIN padded to 64 per kx copy, split into bf16 hi/lo
    halves for the 3-pass matmul.  Total: 2 x 147 KB = 295 KB.
    """
    wf = jnp.flip(w, axis=(2, 3)).transpose(2, 1, 3, 0)        # (ky, co, kx, ci)
    wf = jnp.pad(wf, ((0, 0), (0, COP - COUT), (0, 0), (0, CINP - CIN)))
    wf = wf.reshape(K, COP, KCIN).astype(jnp.float32)
    w_hi = wf.astype(jnp.bfloat16)
    w_lo = (wf - w_hi.astype(jnp.float32)).astype(jnp.bfloat16)
    return w_hi, w_lo


@jax.jit
def model_forward(x, w_hi, w_lo):
    """x: (N, CIN, H, W) f32 NCHW.  Returns (N, COUT, OH, OW) f32 NCHW."""
    # --- prologue: pad + fold kx into the channel dim + bf16 hi/lo split -------
    # (x is already channel-major, so no input transpose is needed at all.)
    xpad = jnp.pad(
        x,
        ((0, 0), (0, CINP - CIN),
         (PAD_LO, HPAD - PAD_LO - H), (PAD_LO, WPAD - PAD_LO - W)),
    )                                                          # (N, 64, 13, 21)
    xcol = jnp.concatenate(
        [xpad[:, :, :, kx:kx + OWP] for kx in range(K)], axis=1
    ).reshape(N, KCIN, LQ)                                     # (N, 384, 208)
    x_hi = xcol.astype(jnp.bfloat16)
    x_lo = (xcol - x_hi.astype(jnp.float32)).astype(jnp.bfloat16)

    flops = 2 * COP * KCIN * OHWP * K * N * 3                  # 3 bf16 passes
    bytes_accessed = (2 * N * KCIN * LQ * 2                    # x_hi + x_lo
                      + 2 * K * COP * KCIN * 2                 # w_hi + w_lo
                      + N * COP * OHWP * 4)                    # output

    out = pl.pallas_call(
        convt_leaky_kernel,
        out_shape=jax.ShapeDtypeStruct((N, COP, OHWP), jnp.float32),
        grid=(N,),
        in_specs=[
            pl.BlockSpec((1, KCIN, LQ), lambda n: (n, 0, 0)),     # per-image chunk
            pl.BlockSpec((1, KCIN, LQ), lambda n: (n, 0, 0)),
            pl.BlockSpec((K, COP, KCIN), lambda n: (0, 0, 0)),    # VMEM-resident
            pl.BlockSpec((K, COP, KCIN), lambda n: (0, 0, 0)),
        ],
        out_specs=pl.BlockSpec((1, COP, OHWP), lambda n: (n, 0, 0)),
        compiler_params=pltpu.CompilerParams(dimension_semantics=("arbitrary",)),
        cost_estimate=pl.CostEstimate(
            flops=flops, transcendentals=0, bytes_accessed=bytes_accessed),
    )(x_hi, x_lo, w_hi, w_lo)

    # --- epilogue: free reshape + small slice, no transpose --------------------
    return out.reshape(N, COP, OHP, OWP)[:, :COUT, :OH, :OW]


def reference_forward(x, w):
    """Plain-JAX reference (XLA conv, f32 HIGHEST) for correctness checking."""
    w_t = jnp.flip(w, axis=(2, 3)).transpose(1, 0, 2, 3)       # (COUT, CIN, K, K)
    v1 = jax.lax.conv_general_dilated(
        x, w_t, window_strides=(1, 1),
        padding=[(PAD_LO, PAD_HI)] * 2,
        dimension_numbers=("NCHW", "OIHW", "NCHW"),
        precision=jax.lax.Precision.HIGHEST,
    )
    return jnp.where(v1 > 0, v1, v1 * NEG_SCALE)


if __name__ == "__main__":
    key = jax.random.PRNGKey(0)
    k_x, k_w = jax.random.split(key)
    x7 = jax.random.normal(k_x, (N, CIN, H, W), dtype=jnp.float32)
    # Deterministic synthetic weight (shape matches nn.ConvTranspose2d(58, 29, 6))
    weight = 0.05 * jax.random.normal(k_w, (CIN, COUT, K, K), dtype=jnp.float32)

    # Weight prep is hoisted out of the per-call path (module-init analogue).
    w_hi, w_lo = jax.block_until_ready(prepare_weight(weight))

    y = jax.block_until_ready(model_forward(x7, w_hi, w_lo))
    assert y.shape == (N, COUT, OH, OW), y.shape

    y_ref = jax.block_until_ready(reference_forward(x7, weight))
    max_err = float(jnp.max(jnp.abs(y - y_ref)))
    assert jnp.allclose(y, y_ref, rtol=1e-4, atol=1e-4), max_err

    print("KERNEL_OK")
</pallas_src>

<mosaic_0001>
module attributes {stable_mosaic.version = 11 : i64} {
  func.func @convt_leaky_kernel(%arg0: i32, %arg1: memref<1x384x208xbf16, #tpu.memory_space<vmem>>, %arg2: memref<1x384x208xbf16, #tpu.memory_space<vmem>>, %arg3: memref<6x32x384xbf16, #tpu.memory_space<vmem>>, %arg4: memref<6x32x384xbf16, #tpu.memory_space<vmem>>, %arg5: memref<1x32x128xf32, #tpu.memory_space<vmem>>) attributes {dimension_semantics = [#tpu.dimension_semantics<arbitrary>], iteration_bounds = array<i64: 3>, scalar_prefetch = 0 : i64, scratch_operands = 0 : i64, tpu.core_type = #tpu.core_type<tc>, window_params = [{transform_indices = @transform_0, window_bounds = array<i64: 1, 384, 208>}, {transform_indices = @transform_1, window_bounds = array<i64: 1, 384, 208>}, {pipeline_mode = #tpu.pipeline_mode<synchronous>, transform_indices = @transform_2, window_bounds = array<i64: 6, 32, 384>}, {pipeline_mode = #tpu.pipeline_mode<synchronous>, transform_indices = @transform_3, window_bounds = array<i64: 6, 32, 384>}, {transform_indices = @transform_4, window_bounds = array<i64: 1, 32, 128>}]} {
    %c0 = arith.constant 0 : index
    %c0_0 = arith.constant 0 : index
    %c0_1 = arith.constant 0 : index
    %0 = vector.load %arg1[%c0, %c0_0, %c0_1] : memref<1x384x208xbf16, #tpu.memory_space<vmem>>, vector<1x384x128xbf16>
    %1 = vector.shape_cast %0 : vector<1x384x128xbf16> to vector<384x128xbf16>
    %c0_2 = arith.constant 0 : index
    %c0_3 = arith.constant 0 : index
    %c0_4 = arith.constant 0 : index
    %2 = vector.load %arg2[%c0_2, %c0_3, %c0_4] : memref<1x384x208xbf16, #tpu.memory_space<vmem>>, vector<1x384x128xbf16>
    %3 = vector.shape_cast %2 : vector<1x384x128xbf16> to vector<384x128xbf16>
    %c0_5 = arith.constant 0 : index
    %c0_6 = arith.constant 0 : index
    %c0_7 = arith.constant 0 : index
    %4 = vector.load %arg3[%c0_5, %c0_6, %c0_7] : memref<6x32x384xbf16, #tpu.memory_space<vmem>>, vector<1x32x384xbf16>
    %5 = vector.shape_cast %4 : vector<1x32x384xbf16> to vector<32x384xbf16>
    %c0_8 = arith.constant 0 : index
    %c0_9 = arith.constant 0 : index
    %c0_10 = arith.constant 0 : index
    %6 = vector.load %arg4[%c0_8, %c0_9, %c0_10] : memref<6x32x384xbf16, #tpu.memory_space<vmem>>, vector<1x32x384xbf16>
    %7 = vector.shape_cast %6 : vector<1x32x384xbf16> to vector<32x384xbf16>
    %cst = arith.constant dense<0.000000e+00> : vector<32x128xf32>
    %8 = tpu.matmul %5, %1, %cst {dimension_numbers = #tpu.dot_dimension_numbers<[1], [0], [0], [1], [0, 0, 1, 1], [], []>} : vector<32x384xbf16>, vector<384x128xbf16>, vector<32x128xf32> -> vector<32x128xf32>
    %cst_11 = arith.constant dense<0.000000e+00> : vector<32x128xf32>
    %9 = tpu.matmul %5, %3, %cst_11 {dimension_numbers = #tpu.dot_dimension_numbers<[1], [0], [0], [1], [0, 0, 1, 1], [], []>} : vector<32x384xbf16>, vector<384x128xbf16>, vector<32x128xf32> -> vector<32x128xf32>
    %10 = arith.addf %8, %9 : vector<32x128xf32>
    %cst_12 = arith.constant dense<0.000000e+00> : vector<32x128xf32>
    %11 = tpu.matmul %7, %1, %cst_12 {dimension_numbers = #tpu.dot_dimension_numbers<[1], [0], [0], [1], [0, 0, 1, 1], [], []>} : vector<32x384xbf16>, vector<384x128xbf16>, vector<32x128xf32> -> vector<32x128xf32>
    %12 = arith.addf %10, %11 : vector<32x128xf32>
    %c0_13 = arith.constant 0 : index
    %c0_14 = arith.constant 0 : index
    %c16 = arith.constant 16 : index
    %13 = vector.load %arg1[%c0_13, %c0_14, %c16] : memref<1x384x208xbf16, #tpu.memory_space<vmem>>, vector<1x384x128xbf16>
    %14 = vector.shape_cast %13 : vector<1x384x128xbf16> to vector<384x128xbf16>
    %c0_15 = arith.constant 0 : index
    %c0_16 = arith.constant 0 : index
    %c16_17 = arith.constant 16 : index
    %15 = vector.load %arg2[%c0_15, %c0_16, %c16_17] : memref<1x384x208xbf16, #tpu.memory_space<vmem>>, vector<1x384x128xbf16>
    %16 = vector.shape_cast %15 : vector<1x384x128xbf16> to vector<384x128xbf16>
    %c1 = arith.constant 1 : index
    %c0_18 = arith.constant 0 : index
    %c0_19 = arith.constant 0 : index
    %17 = vector.load %arg3[%c1, %c0_18, %c0_19] : memref<6x32x384xbf16, #tpu.memory_space<vmem>>, vector<1x32x384xbf16>
    %18 = vector.shape_cast %17 : vector<1x32x384xbf16> to vector<32x384xbf16>
    %c1_20 = arith.constant 1 : index
    %c0_21 = arith.constant 0 : index
    %c0_22 = arith.constant 0 : index
    %19 = vector.load %arg4[%c1_20, %c0_21, %c0_22] : memref<6x32x384xbf16, #tpu.memory_space<vmem>>, vector<1x32x384xbf16>
    %20 = vector.shape_cast %19 : vector<1x32x384xbf16> to vector<32x384xbf16>
    %cst_23 = arith.constant dense<0.000000e+00> : vector<32x128xf32>
    %21 = tpu.matmul %18, %14, %cst_23 {dimension_numbers = #tpu.dot_dimension_numbers<[1], [0], [0], [1], [0, 0, 1, 1], [], []>} : vector<32x384xbf16>, vector<384x128xbf16>, vector<32x128xf32> -> vector<32x128xf32>
    %22 = arith.addf %12, %21 : vector<32x128xf32>
    %cst_24 = arith.constant dense<0.000000e+00> : vector<32x128xf32>
    %23 = tpu.matmul %18, %16, %cst_24 {dimension_numbers = #tpu.dot_dimension_numbers<[1], [0], [0], [1], [0, 0, 1, 1], [], []>} : vector<32x384xbf16>, vector<384x128xbf16>, vector<32x128xf32> -> vector<32x128xf32>
    %24 = arith.addf %22, %23 : vector<32x128xf32>
    %cst_25 = arith.constant dense<0.000000e+00> : vector<32x128xf32>
    %25 = tpu.matmul %20, %14, %cst_25 {dimension_numbers = #tpu.dot_dimension_numbers<[1], [0], [0], [1], [0, 0, 1, 1], [], []>} : vector<32x384xbf16>, vector<384x128xbf16>, vector<32x128xf32> -> vector<32x128xf32>
    %26 = arith.addf %24, %25 : vector<32x128xf32>
    %c0_26 = arith.constant 0 : index
    %c0_27 = arith.constant 0 : index
    %c32 = arith.constant 32 : index
    %27 = vector.load %arg1[%c0_26, %c0_27, %c32] : memref<1x384x208xbf16, #tpu.memory_space<vmem>>, vector<1x384x128xbf16>
    %28 = vector.shape_cast %27 : vector<1x384x128xbf16> to vector<384x128xbf16>
    %c0_28 = arith.constant 0 : index
    %c0_29 = arith.constant 0 : index
    %c32_30 = arith.constant 32 : index
    %29 = vector.load %arg2[%c0_28, %c0_29, %c32_30] : memref<1x384x208xbf16, #tpu.memory_space<vmem>>, vector<1x384x128xbf16>
    %30 = vector.shape_cast %29 : vector<1x384x128xbf16> to vector<384x128xbf16>
    %c2 = arith.constant 2 : index
    %c0_31 = arith.constant 0 : index
    %c0_32 = arith.constant 0 : index
    %31 = vector.load %arg3[%c2, %c0_31, %c0_32] : memref<6x32x384xbf16, #tpu.memory_space<vmem>>, vector<1x32x384xbf16>
    %32 = vector.shape_cast %31 : vector<1x32x384xbf16> to vector<32x384xbf16>
    %c2_33 = arith.constant 2 : index
    %c0_34 = arith.constant 0 : index
    %c0_35 = arith.constant 0 : index
    %33 = vector.load %arg4[%c2_33, %c0_34, %c0_35] : memref<6x32x384xbf16, #tpu.memory_space<vmem>>, vector<1x32x384xbf16>
    %34 = vector.shape_cast %33 : vector<1x32x384xbf16> to vector<32x384xbf16>
    %cst_36 = arith.constant dense<0.000000e+00> : vector<32x128xf32>
    %35 = tpu.matmul %32, %28, %cst_36 {dimension_numbers = #tpu.dot_dimension_numbers<[1], [0], [0], [1], [0, 0, 1, 1], [], []>} : vector<32x384xbf16>, vector<384x128xbf16>, vector<32x128xf32> -> vector<32x128xf32>
    %36 = arith.addf %26, %35 : vector<32x128xf32>
    %cst_37 = arith.constant dense<0.000000e+00> : vector<32x128xf32>
    %37 = tpu.matmul %32, %30, %cst_37 {dimension_numbers = #tpu.dot_dimension_numbers<[1], [0], [0], [1], [0, 0, 1, 1], [], []>} : vector<32x384xbf16>, vector<384x128xbf16>, vector<32x128xf32> -> vector<32x128xf32>
    %38 = arith.addf %36, %37 : vector<32x128xf32>
    %cst_38 = arith.constant dense<0.000000e+00> : vector<32x128xf32>
    %39 = tpu.matmul %34, %28, %cst_38 {dimension_numbers = #tpu.dot_dimension_numbers<[1], [0], [0], [1], [0, 0, 1, 1], [], []>} : vector<32x384xbf16>, vector<384x128xbf16>, vector<32x128xf32> -> vector<32x128xf32>
    %40 = arith.addf %38, %39 : vector<32x128xf32>
    %c0_39 = arith.constant 0 : index
    %c0_40 = arith.constant 0 : index
    %c48 = arith.constant 48 : index
    %41 = vector.load %arg1[%c0_39, %c0_40, %c48] : memref<1x384x208xbf16, #tpu.memory_space<vmem>>, vector<1x384x128xbf16>
    %42 = vector.shape_cast %41 : vector<1x384x128xbf16> to vector<384x128xbf16>
    %c0_41 = arith.constant 0 : index
    %c0_42 = arith.constant 0 : index
    %c48_43 = arith.constant 48 : index
    %43 = vector.load %arg2[%c0_41, %c0_42, %c48_43] : memref<1x384x208xbf16, #tpu.memory_space<vmem>>, vector<1x384x128xbf16>
    %44 = vector.shape_cast %43 : vector<1x384x128xbf16> to vector<384x128xbf16>
    %c3 = arith.constant 3 : index
    %c0_44 = arith.constant 0 : index
    %c0_45 = arith.constant 0 : index
    %45 = vector.load %arg3[%c3, %c0_44, %c0_45] : memref<6x32x384xbf16, #tpu.memory_space<vmem>>, vector<1x32x384xbf16>
    %46 = vector.shape_cast %45 : vector<1x32x384xbf16> to vector<32x384xbf16>
    %c3_46 = arith.constant 3 : index
    %c0_47 = arith.constant 0 : index
    %c0_48 = arith.constant 0 : index
    %47 = vector.load %arg4[%c3_46, %c0_47, %c0_48] : memref<6x32x384xbf16, #tpu.memory_space<vmem>>, vector<1x32x384xbf16>
    %48 = vector.shape_cast %47 : vector<1x32x384xbf16> to vector<32x384xbf16>
    %cst_49 = arith.constant dense<0.000000e+00> : vector<32x128xf32>
    %49 = tpu.matmul %46, %42, %cst_49 {dimension_numbers = #tpu.dot_dimension_numbers<[1], [0], [0], [1], [0, 0, 1, 1], [], []>} : vector<32x384xbf16>, vector<384x128xbf16>, vector<32x128xf32> -> vector<32x128xf32>
    %50 = arith.addf %40, %49 : vector<32x128xf32>
    %cst_50 = arith.constant dense<0.000000e+00> : vector<32x128xf32>
    %51 = tpu.matmul %46, %44, %cst_50 {dimension_numbers = #tpu.dot_dimension_numbers<[1], [0], [0], [1], [0, 0, 1, 1], [], []>} : vector<32x384xbf16>, vector<384x128xbf16>, vector<32x128xf32> -> vector<32x128xf32>
    %52 = arith.addf %50, %51 : vector<32x128xf32>
    %cst_51 = arith.constant dense<0.000000e+00> : vector<32x128xf32>
    %53 = tpu.matmul %48, %42, %cst_51 {dimension_numbers = #tpu.dot_dimension_numbers<[1], [0], [0], [1], [0, 0, 1, 1], [], []>} : vector<32x384xbf16>, vector<384x128xbf16>, vector<32x128xf32> -> vector<32x128xf32>
    %54 = arith.addf %52, %53 : vector<32x128xf32>
    %c0_52 = arith.constant 0 : index
    %c0_53 = arith.constant 0 : index
    %c64 = arith.constant 64 : index
    %55 = vector.load %arg1[%c0_52, %c0_53, %c64] : memref<1x384x208xbf16, #tpu.memory_space<vmem>>, vector<1x384x128xbf16>
    %56 = vector.shape_cast %55 : vector<1x384x128xbf16> to vector<384x128xbf16>
    %c0_54 = arith.constant 0 : index
    %c0_55 = arith.constant 0 : index
    %c64_56 = arith.constant 64 : index
    %57 = vector.load %arg2[%c0_54, %c0_55, %c64_56] : memref<1x384x208xbf16, #tpu.memory_space<vmem>>, vector<1x384x128xbf16>
    %58 = vector.shape_cast %57 : vector<1x384x128xbf16> to vector<384x128xbf16>
    %c4 = arith.constant 4 : index
    %c0_57 = arith.constant 0 : index
    %c0_58 = arith.constant 0 : index
    %59 = vector.load %arg3[%c4, %c0_57, %c0_58] : memref<6x32x384xbf16, #tpu.memory_space<vmem>>, vector<1x32x384xbf16>
    %60 = vector.shape_cast %59 : vector<1x32x384xbf16> to vector<32x384xbf16>
    %c4_59 = arith.constant 4 : index
    %c0_60 = arith.constant 0 : index
    %c0_61 = arith.constant 0 : index
    %61 = vector.load %arg4[%c4_59, %c0_60, %c0_61] : memref<6x32x384xbf16, #tpu.memory_space<vmem>>, vector<1x32x384xbf16>
    %62 = vector.shape_cast %61 : vector<1x32x384xbf16> to vector<32x384xbf16>
    %cst_62 = arith.constant dense<0.000000e+00> : vector<32x128xf32>
    %63 = tpu.matmul %60, %56, %cst_62 {dimension_numbers = #tpu.dot_dimension_numbers<[1], [0], [0], [1], [0, 0, 1, 1], [], []>} : vector<32x384xbf16>, vector<384x128xbf16>, vector<32x128xf32> -> vector<32x128xf32>
    %64 = arith.addf %54, %63 : vector<32x128xf32>
    %cst_63 = arith.constant dense<0.000000e+00> : vector<32x128xf32>
    %65 = tpu.matmul %60, %58, %cst_63 {dimension_numbers = #tpu.dot_dimension_numbers<[1], [0], [0], [1], [0, 0, 1, 1], [], []>} : vector<32x384xbf16>, vector<384x128xbf16>, vector<32x128xf32> -> vector<32x128xf32>
    %66 = arith.addf %64, %65 : vector<32x128xf32>
    %cst_64 = arith.constant dense<0.000000e+00> : vector<32x128xf32>
    %67 = tpu.matmul %62, %56, %cst_64 {dimension_numbers = #tpu.dot_dimension_numbers<[1], [0], [0], [1], [0, 0, 1, 1], [], []>} : vector<32x384xbf16>, vector<384x128xbf16>, vector<32x128xf32> -> vector<32x128xf32>
    %68 = arith.addf %66, %67 : vector<32x128xf32>
    %c0_65 = arith.constant 0 : index
    %c0_66 = arith.constant 0 : index
    %c80 = arith.constant 80 : index
    %69 = vector.load %arg1[%c0_65, %c0_66, %c80] : memref<1x384x208xbf16, #tpu.memory_space<vmem>>, vector<1x384x128xbf16>
    %70 = vector.shape_cast %69 : vector<1x384x128xbf16> to vector<384x128xbf16>
    %c0_67 = arith.constant 0 : index
    %c0_68 = arith.constant 0 : index
    %c80_69 = arith.constant 80 : index
    %71 = vector.load %arg2[%c0_67, %c0_68, %c80_69] : memref<1x384x208xbf16, #tpu.memory_space<vmem>>, vector<1x384x128xbf16>
    %72 = vector.shape_cast %71 : vector<1x384x128xbf16> to vector<384x128xbf16>
    %c5 = arith.constant 5 : index
    %c0_70 = arith.constant 0 : index
    %c0_71 = arith.constant 0 : index
    %73 = vector.load %arg3[%c5, %c0_70, %c0_71] : memref<6x32x384xbf16, #tpu.memory_space<vmem>>, vector<1x32x384xbf16>
    %74 = vector.shape_cast %73 : vector<1x32x384xbf16> to vector<32x384xbf16>
    %c5_72 = arith.constant 5 : index
    %c0_73 = arith.constant 0 : index
    %c0_74 = arith.constant 0 : index
    %75 = vector.load %arg4[%c5_72, %c0_73, %c0_74] : memref<6x32x384xbf16, #tpu.memory_space<vmem>>, vector<1x32x384xbf16>
    %76 = vector.shape_cast %75 : vector<1x32x384xbf16> to vector<32x384xbf16>
    %cst_75 = arith.constant dense<0.000000e+00> : vector<32x128xf32>
    %77 = tpu.matmul %74, %70, %cst_75 {dimension_numbers = #tpu.dot_dimension_numbers<[1], [0], [0], [1], [0, 0, 1, 1], [], []>} : vector<32x384xbf16>, vector<384x128xbf16>, vector<32x128xf32> -> vector<32x128xf32>
    %78 = arith.addf %68, %77 : vector<32x128xf32>
    %cst_76 = arith.constant dense<0.000000e+00> : vector<32x128xf32>
    %79 = tpu.matmul %74, %72, %cst_76 {dimension_numbers = #tpu.dot_dimension_numbers<[1], [0], [0], [1], [0, 0, 1, 1], [], []>} : vector<32x384xbf16>, vector<384x128xbf16>, vector<32x128xf32> -> vector<32x128xf32>
    %80 = arith.addf %78, %79 : vector<32x128xf32>
    %cst_77 = arith.constant dense<0.000000e+00> : vector<32x128xf32>
    %81 = tpu.matmul %76, %70, %cst_77 {dimension_numbers = #tpu.dot_dimension_numbers<[1], [0], [0], [1], [0, 0, 1, 1], [], []>} : vector<32x384xbf16>, vector<384x128xbf16>, vector<32x128xf32> -> vector<32x128xf32>
    %82 = arith.addf %80, %81 : vector<32x128xf32>
    %cst_78 = arith.constant 0.000000e+00 : f32
    %83 = vector.broadcast %cst_78 : f32 to vector<32x128xf32>
    %84 = arith.cmpf ogt, %82, %83 : vector<32x128xf32>
    %cst_79 = arith.constant 2.840000e-01 : f32
    %85 = vector.broadcast %cst_79 : f32 to vector<32x128xf32>
    %86 = arith.mulf %82, %85 : vector<32x128xf32>
    %87 = arith.select %84, %82, %86 : vector<32x128xi1>, vector<32x128xf32>
    %c0_80 = arith.constant 0 : index
    %c0_81 = arith.constant 0 : index
    %c0_82 = arith.constant 0 : index
    %88 = vector.load %arg5[%c0_80, %c0_81, %c0_82] : memref<1x32x128xf32, #tpu.memory_space<vmem>>, vector<1x32x128xf32>
    %89 = vector.shape_cast %88 : vector<1x32x128xf32> to vector<32x128xf32>
    %90 = vector.shape_cast %87 : vector<32x128xf32> to vector<1x32x128xf32>
    tpu.vector_store %arg5[%c0_80, %c0_81, %c0_82], %90 {strides = array<i32>} : memref<1x32x128xf32, #tpu.memory_space<vmem>>, vector<1x32x128xf32>,
    return
  }
  func.func @transform_0(%arg0: i32) -> (i32, i32, i32) {
    %c0_i32 = arith.constant 0 : i32
    %c0_i32_0 = arith.constant 0 : i32
    %c0_i32_1 = arith.constant 0 : i32
    return %arg0, %c0_i32, %c0_i32_0 : i32, i32, i32
  }
  func.func @transform_1(%arg0: i32) -> (i32, i32, i32) {
    %c0_i32 = arith.constant 0 : i32
    %c0_i32_0 = arith.constant 0 : i32
    %c0_i32_1 = arith.constant 0 : i32
    return %arg0, %c0_i32, %c0_i32_0 : i32, i32, i32
  }
  func.func @transform_2(%arg0: i32) -> (i32, i32, i32) {
    %c0_i32 = arith.constant 0 : i32
    %c0_i32_0 = arith.constant 0 : i32
    %c0_i32_1 = arith.constant 0 : i32
    %c0_i32_2 = arith.constant 0 : i32
    return %c0_i32, %c0_i32_0, %c0_i32_1 : i32, i32, i32
  }
  func.func @transform_3(%arg0: i32) -> (i32, i32, i32) {
    %c0_i32 = arith.constant 0 : i32
    %c0_i32_0 = arith.constant 0 : i32
    %c0_i32_1 = arith.constant 0 : i32
    %c0_i32_2 = arith.constant 0 : i32
    return %c0_i32, %c0_i32_0, %c0_i32_1 : i32, i32, i32
  }
  func.func @transform_4(%arg0: i32) -> (i32, i32, i32) {
    %c0_i32 = arith.constant 0 : i32
    %c0_i32_0 = arith.constant 0 : i32
    %c0_i32_1 = arith.constant 0 : i32
    return %arg0, %c0_i32, %c0_i32_0 : i32, i32, i32
  }
}

</mosaic_0001>

<llo_original>
// kernel: model_forward.1
$region0: #{model_forward.1}
  #allocation0 [shape = 'u32[]', space=smem, size = 0x4, offset = 0x4, fixed_abs, tag = 'smem constant byte address 0x4 - core index']
  #allocation1 [shape = 'u32[144,128]{1,0:T(1,128)}', space=vmem, size = 0x12000, scoped, tag = 'internal scratch']
  %s0 = inlined_call_operand.vmem [shape: bf16[3,384,208], index: 0, kind: input, shape index: {}]
  %s1 = inlined_call_operand.vmem [shape: bf16[3,384,208], index: 1, kind: input, shape index: {}]
  %s2 = inlined_call_operand.vmem [shape: bf16[6,32,384], index: 2, kind: input, shape index: {}]
  %s3 = inlined_call_operand.vmem [shape: bf16[6,32,384], index: 3, kind: input, shape index: {}]
  %s4 = inlined_call_operand.vmem [shape: f32[3,32,128], index: 4, kind: output, shape index: {}]
  %s5 = sld [smem:[#allocation0]]
  $region49: #{model_forward.1} parent=0
    _
  %s7 = ssub.s32 1, %s5
  %s8 = scalar_select 0, %s7, %s5
  loop: start=0, step=1, limit=5
  $region2: #{model_forward.1} parent=0 // loop_pre_header
    _
  $region3: #{model_forward.1} parent=0 // loop_header
    %s10 = sphi 0, %s14
    %p11 = scmp.ge.s32.totalorder %s10, 5
    %s20 = sphi 0, %s22
    %s23 = sphi 0, %s20
    %s24 = sphi 0, %s23
    %s40 = sphi 0, %s24
    %s46 = sphi 0, %s48
    %s49 = sphi 0, %s46
    %s50 = sphi 0, %s49
    %s66 = sphi 0, %s50
    %s70 = sphi 0, %s70
    %s72 = sphi 0, %s70
    %s73 = sphi 0, %s72
    %s87 = sphi 0, %s73
    %s91 = sphi 0, %s91
    %s93 = sphi 0, %s91
    %s94 = sphi 0, %s93
    %s108 = sphi 0, %s94
    %s114 = sphi 0, %s116
    %s117 = sphi 0, %s114
    %s118 = sphi 0, %s117
    %s134 = sphi 0, %s118
  $region4: #{model_forward.1} parent=0 // loop_header_branch
    %13 = sbr.rel (%p11) target = $region8
  $region5: #{model_forward.1} parent=0 // loop_body
    %s15 = ssub.s32 %s10, 1
    %s16 = ssub.s32 %s10, 2
    %s17 = sadd.s32 %s10, 1
    %s18 = ssub.s32 %s10, %s17
    %p19 = scmp.eq.s32.totalorder %s18, 0
    %s21 = sadd.s32 %s20, 1
    %s22 = scalar_select %p19, %s20, %s21
    %p25 = pneg %p19
    %p26 = scmp.eq.s32.totalorder %s10, 2
    %p27 = por %p25, %p26
    %p28 = scmp.ne.s32.totalorder %s20, %s23
    %p29 = scmp.eq.s32.totalorder %s10, 0
    %p30 = por %p28, %p29
    %p31 = scmp.ne.s32.totalorder %s20, %s23
    %p32 = scmp.eq.s32.totalorder %s15, 2
    %p33 = por %p31, %p32
    %p34 = scmp.ne.s32.totalorder %s23, %s24
    %p35 = scmp.eq.s32.totalorder %s15, 0
    %p36 = por %p34, %p35
    %p37 = scmp.ne.s32.totalorder %s23, %s24
    %p38 = scmp.eq.s32.totalorder %s16, 2
    %p39 = por %p37, %p38
    %p41 = scmp.ne.s32.totalorder %s24, %s40
    %p42 = scmp.eq.s32.totalorder %s16, 0
    %p43 = por %p41, %p42
    %s44 = ssub.s32 %s10, %s17
    %p45 = scmp.eq.s32.totalorder %s44, 0
    %s47 = sadd.s32 %s46, 1
    %s48 = scalar_select %p45, %s46, %s47
    %p51 = pneg %p45
    %p52 = scmp.eq.s32.totalorder %s10, 2
    %p53 = por %p51, %p52
    %p54 = scmp.ne.s32.totalorder %s46, %s49
    %p55 = scmp.eq.s32.totalorder %s10, 0
    %p56 = por %p54, %p55
    %p57 = scmp.ne.s32.totalorder %s46, %s49
    %p58 = scmp.eq.s32.totalorder %s15, 2
    %p59 = por %p57, %p58
    %p60 = scmp.ne.s32.totalorder %s49, %s50
    %p61 = scmp.eq.s32.totalorder %s15, 0
    %p62 = por %p60, %p61
    %p63 = scmp.ne.s32.totalorder %s49, %s50
    %p64 = scmp.eq.s32.totalorder %s16, 2
    %p65 = por %p63, %p64
    %p67 = scmp.ne.s32.totalorder %s50, %s66
    %p68 = scmp.eq.s32.totalorder %s16, 0
    %p69 = por %p67, %p68
    %s71 = sadd.s32 %s70, 1
    %p74 = scmp.eq.s32.totalorder %s10, 2
    %p75 = scmp.ne.s32.totalorder %s70, %s72
    %p76 = scmp.eq.s32.totalorder %s10, 0
    %p77 = por %p75, %p76
    %p78 = scmp.ne.s32.totalorder %s70, %s72
    %p79 = scmp.eq.s32.totalorder %s15, 2
    %p80 = por %p78, %p79
    %p81 = scmp.ne.s32.totalorder %s72, %s73
    %p82 = scmp.eq.s32.totalorder %s15, 0
    %p83 = por %p81, %p82
    %p84 = scmp.ne.s32.totalorder %s72, %s73
    %p85 = scmp.eq.s32.totalorder %s16, 2
    %p86 = por %p84, %p85
    %p88 = scmp.ne.s32.totalorder %s73, %s87
    %p89 = scmp.eq.s32.totalorder %s16, 0
    %p90 = por %p88, %p89
    %s92 = sadd.s32 %s91, 1
    %p95 = scmp.eq.s32.totalorder %s10, 2
    %p96 = scmp.ne.s32.totalorder %s91, %s93
    %p97 = scmp.eq.s32.totalorder %s10, 0
    %p98 = por %p96, %p97
    %p99 = scmp.ne.s32.totalorder %s91, %s93
    %p100 = scmp.eq.s32.totalorder %s15, 2
    %p101 = por %p99, %p100
    %p102 = scmp.ne.s32.totalorder %s93, %s94
    %p103 = scmp.eq.s32.totalorder %s15, 0
    %p104 = por %p102, %p103
    %p105 = scmp.ne.s32.totalorder %s93, %s94
    %p106 = scmp.eq.s32.totalorder %s16, 2
    %p107 = por %p105, %p106
    %p109 = scmp.ne.s32.totalorder %s94, %s108
    %p110 = scmp.eq.s32.totalorder %s16, 0
    %p111 = por %p109, %p110
    %s112 = ssub.s32 %s10, %s17
    %p113 = scmp.eq.s32.totalorder %s112, 0
    %s115 = sadd.s32 %s114, 1
    %s116 = scalar_select %p113, %s114, %s115
    %p119 = pneg %p113
    %p120 = scmp.eq.s32.totalorder %s10, 2
    %p121 = por %p119, %p120
    %p122 = scmp.ne.s32.totalorder %s114, %s117
    %p123 = scmp.eq.s32.totalorder %s10, 0
    %p124 = por %p122, %p123
    %p125 = scmp.ne.s32.totalorder %s114, %s117
    %p126 = scmp.eq.s32.totalorder %s15, 2
    %p127 = por %p125, %p126
    %p128 = scmp.ne.s32.totalorder %s117, %s118
    %p129 = scmp.eq.s32.totalorder %s15, 0
    %p130 = por %p128, %p129
    %p131 = scmp.ne.s32.totalorder %s117, %s118
    %p132 = scmp.eq.s32.totalorder %s16, 2
    %p133 = por %p131, %p132
    %p135 = scmp.ne.s32.totalorder %s118, %s134
    %p136 = scmp.eq.s32.totalorder %s16, 0
    %p137 = por %p135, %p136
    %p138 = scmp.le.s32.totalorder 1, %s10
    %p139 = scmp.lt.s32.totalorder %s10, 4
    %p140 = pnand %p138, %p139
    %p141 = pneg %p140
    // Predicated region
    $region9: #{model_forward.1} parent=5 // pred_check
      _
    $region10: #{model_forward.1} parent=5 // pred_check_branch
      %143 = sbr.rel (%p140) target = $region12
    $region11: #{model_forward.1} parent=5 // pred_region
      %s144 = ssub.s32 %s10, 1
      // Predicated region
      $region13: #{model_forward.1} parent=11 // pred_check
        %p145 = pneg %p83
      $region14: #{model_forward.1} parent=11 // pred_check_branch
        %147 = sbr.rel (%p145) target = $region16
      $region15: #{model_forward.1} parent=11 // pred_region
        _
      $region16: #{model_forward.1} parent=11 // pred_fallthru
        _
      // Predicated region
      $region17: #{model_forward.1} parent=11 // pred_check
        %p148 = pneg %p104
      $region18: #{model_forward.1} parent=11 // pred_check_branch
        %150 = sbr.rel (%p148) target = $region20
      $region19: #{model_forward.1} parent=11 // pred_region
        _
      $region20: #{model_forward.1} parent=11 // pred_fallthru
        _
    $region12: #{model_forward.1} parent=5 // pred_fallthru
      _
    %p151 = scmp.lt.s32.totalorder %s10, 3
    // Predicated region
    $region21: #{model_forward.1} parent=5 // pred_check
      %p152 = pneg %p151
    $region22: #{model_forward.1} parent=5 // pred_check_branch
      %154 = sbr.rel (%p152) target = $region24
    $region23: #{model_forward.1} parent=5 // pred_region
      // Predicated region
      $region25: #{model_forward.1} parent=23 // pred_check
        %p155 = pneg %p30
      $region26: #{model_forward.1} parent=23 // pred_check_branch
        %157 = sbr.rel (%p155) target = $region28
      $region27: #{model_forward.1} parent=23 // pred_region
        %p158 = scmp.lt.s32.totalorder %s10, 2
        %s159 = scalar_select %p158, %s10, 2
        %s160 = smul.addr %s159, 96
        %s161 = smul.addr %s160, 4
        %s162 = scalar_lea.vmem %s0, %s161
      $region28: #{model_forward.1} parent=23 // pred_fallthru
        _
      // Predicated region
      $region29: #{model_forward.1} parent=23 // pred_check
        %p163 = pneg %p56
      $region30: #{model_forward.1} parent=23 // pred_check_branch
        %165 = sbr.rel (%p163) target = $region32
      $region31: #{model_forward.1} parent=23 // pred_region
        %p166 = scmp.lt.s32.totalorder %s10, 2
        %s167 = scalar_select %p166, %s10, 2
        %s168 = smul.addr %s167, 96
        %s169 = smul.addr %s168, 4
        %s170 = scalar_lea.vmem %s1, %s169
      $region32: #{model_forward.1} parent=23 // pred_fallthru
        _
    $region24: #{model_forward.1} parent=5 // pred_fallthru
      _
    %p171 = scmp.le.s32.totalorder 1, %s10
    %p172 = scmp.lt.s32.totalorder %s10, 4
    %p173 = pnand %p171, %p172
    %p174 = pneg %p173
    // Predicated region
    $region33: #{model_forward.1} parent=5 // pred_check
      _
    $region34: #{model_forward.1} parent=5 // pred_check_branch
      %176 = sbr.rel (%p173) target = $region36
    $region35: #{model_forward.1} parent=5 // pred_region
      %s177 = ssub.s32 %s10, 1
      %p178 = scmp.lt.s32.totalorder %s15, 2
      %s179 = scalar_select %p178, %s15, 2
      %s180 = smul.addr %s179, 96
      %s181 = smul.addr %s180, 4
      %s182 = scalar_lea.vmem %s0, %s181
      %p183 = pneg %p36
      %p184 = pneg %p33
      %p185 = scmp.lt.s32.totalorder %s15, 2
      %s186 = scalar_select %p185, %s15, 2
      %s187 = smul.addr %s186, 96
      %s188 = smul.addr %s187, 4
      %s189 = scalar_lea.vmem %s1, %s188
      %p190 = pneg %p62
      %p191 = pneg %p59
      %p192 = pneg %p83
      %p193 = pneg %p80
      %p194 = pneg %p104
      %p195 = pneg %p101
      %p196 = pneg %p130
      %p197 = pneg %p127
      %p198 = scmp.lt.s32.totalorder %s15, 2
      %s199 = scalar_select %p198, %s15, 2
      %s200 = smul.addr %s199, 4
      %s201 = smul.addr %s200, 8
      %s202 = scalar_lea.vmem %s4, %s201
      %p203 = scmp.lt.s32.totalorder %s15, 2
      %s204 = scalar_select %p203, %s15, 2
      %s205 = smul.addr %s204, 96
      %s206 = smul.addr %s205, 4
      %s207 = scalar_lea.vmem %s0, %s206
      %p208 = scmp.lt.s32.totalorder %s15, 2
      %s209 = scalar_select %p208, %s15, 2
      %s210 = smul.addr %s209, 96
      %s211 = smul.addr %s210, 4
      %s212 = scalar_lea.vmem %s1, %s211
      %p213 = scmp.lt.s32.totalorder %s15, 2
      %s214 = scalar_select %p213, %s15, 2
      %s215 = smul.addr %s214, 4
      %s216 = smul.addr %s215, 8
      %s217 = scalar_lea.vmem %s4, %s216
      %v219 = vld [vmem:[%s207] sm:$0xf]
      %v220 = vld [vmem:[%s207 + $0x8] sm:$0xf]
      %v221 = vld [vmem:[%s207 + $0x10] sm:$0xf]
      %v222 = vld [vmem:[%s207 + $0x18] sm:$0xf]
      %v223 = vld [vmem:[%s207 + $0x20] sm:$0xf]
      %v224 = vld [vmem:[%s207 + $0x28] sm:$0xf]
      %v225 = vld [vmem:[%s207 + $0x30] sm:$0xf]
      %v226 = vld [vmem:[%s207 + $0x38] sm:$0xf]
      %v227 = vld [vmem:[%s207 + $0x40] sm:$0xf]
      %v228 = vld [vmem:[%s207 + $0x48] sm:$0xf]
      %v229 = vld [vmem:[%s207 + $0x50] sm:$0xf]
      %v230 = vld [vmem:[%s207 + $0x58] sm:$0xf]
      %v231 = vld [vmem:[%s207 + $0x60] sm:$0xf]
      %v232 = vld [vmem:[%s207 + $0x68] sm:$0xf]
      %v233 = vld [vmem:[%s207 + $0x70] sm:$0xf]
      %v234 = vld [vmem:[%s207 + $0x78] sm:$0xf]
      %v235 = vld [vmem:[%s207 + $0x80] sm:$0xf]
      %v236 = vld [vmem:[%s207 + $0x88] sm:$0xf]
      %v237 = vld [vmem:[%s207 + $0x90] sm:$0xf]
      %v238 = vld [vmem:[%s207 + $0x98] sm:$0xf]
      %v239 = vld [vmem:[%s207 + $0xa0] sm:$0xf]
      %v240 = vld [vmem:[%s207 + $0xa8] sm:$0xf]
      %v241 = vld [vmem:[%s207 + $0xb0] sm:$0xf]
      %v242 = vld [vmem:[%s207 + $0xb8] sm:$0xf]
      %v243 = vld [vmem:[%s207 + $0xc0] sm:$0xf]
      %v244 = vld [vmem:[%s207 + $0xc8] sm:$0xf]
      %v245 = vld [vmem:[%s207 + $0xd0] sm:$0xf]
      %v246 = vld [vmem:[%s207 + $0xd8] sm:$0xf]
      %v247 = vld [vmem:[%s207 + $0xe0] sm:$0xf]
      %v248 = vld [vmem:[%s207 + $0xe8] sm:$0xf]
      %v249 = vld [vmem:[%s207 + $0xf0] sm:$0xf]
      %v250 = vld [vmem:[%s207 + $0xf8] sm:$0xf]
      %v251 = vld [vmem:[%s207 + $0x100] sm:$0xf]
      %v252 = vld [vmem:[%s207 + $0x108] sm:$0xf]
      %v253 = vld [vmem:[%s207 + $0x110] sm:$0xf]
      %v254 = vld [vmem:[%s207 + $0x118] sm:$0xf]
      %v255 = vld [vmem:[%s207 + $0x120] sm:$0xf]
      %v256 = vld [vmem:[%s207 + $0x128] sm:$0xf]
      %v257 = vld [vmem:[%s207 + $0x130] sm:$0xf]
      %v258 = vld [vmem:[%s207 + $0x138] sm:$0xf]
      %v259 = vld [vmem:[%s207 + $0x140] sm:$0xf]
      %v260 = vld [vmem:[%s207 + $0x148] sm:$0xf]
      %v261 = vld [vmem:[%s207 + $0x150] sm:$0xf]
      %v262 = vld [vmem:[%s207 + $0x158] sm:$0xf]
      %v263 = vld [vmem:[%s207 + $0x160] sm:$0xf]
      %v264 = vld [vmem:[%s207 + $0x168] sm:$0xf]
      %v265 = vld [vmem:[%s207 + $0x170] sm:$0xf]
      %v266 = vld [vmem:[%s207 + $0x178] sm:$0xf]
      %v267 = vld [vmem:[%s212] sm:$0xf]
      %v268 = vld [vmem:[%s212 + $0x8] sm:$0xf]
      %v269 = vld [vmem:[%s212 + $0x10] sm:$0xf]
      %v270 = vld [vmem:[%s212 + $0x18] sm:$0xf]
      %v271 = vld [vmem:[%s212 + $0x20] sm:$0xf]
      %v272 = vld [vmem:[%s212 + $0x28] sm:$0xf]
      %v273 = vld [vmem:[%s212 + $0x30] sm:$0xf]
      %v274 = vld [vmem:[%s212 + $0x38] sm:$0xf]
      %v275 = vld [vmem:[%s212 + $0x40] sm:$0xf]
      %v276 = vld [vmem:[%s212 + $0x48] sm:$0xf]
      %v277 = vld [vmem:[%s212 + $0x50] sm:$0xf]
      %v278 = vld [vmem:[%s212 + $0x58] sm:$0xf]
      %v279 = vld [vmem:[%s212 + $0x60] sm:$0xf]
      %v280 = vld [vmem:[%s212 + $0x68] sm:$0xf]
      %v281 = vld [vmem:[%s212 + $0x70] sm:$0xf]
      %v282 = vld [vmem:[%s212 + $0x78] sm:$0xf]
      %v283 = vld [vmem:[%s212 + $0x80] sm:$0xf]
      %v284 = vld [vmem:[%s212 + $0x88] sm:$0xf]
      %v285 = vld [vmem:[%s212 + $0x90] sm:$0xf]
      %v286 = vld [vmem:[%s212 + $0x98] sm:$0xf]
      %v287 = vld [vmem:[%s212 + $0xa0] sm:$0xf]
      %v288 = vld [vmem:[%s212 + $0xa8] sm:$0xf]
      %v289 = vld [vmem:[%s212 + $0xb0] sm:$0xf]
      %v290 = vld [vmem:[%s212 + $0xb8] sm:$0xf]
      %v291 = vld [vmem:[%s212 + $0xc0] sm:$0xf]
      %v292 = vld [vmem:[%s212 + $0xc8] sm:$0xf]
      %v293 = vld [vmem:[%s212 + $0xd0] sm:$0xf]
      %v294 = vld [vmem:[%s212 + $0xd8] sm:$0xf]
      %v295 = vld [vmem:[%s212 + $0xe0] sm:$0xf]
      %v296 = vld [vmem:[%s212 + $0xe8] sm:$0xf]
      %v297 = vld [vmem:[%s212 + $0xf0] sm:$0xf]
      %v298 = vld [vmem:[%s212 + $0xf8] sm:$0xf]
      %v299 = vld [vmem:[%s212 + $0x100] sm:$0xf]
      %v300 = vld [vmem:[%s212 + $0x108] sm:$0xf]
      %v301 = vld [vmem:[%s212 + $0x110] sm:$0xf]
      %v302 = vld [vmem:[%s212 + $0x118] sm:$0xf]
      %v303 = vld [vmem:[%s212 + $0x120] sm:$0xf]
      %v304 = vld [vmem:[%s212 + $0x128] sm:$0xf]
      %v305 = vld [vmem:[%s212 + $0x130] sm:$0xf]
      %v306 = vld [vmem:[%s212 + $0x138] sm:$0xf]
      %v307 = vld [vmem:[%s212 + $0x140] sm:$0xf]
      %v308 = vld [vmem:[%s212 + $0x148] sm:$0xf]
      %v309 = vld [vmem:[%s212 + $0x150] sm:$0xf]
      %v310 = vld [vmem:[%s212 + $0x158] sm:$0xf]
      %v311 = vld [vmem:[%s212 + $0x160] sm:$0xf]
      %v312 = vld [vmem:[%s212 + $0x168] sm:$0xf]
      %v313 = vld [vmem:[%s212 + $0x170] sm:$0xf]
      %v314 = vld [vmem:[%s212 + $0x178] sm:$0xf]
      %v315 = vld [vmem:[%s2] sm:$0xff]
      %v316 = vld [vmem:[%s2 + $0x8] sm:$0xf]
      %v317 = vld [vmem:[%s2 + $0xc] sm:$0xff]
      %v318 = vld [vmem:[%s2 + $0x14] sm:$0xf]
      %v319 = vld [vmem:[%s2 + $0x18] sm:$0xff]
      %v320 = vld [vmem:[%s2 + $0x20] sm:$0xf]
      %v321 = vld [vmem:[%s2 + $0x24] sm:$0xff]
      %v322 = vld [vmem:[%s2 + $0x2c] sm:$0xf]
      %v323 = vld [vmem:[%s3] sm:$0xff]
      %v324 = vld [vmem:[%s3 + $0x8] sm:$0xf]
      %v325 = vld [vmem:[%s3 + $0xc] sm:$0xff]
      %v326 = vld [vmem:[%s3 + $0x14] sm:$0xf]
      %v327 = vld [vmem:[%s3 + $0x18] sm:$0xff]
      %v328 = vld [vmem:[%s3 + $0x20] sm:$0xf]
      %v329 = vld [vmem:[%s3 + $0x24] sm:$0xff]
      %v330 = vld [vmem:[%s3 + $0x2c] sm:$0xf]
      %v339 = vunpack.c.l.b16 %v315
      %v340 = vunpack.c.h.b16 %v315
      %v341 = vunpack.c.l.b16 %v316
      %v342 = vunpack.c.l.b16 %v317
      %v343 = vunpack.c.h.b16 %v317
      %v344 = vunpack.c.l.b16 %v318
      %v345 = vunpack.c.l.b16 %v319
      %v346 = vunpack.c.h.b16 %v319
      %v347 = vunpack.c.l.b16 %v320
      %v348 = vunpack.c.l.b16 %v321
      %v349 = vunpack.c.h.b16 %v321
      %v350 = vunpack.c.l.b16 %v322
      %v351 = vpack.c.b16 %v342, %v339
      %v352 = vpack.c.b16 %v343, %v340
      %v353 = vpack.c.b16 %v344, %v341
      %v354 = vpack.c.b16 %v348, %v345
      %v355 = vpack.c.b16 %v349, %v346
      %v356 = vpack.c.b16 %v350, %v347
      %v411 = vunpack.c.l.b16 %v267
      %v412 = vunpack.c.l.b16 %v268
      %v413 = vunpack.c.l.b16 %v269
      %v414 = vunpack.c.l.b16 %v270
      %v415 = vunpack.c.l.b16 %v271
      %v416 = vunpack.c.l.b16 %v272
      %v417 = vunpack.c.l.b16 %v273
      %v418 = vunpack.c.l.b16 %v274
      %v419 = vunpack.c.l.b16 %v275
      %v420 = vunpack.c.l.b16 %v276
      %v421 = vunpack.c.l.b16 %v277
      %v422 = vunpack.c.l.b16 %v278
      %v423 = vunpack.c.l.b16 %v279
      %v424 = vunpack.c.l.b16 %v280
      %v425 = vunpack.c.l.b16 %v281
      %v426 = vunpack.c.l.b16 %v282
      %v427 = vunpack.c.l.b16 %v283
      %v428 = vunpack.c.l.b16 %v284
      %v429 = vunpack.c.l.b16 %v285
      %v430 = vunpack.c.l.b16 %v286
      %v431 = vunpack.c.l.b16 %v287
      %v432 = vunpack.c.l.b16 %v288
      %v433 = vunpack.c.l.b16 %v289
      %v434 = vunpack.c.l.b16 %v290
      %v435 = vunpack.c.l.b16 %v291
      %v436 = vunpack.c.l.b16 %v292
      %v437 = vunpack.c.l.b16 %v293
      %v438 = vunpack.c.l.b16 %v294
      %v439 = vunpack.c.l.b16 %v295
      %v440 = vunpack.c.l.b16 %v296
      %v441 = vunpack.c.l.b16 %v297
      %v442 = vunpack.c.l.b16 %v298
      %v443 = vunpack.c.l.b16 %v299
      %v444 = vunpack.c.l.b16 %v300
      %v445 = vunpack.c.l.b16 %v301
      %v446 = vunpack.c.l.b16 %v302
      %v447 = vunpack.c.l.b16 %v303
      %v448 = vunpack.c.l.b16 %v304
      %v449 = vunpack.c.l.b16 %v305
      %v450 = vunpack.c.l.b16 %v306
      %v451 = vunpack.c.l.b16 %v307
      %v452 = vunpack.c.l.b16 %v308
      %v453 = vunpack.c.l.b16 %v309
      %v454 = vunpack.c.l.b16 %v310
      %v455 = vunpack.c.l.b16 %v311
      %v456 = vunpack.c.l.b16 %v312
      %v457 = vunpack.c.l.b16 %v313
      %v458 = vunpack.c.l.b16 %v314
      %v459 = vpack.c.b16 %v412, %v411
      %v460 = vpack.c.b16 %v414, %v413
      %v461 = vpack.c.b16 %v416, %v415
      %v462 = vpack.c.b16 %v418, %v417
      %v463 = vpack.c.b16 %v420, %v419
      %v464 = vpack.c.b16 %v422, %v421
      %v465 = vpack.c.b16 %v424, %v423
      %v466 = vpack.c.b16 %v426, %v425
      %v467 = vpack.c.b16 %v428, %v427
      %v468 = vpack.c.b16 %v430, %v429
      %v469 = vpack.c.b16 %v432, %v431
      %v470 = vpack.c.b16 %v434, %v433
      %v471 = vpack.c.b16 %v436, %v435
      %v472 = vpack.c.b16 %v438, %v437
      %v473 = vpack.c.b16 %v440, %v439
      %v474 = vpack.c.b16 %v442, %v441
      %v475 = vpack.c.b16 %v444, %v443
      %v476 = vpack.c.b16 %v446, %v445
      %v477 = vpack.c.b16 %v448, %v447
      %v478 = vpack.c.b16 %v450, %v449
      %v479 = vpack.c.b16 %v452, %v451
      %v480 = vpack.c.b16 %v454, %v453
      %v481 = vpack.c.b16 %v456, %v455
      %v482 = vpack.c.b16 %v458, %v457
      %507 = vmatprep.subr.bf16.mxu0 0
      %508 = vmatpush1.bf16.msra.mxu0 %v459
      %509 = vmatprep.subr.bf16.mxu0 0
      %510 = vmatpush1.bf16.msra.mxu0 %v460
      %511 = vmatprep.subr.bf16.mxu0 0
      %512 = vmatpush1.bf16.msra.mxu0 %v461
      %513 = vmatprep.subr.bf16.mxu0 0
      %514 = vmatpush1.bf16.msra.mxu0 %v462
      %515 = vmatprep.subr.bf16.mxu0 0
      %516 = vmatpush1.bf16.msra.mxu0 %v463
      %517 = vmatprep.subr.bf16.mxu0 0
      %518 = vmatpush1.bf16.msra.mxu0 %v464
      %519 = vmatprep.subr.bf16.mxu0 0
      %520 = vmatpush1.bf16.msra.mxu0 %v465
      %521 = vmatprep.subr.bf16.mxu0 0
      %522 = vmatpush1.bf16.msra.mxu0 %v466
      %523 = vmatprep.subr.bf16.mxu0 0
      %524 = vmatpush1.bf16.msra.mxu0 %v467
      %525 = vmatprep.subr.bf16.mxu0 0
      %526 = vmatpush1.bf16.msra.mxu0 %v468
      %527 = vmatprep.subr.bf16.mxu0 0
      %528 = vmatpush1.bf16.msra.mxu0 %v469
      %529 = vmatprep.subr.bf16.mxu0 0
      %530 = vmatpush1.bf16.msra.mxu0 %v470
      %531 = vmatprep.subr.bf16.mxu0 0
      %532 = vmatpush1.bf16.msra.mxu0 %v471
      %533 = vmatprep.subr.bf16.mxu0 0
      %534 = vmatpush1.bf16.msra.mxu0 %v472
      %535 = vmatprep.subr.bf16.mxu0 0
      %536 = vmatpush1.bf16.msra.mxu0 %v473
      %537 = vmatprep.subr.bf16.mxu0 0
      %538 = vmatpush1.bf16.msra.mxu0 %v474
      %539 = vmatprep.mubr.bf16.mxu0 %v352
      %540 = vmatmul.mubr.bf16.gmra.mrb[0].mxu0 %v351
      %v541 = vpop.f32.mrb[0].mxu0
      %v542 = vadd.f32 0.0, %v541
      %v543 = vpop.f32.mrb[0].mxu0
      %v544 = vpop.f32.mrb[0].mxu0
      %v545 = vadd.f32 0.0, %v544
      %v546 = vpop.f32.mrb[0].mxu0
      %547 = vmatprep.mubr.bf16.mxu0 %v355
      %548 = vmatmul.mubr.bf16.gmra.mrb[0].mxu0 %v354
      %v549 = vpop.f32.mrb[0].mxu0
      %v550 = vadd.f32 0.0, %v549
      %v551 = vpop.f32.mrb[0].mxu0
      %v552 = vpop.f32.mrb[0].mxu0
      %v553 = vadd.f32 0.0, %v552
      %v554 = vpop.f32.mrb[0].mxu0
      %555 = vdwg.mxu0
      %556 = vmatprep.subr.bf16.mxu0 0
      %557 = vmatpush1.bf16.msra.mxu0 %v475
      %558 = vmatprep.subr.bf16.mxu0 0
      %559 = vmatpush1.bf16.msra.mxu0 %v476
      %560 = vmatprep.subr.bf16.mxu0 0
      %561 = vmatpush1.bf16.msra.mxu0 %v477
      %562 = vmatprep.subr.bf16.mxu0 0
      %563 = vmatpush1.bf16.msra.mxu0 %v478
      %564 = vmatprep.subr.bf16.mxu0 0
      %565 = vmatpush1.bf16.msra.mxu0 %v479
      %566 = vmatprep.subr.bf16.mxu0 0
      %567 = vmatpush1.bf16.msra.mxu0 %v480
      %568 = vmatprep.subr.bf16.mxu0 0
      %569 = vmatpush1.bf16.msra.mxu0 %v481
      %570 = vmatprep.subr.bf16.mxu0 0
      %571 = vmatpush1.bf16.msra.mxu0 %v482
      %572 = vmatprep.subr.bf16.mxu0 0
      %573 = vmatpush1.bf16.msra.mxu0 0
      %574 = vmatprep.subr.bf16.mxu0 0
      %575 = vmatpush1.bf16.msra.mxu0 0
      %576 = vmatprep.subr.bf16.mxu0 0
      %577 = vmatpush1.bf16.msra.mxu0 0
      %578 = vmatprep.subr.bf16.mxu0 0
      %579 = vmatpush1.bf16.msra.mxu0 0
      %580 = vmatprep.subr.bf16.mxu0 0
      %581 = vmatpush1.bf16.msra.mxu0 0
      %582 = vmatprep.subr.bf16.mxu0 0
      %583 = vmatpush1.bf16.msra.mxu0 0
      %584 = vmatprep.subr.bf16.mxu0 0
      %585 = vmatpush1.bf16.msra.mxu0 0
      %586 = vmatprep.subr.bf16.mxu0 0
      %587 = vmatpush1.bf16.msra.mxu0 0
      %588 = vmatprep.mubr.bf16.mxu0 0
      %589 = vmatmul.mubr.bf16.gmra.mrb[0].mxu0 %v353
      %v590 = vpop.f32.mrb[0].mxu0
      %v591 = vadd.f32 %v542, %v590
      %v592 = vpop.f32.mrb[0].mxu0
      %v593 = vpop.f32.mrb[0].mxu0
      %v594 = vadd.f32 %v545, %v593
      %v595 = vpop.f32.mrb[0].mxu0
      %596 = vmatprep.mubr.bf16.mxu0 0
      %597 = vmatmul.mubr.bf16.gmra.mrb[0].mxu0 %v356
      %v598 = vpop.f32.mrb[0].mxu0
      %v599 = vadd.f32 %v550, %v598
      %v600 = vpop.f32.mrb[0].mxu0
      %v601 = vpop.f32.mrb[0].mxu0
      %v602 = vadd.f32 %v553, %v601
      %v603 = vpop.f32.mrb[0].mxu0
      %604 = vdwg.mxu0
      %v653 = vunpack.c.l.b16 %v219
      %v654 = vunpack.c.l.b16 %v220
      %v655 = vunpack.c.l.b16 %v221
      %v656 = vunpack.c.l.b16 %v222
      %v657 = vunpack.c.l.b16 %v223
      %v658 = vunpack.c.l.b16 %v224
      %v659 = vunpack.c.l.b16 %v225
      %v660 = vunpack.c.l.b16 %v226
      %v661 = vunpack.c.l.b16 %v227
      %v662 = vunpack.c.l.b16 %v228
      %v663 = vunpack.c.l.b16 %v229
      %v664 = vunpack.c.l.b16 %v230
      %v665 = vunpack.c.l.b16 %v231
      %v666 = vunpack.c.l.b16 %v232
      %v667 = vunpack.c.l.b16 %v233
      %v668 = vunpack.c.l.b16 %v234
      %v669 = vunpack.c.l.b16 %v235
      %v670 = vunpack.c.l.b16 %v236
      %v671 = vunpack.c.l.b16 %v237
      %v672 = vunpack.c.l.b16 %v238
      %v673 = vunpack.c.l.b16 %v239
      %v674 = vunpack.c.l.b16 %v240
      %v675 = vunpack.c.l.b16 %v241
      %v676 = vunpack.c.l.b16 %v242
      %v677 = vunpack.c.l.b16 %v243
      %v678 = vunpack.c.l.b16 %v244
      %v679 = vunpack.c.l.b16 %v245
      %v680 = vunpack.c.l.b16 %v246
      %v681 = vunpack.c.l.b16 %v247
      %v682 = vunpack.c.l.b16 %v248
      %v683 = vunpack.c.l.b16 %v249
      %v684 = vunpack.c.l.b16 %v250
      %v685 = vunpack.c.l.b16 %v251
      %v686 = vunpack.c.l.b16 %v252
      %v687 = vunpack.c.l.b16 %v253
      %v688 = vunpack.c.l.b16 %v254
      %v689 = vunpack.c.l.b16 %v255
      %v690 = vunpack.c.l.b16 %v256
      %v691 = vunpack.c.l.b16 %v257
      %v692 = vunpack.c.l.b16 %v258
      %v693 = vunpack.c.l.b16 %v259
      %v694 = vunpack.c.l.b16 %v260
      %v695 = vunpack.c.l.b16 %v261
      %v696 = vunpack.c.l.b16 %v262
      %v697 = vunpack.c.l.b16 %v263
      %v698 = vunpack.c.l.b16 %v264
      %v699 = vunpack.c.l.b16 %v265
      %v700 = vunpack.c.l.b16 %v266
      %v701 = vpack.c.b16 %v654, %v653
      %v702 = vpack.c.b16 %v656, %v655
      %v703 = vpack.c.b16 %v658, %v657
      %v704 = vpack.c.b16 %v660, %v659
      %v705 = vpack.c.b16 %v662, %v661
      %v706 = vpack.c.b16 %v664, %v663
      %v707 = vpack.c.b16 %v666, %v665
      %v708 = vpack.c.b16 %v668, %v667
      %v709 = vpack.c.b16 %v670, %v669
      %v710 = vpack.c.b16 %v672, %v671
      %v711 = vpack.c.b16 %v674, %v673
      %v712 = vpack.c.b16 %v676, %v675
      %v713 = vpack.c.b16 %v678, %v677
      %v714 = vpack.c.b16 %v680, %v679
      %v715 = vpack.c.b16 %v682, %v681
      %v716 = vpack.c.b16 %v684, %v683
      %v717 = vpack.c.b16 %v686, %v685
      %v718 = vpack.c.b16 %v688, %v687
      %v719 = vpack.c.b16 %v690, %v689
      %v720 = vpack.c.b16 %v692, %v691
      %v721 = vpack.c.b16 %v694, %v693
      %v722 = vpack.c.b16 %v696, %v695
      %v723 = vpack.c.b16 %v698, %v697
      %v724 = vpack.c.b16 %v700, %v699
      %749 = vmatprep.subr.bf16.mxu0 0
      %750 = vmatpush1.bf16.msra.mxu0 %v701
      %751 = vmatprep.subr.bf16.mxu0 0
      %752 = vmatpush1.bf16.msra.mxu0 %v702
      %753 = vmatprep.subr.bf16.mxu0 0
      %754 = vmatpush1.bf16.msra.mxu0 %v703
      %755 = vmatprep.subr.bf16.mxu0 0
      %756 = vmatpush1.bf16.msra.mxu0 %v704
      %757 = vmatprep.subr.bf16.mxu0 0
      %758 = vmatpush1.bf16.msra.mxu0 %v705
      %759 = vmatprep.subr.bf16.mxu0 0
      %760 = vmatpush1.bf16.msra.mxu0 %v706
      %761 = vmatprep.subr.bf16.mxu0 0
      %762 = vmatpush1.bf16.msra.mxu0 %v707
      %763 = vmatprep.subr.bf16.mxu0 0
      %764 = vmatpush1.bf16.msra.mxu0 %v708
      %765 = vmatprep.subr.bf16.mxu0 0
      %766 = vmatpush1.bf16.msra.mxu0 %v709
      %767 = vmatprep.subr.bf16.mxu0 0
      %768 = vmatpush1.bf16.msra.mxu0 %v710
      %769 = vmatprep.subr.bf16.mxu0 0
      %770 = vmatpush1.bf16.msra.mxu0 %v711
      %771 = vmatprep.subr.bf16.mxu0 0
      %772 = vmatpush1.bf16.msra.mxu0 %v712
      %773 = vmatprep.subr.bf16.mxu0 0
      %774 = vmatpush1.bf16.msra.mxu0 %v713
      %775 = vmatprep.subr.bf16.mxu0 0
      %776 = vmatpush1.bf16.msra.mxu0 %v714
      %777 = vmatprep.subr.bf16.mxu0 0
      %778 = vmatpush1.bf16.msra.mxu0 %v715
      %779 = vmatprep.subr.bf16.mxu0 0
      %780 = vmatpush1.bf16.msra.mxu0 %v716
      %781 = vmatprep.mubr.bf16.mxu0 %v352
      %782 = vmatmul.mubr.bf16.gmra.mrb[0].mxu0 %v351
      %v783 = vpop.f32.mrb[0].mxu0
      %v784 = vadd.f32 %v591, %v783
      %v785 = vpop.f32.mrb[0].mxu0
      %v786 = vpop.f32.mrb[0].mxu0
      %v787 = vadd.f32 %v594, %v786
      %v788 = vpop.f32.mrb[0].mxu0
      %789 = vmatprep.mubr.bf16.mxu0 %v355
      %790 = vmatmul.mubr.bf16.gmra.mrb[0].mxu0 %v354
      %v791 = vpop.f32.mrb[0].mxu0
      %v792 = vadd.f32 %v599, %v791
      %v793 = vpop.f32.mrb[0].mxu0
      %v794 = vpop.f32.mrb[0].mxu0
      %v795 = vadd.f32 %v602, %v794
      %v796 = vpop.f32.mrb[0].mxu0
      %797 = vdwg.mxu0
      %798 = vmatprep.subr.bf16.mxu0 0
      %799 = vmatpush1.bf16.msra.mxu0 %v717
      %800 = vmatprep.subr.bf16.mxu0 0
      %801 = vmatpush1.bf16.msra.mxu0 %v718
      %802 = vmatprep.subr.bf16.mxu0 0
      %803 = vmatpush1.bf16.msra.mxu0 %v719
      %804 = vmatprep.subr.bf16.mxu0 0
      %805 = vmatpush1.bf16.msra.mxu0 %v720
      %806 = vmatprep.subr.bf16.mxu0 0
      %807 = vmatpush1.bf16.msra.mxu0 %v721
      %808 = vmatprep.subr.bf16.mxu0 0
      %809 = vmatpush1.bf16.msra.mxu0 %v722
      %810 = vmatprep.subr.bf16.mxu0 0
      %811 = vmatpush1.bf16.msra.mxu0 %v723
      %812 = vmatprep.subr.bf16.mxu0 0
      %813 = vmatpush1.bf16.msra.mxu0 %v724
      %814 = vmatprep.subr.bf16.mxu0 0
      %815 = vmatpush1.bf16.msra.mxu0 0
      %816 = vmatprep.subr.bf16.mxu0 0
      %817 = vmatpush1.bf16.msra.mxu0 0
      %818 = vmatprep.subr.bf16.mxu0 0
      %819 = vmatpush1.bf16.msra.mxu0 0
      %820 = vmatprep.subr.bf16.mxu0 0
      %821 = vmatpush1.bf16.msra.mxu0 0
      %822 = vmatprep.subr.bf16.mxu0 0
      %823 = vmatpush1.bf16.msra.mxu0 0
      %824 = vmatprep.subr.bf16.mxu0 0
      %825 = vmatpush1.bf16.msra.mxu0 0
      %826 = vmatprep.subr.bf16.mxu0 0
      %827 = vmatpush1.bf16.msra.mxu0 0
      %828 = vmatprep.subr.bf16.mxu0 0
      %829 = vmatpush1.bf16.msra.mxu0 0
      %830 = vmatprep.mubr.bf16.mxu0 0
      %831 = vmatmul.mubr.bf16.gmra.mrb[0].mxu0 %v353
      %v832 = vpop.f32.mrb[0].mxu0
      %v833 = vadd.f32 %v784, %v832
      %v834 = vpop.f32.mrb[0].mxu0
      %v835 = vpop.f32.mrb[0].mxu0
      %v836 = vadd.f32 %v787, %v835
      %v837 = vpop.f32.mrb[0].mxu0
      %838 = vmatprep.mubr.bf16.mxu0 0
      %839 = vmatmul.mubr.bf16.gmra.mrb[0].mxu0 %v356
      %v840 = vpop.f32.mrb[0].mxu0
      %v841 = vadd.f32 %v792, %v840
      %v842 = vpop.f32.mrb[0].mxu0
      %v843 = vpop.f32.mrb[0].mxu0
      %v844 = vadd.f32 %v795, %v843
      %v845 = vpop.f32.mrb[0].mxu0
      %846 = vdwg.mxu0
      %v855 = vunpack.c.l.b16 %v323
      %v856 = vunpack.c.h.b16 %v323
      %v857 = vunpack.c.l.b16 %v324
      %v858 = vunpack.c.l.b16 %v325
      %v859 = vunpack.c.h.b16 %v325
      %v860 = vunpack.c.l.b16 %v326
      %v861 = vunpack.c.l.b16 %v327
      %v862 = vunpack.c.h.b16 %v327
      %v863 = vunpack.c.l.b16 %v328
      %v864 = vunpack.c.l.b16 %v329
      %v865 = vunpack.c.h.b16 %v329
      %v866 = vunpack.c.l.b16 %v330
      %v867 = vpack.c.b16 %v858, %v855
      %v868 = vpack.c.b16 %v859, %v856
      %v869 = vpack.c.b16 %v860, %v857
      %v870 = vpack.c.b16 %v864, %v861
      %v871 = vpack.c.b16 %v865, %v862
      %v872 = vpack.c.b16 %v866, %v863
      %879 = vmatprep.subr.bf16.mxu0 0
      %880 = vmatpush1.bf16.msra.mxu0 %v701
      %881 = vmatprep.subr.bf16.mxu0 0
      %882 = vmatpush1.bf16.msra.mxu0 %v702
      %883 = vmatprep.subr.bf16.mxu0 0
      %884 = vmatpush1.bf16.msra.mxu0 %v703
      %885 = vmatprep.subr.bf16.mxu0 0
      %886 = vmatpush1.bf16.msra.mxu0 %v704
      %887 = vmatprep.subr.bf16.mxu0 0
      %888 = vmatpush1.bf16.msra.mxu0 %v705
      %889 = vmatprep.subr.bf16.mxu0 0
      %890 = vmatpush1.bf16.msra.mxu0 %v706
      %891 = vmatprep.subr.bf16.mxu0 0
      %892 = vmatpush1.bf16.msra.mxu0 %v707
      %893 = vmatprep.subr.bf16.mxu0 0
      %894 = vmatpush1.bf16.msra.mxu0 %v708
      %895 = vmatprep.subr.bf16.mxu0 0
      %896 = vmatpush1.bf16.msra.mxu0 %v709
      %897 = vmatprep.subr.bf16.mxu0 0
      %898 = vmatpush1.bf16.msra.mxu0 %v710
      %899 = vmatprep.subr.bf16.mxu0 0
      %900 = vmatpush1.bf16.msra.mxu0 %v711
      %901 = vmatprep.subr.bf16.mxu0 0
      %902 = vmatpush1.bf16.msra.mxu0 %v712
      %903 = vmatprep.subr.bf16.mxu0 0
      %904 = vmatpush1.bf16.msra.mxu0 %v713
      %905 = vmatprep.subr.bf16.mxu0 0
      %906 = vmatpush1.bf16.msra.mxu0 %v714
      %907 = vmatprep.subr.bf16.mxu0 0
      %908 = vmatpush1.bf16.msra.mxu0 %v715
      %909 = vmatprep.subr.bf16.mxu0 0
      %910 = vmatpush1.bf16.msra.mxu0 %v716
      %911 = vmatprep.mubr.bf16.mxu0 %v868
      %912 = vmatmul.mubr.bf16.gmra.mrb[0].mxu0 %v867
      %v913 = vpop.f32.mrb[0].mxu0
      %v914 = vadd.f32 0.0, %v913
      %v915 = vpop.f32.mrb[0].mxu0
      %v916 = vpop.f32.mrb[0].mxu0
      %v917 = vadd.f32 0.0, %v916
      %v918 = vpop.f32.mrb[0].mxu0
      %919 = vmatprep.mubr.bf16.mxu0 %v871
      %920 = vmatmul.mubr.bf16.gmra.mrb[0].mxu0 %v870
      %v921 = vpop.f32.mrb[0].mxu0
      %v922 = vadd.f32 0.0, %v921
      %v923 = vpop.f32.mrb[0].mxu0
      %v924 = vpop.f32.mrb[0].mxu0
      %v925 = vadd.f32 0.0, %v924
      %v926 = vpop.f32.mrb[0].mxu0
      %927 = vdwg.mxu0
      %928 = vmatprep.subr.bf16.mxu0 0
      %929 = vmatpush1.bf16.msra.mxu0 %v717
      %930 = vmatprep.subr.bf16.mxu0 0
      %931 = vmatpush1.bf16.msra.mxu0 %v718
      %932 = vmatprep.subr.bf16.mxu0 0
      %933 = vmatpush1.bf16.msra.mxu0 %v719
      %934 = vmatprep.subr.bf16.mxu0 0
      %935 = vmatpush1.bf16.msra.mxu0 %v720
      %936 = vmatprep.subr.bf16.mxu0 0
      %937 = vmatpush1.bf16.msra.mxu0 %v721
      %938 = vmatprep.subr.bf16.mxu0 0
      %939 = vmatpush1.bf16.msra.mxu0 %v722
      %940 = vmatprep.subr.bf16.mxu0 0
      %941 = vmatpush1.bf16.msra.mxu0 %v723
      %942 = vmatprep.subr.bf16.mxu0 0
      %943 = vmatpush1.bf16.msra.mxu0 %v724
      %944 = vmatprep.subr.bf16.mxu0 0
      %945 = vmatpush1.bf16.msra.mxu0 0
      %946 = vmatprep.subr.bf16.mxu0 0
      %947 = vmatpush1.bf16.msra.mxu0 0
      %948 = vmatprep.subr.bf16.mxu0 0
      %949 = vmatpush1.bf16.msra.mxu0 0
      %950 = vmatprep.subr.bf16.mxu0 0
      %951 = vmatpush1.bf16.msra.mxu0 0
      %952 = vmatprep.subr.bf16.mxu0 0
      %953 = vmatpush1.bf16.msra.mxu0 0
      %954 = vmatprep.subr.bf16.mxu0 0
      %955 = vmatpush1.bf16.msra.mxu0 0
      %956 = vmatprep.subr.bf16.mxu0 0
      %957 = vmatpush1.bf16.msra.mxu0 0
      %958 = vmatprep.subr.bf16.mxu0 0
      %959 = vmatpush1.bf16.msra.mxu0 0
      %960 = vmatprep.mubr.bf16.mxu0 0
      %961 = vmatmul.mubr.bf16.gmra.mrb[0].mxu0 %v869
      %v962 = vpop.f32.mrb[0].mxu0
      %v963 = vadd.f32 %v914, %v962
      %v964 = vpop.f32.mrb[0].mxu0
      %v965 = vpop.f32.mrb[0].mxu0
      %v966 = vadd.f32 %v917, %v965
      %v967 = vpop.f32.mrb[0].mxu0
      %968 = vmatprep.mubr.bf16.mxu0 0
      %969 = vmatmul.mubr.bf16.gmra.mrb[0].mxu0 %v872
      %v970 = vpop.f32.mrb[0].mxu0
      %v971 = vadd.f32 %v922, %v970
      %v972 = vpop.f32.mrb[0].mxu0
      %v973 = vpop.f32.mrb[0].mxu0
      %v974 = vadd.f32 %v925, %v973
      %v975 = vpop.f32.mrb[0].mxu0
      %976 = vdwg.mxu0
      %v977 = vadd.f32 %v833, %v963
      %v978 = vadd.f32 %v836, %v966
      %v979 = vadd.f32 %v841, %v971
      %v980 = vadd.f32 %v844, %v974
      %v981 = vld [vmem:[%s207] sm:$0xff]
      %v982 = vld [vmem:[%s207 + $0x8] sm:$0xff]
      %v983 = vld [vmem:[%s207 + $0x10] sm:$0xff]
      %v984 = vld [vmem:[%s207 + $0x18] sm:$0xff]
      %v985 = vld [vmem:[%s207 + $0x20] sm:$0xff]
      %v986 = vld [vmem:[%s207 + $0x28] sm:$0xff]
      %v987 = vld [vmem:[%s207 + $0x30] sm:$0xff]
      %v988 = vld [vmem:[%s207 + $0x38] sm:$0xff]
      %v989 = vld [vmem:[%s207 + $0x40] sm:$0xff]
      %v990 = vld [vmem:[%s207 + $0x48] sm:$0xff]
      %v991 = vld [vmem:[%s207 + $0x50] sm:$0xff]
      %v992 = vld [vmem:[%s207 + $0x58] sm:$0xff]
      %v993 = vld [vmem:[%s207 + $0x60] sm:$0xff]
      %v994 = vld [vmem:[%s207 + $0x68] sm:$0xff]
      %v995 = vld [vmem:[%s207 + $0x70] sm:$0xff]
      %v996 = vld [vmem:[%s207 + $0x78] sm:$0xff]
      %v997 = vld [vmem:[%s207 + $0x80] sm:$0xff]
      %v998 = vld [vmem:[%s207 + $0x88] sm:$0xff]
      %v999 = vld [vmem:[%s207 + $0x90] sm:$0xff]
      %v1000 = vld [vmem:[%s207 + $0x98] sm:$0xff]
      %v1001 = vld [vmem:[%s207 + $0xa0] sm:$0xff]
      %v1002 = vld [vmem:[%s207 + $0xa8] sm:$0xff]
      %v1003 = vld [vmem:[%s207 + $0xb0] sm:$0xff]
      %v1004 = vld [vmem:[%s207 + $0xb8] sm:$0xff]
      %v1005 = vld [vmem:[%s207 + $0xc0] sm:$0xff]
      %v1006 = vld [vmem:[%s207 + $0xc8] sm:$0xff]
      %v1007 = vld [vmem:[%s207 + $0xd0] sm:$0xff]
      %v1008 = vld [vmem:[%s207 + $0xd8] sm:$0xff]
      %v1009 = vld [vmem:[%s207 + $0xe0] sm:$0xff]
      %v1010 = vld [vmem:[%s207 + $0xe8] sm:$0xff]
      %v1011 = vld [vmem:[%s207 + $0xf0] sm:$0xff]
      %v1012 = vld [vmem:[%s207 + $0xf8] sm:$0xff]
      %v1013 = vld [vmem:[%s207 + $0x100] sm:$0xff]
      %v1014 = vld [vmem:[%s207 + $0x108] sm:$0xff]
      %v1015 = vld [vmem:[%s207 + $0x110] sm:$0xff]
      %v1016 = vld [vmem:[%s207 + $0x118] sm:$0xff]
      %v1017 = vld [vmem:[%s207 + $0x120] sm:$0xff]
      %v1018 = vld [vmem:[%s207 + $0x128] sm:$0xff]
      %v1019 = vld [vmem:[%s207 + $0x130] sm:$0xff]
      %v1020 = vld [vmem:[%s207 + $0x138] sm:$0xff]
      %v1021 = vld [vmem:[%s207 + $0x140] sm:$0xff]
      %v1022 = vld [vmem:[%s207 + $0x148] sm:$0xff]
      %v1023 = vld [vmem:[%s207 + $0x150] sm:$0xff]
      %v1024 = vld [vmem:[%s207 + $0x158] sm:$0xff]
      %v1025 = vld [vmem:[%s207 + $0x160] sm:$0xff]
      %v1026 = vld [vmem:[%s207 + $0x168] sm:$0xff]
      %v1027 = vld [vmem:[%s207 + $0x170] sm:$0xff]
      %v1028 = vld [vmem:[%s207 + $0x178] sm:$0xff]
      %v1029 = vld [vmem:[%s212] sm:$0xff]
      %v1030 = vld [vmem:[%s212 + $0x8] sm:$0xff]
      %v1031 = vld [vmem:[%s212 + $0x10] sm:$0xff]
      %v1032 = vld [vmem:[%s212 + $0x18] sm:$0xff]
      %v1033 = vld [vmem:[%s212 + $0x20] sm:$0xff]
      %v1034 = vld [vmem:[%s212 + $0x28] sm:$0xff]
      %v1035 = vld [vmem:[%s212 + $0x30] sm:$0xff]
      %v1036 = vld [vmem:[%s212 + $0x38] sm:$0xff]
      %v1037 = vld [vmem:[%s212 + $0x40] sm:$0xff]
      %v1038 = vld [vmem:[%s212 + $0x48] sm:$0xff]
      %v1039 = vld [vmem:[%s212 + $0x50] sm:$0xff]
      %v1040 = vld [vmem:[%s212 + $0x58] sm:$0xff]
      %v1041 = vld [vmem:[%s212 + $0x60] sm:$0xff]
      %v1042 = vld [vmem:[%s212 + $0x68] sm:$0xff]
      %v1043 = vld [vmem:[%s212 + $0x70] sm:$0xff]
      %v1044 = vld [vmem:[%s212 + $0x78] sm:$0xff]
      %v1045 = vld [vmem:[%s212 + $0x80] sm:$0xff]
      %v1046 = vld [vmem:[%s212 + $0x88] sm:$0xff]
      %v1047 = vld [vmem:[%s212 + $0x90] sm:$0xff]
      %v1048 = vld [vmem:[%s212 + $0x98] sm:$0xff]
      %v1049 = vld [vmem:[%s212 + $0xa0] sm:$0xff]
      %v1050 = vld [vmem:[%s212 + $0xa8] sm:$0xff]
      %v1051 = vld [vmem:[%s212 + $0xb0] sm:$0xff]
      %v1052 = vld [vmem:[%s212 + $0xb8] sm:$0xff]
      %v1053 = vld [vmem:[%s212 + $0xc0] sm:$0xff]
      %v1054 = vld [vmem:[%s212 + $0xc8] sm:$0xff]
      %v1055 = vld [vmem:[%s212 + $0xd0] sm:$0xff]
      %v1056 = vld [vmem:[%s212 + $0xd8] sm:$0xff]
      %v1057 = vld [vmem:[%s212 + $0xe0] sm:$0xff]
      %v1058 = vld [vmem:[%s212 + $0xe8] sm:$0xff]
      %v1059 = vld [vmem:[%s212 + $0xf0] sm:$0xff]
      %v1060 = vld [vmem:[%s212 + $0xf8] sm:$0xff]
      %v1061 = vld [vmem:[%s212 + $0x100] sm:$0xff]
      %v1062 = vld [vmem:[%s212 + $0x108] sm:$0xff]
      %v1063 = vld [vmem:[%s212 + $0x110] sm:$0xff]
      %v1064 = vld [vmem:[%s212 + $0x118] sm:$0xff]
      %v1065 = vld [vmem:[%s212 + $0x120] sm:$0xff]
      %v1066 = vld [vmem:[%s212 + $0x128] sm:$0xff]
      %v1067 = vld [vmem:[%s212 + $0x130] sm:$0xff]
      %v1068 = vld [vmem:[%s212 + $0x138] sm:$0xff]
      %v1069 = vld [vmem:[%s212 + $0x140] sm:$0xff]
      %v1070 = vld [vmem:[%s212 + $0x148] sm:$0xff]
      %v1071 = vld [vmem:[%s212 + $0x150] sm:$0xff]
      %v1072 = vld [vmem:[%s212 + $0x158] sm:$0xff]
      %v1073 = vld [vmem:[%s212 + $0x160] sm:$0xff]
      %v1074 = vld [vmem:[%s212 + $0x168] sm:$0xff]
      %v1075 = vld [vmem:[%s212 + $0x170] sm:$0xff]
      %v1076 = vld [vmem:[%s212 + $0x178] sm:$0xff]
      %s1077 = scalar_lea.vmem %s2, 48
      %v1078 = vld [vmem:[%s1077] sm:$0xff]
      %v1079 = vld [vmem:[%s1077 + $0x8] sm:$0xf]
      %v1080 = vld [vmem:[%s1077 + $0xc] sm:$0xff]
      %v1081 = vld [vmem:[%s1077 + $0x14] sm:$0xf]
      %v1082 = vld [vmem:[%s1077 + $0x18] sm:$0xff]
      %v1083 = vld [vmem:[%s1077 + $0x20] sm:$0xf]
      %v1084 = vld [vmem:[%s1077 + $0x24] sm:$0xff]
      %v1085 = vld [vmem:[%s1077 + $0x2c] sm:$0xf]
      %s1086 = scalar_lea.vmem %s3, 48
      %v1087 = vld [vmem:[%s1086] sm:$0xff]
      %v1088 = vld [vmem:[%s1086 + $0x8] sm:$0xf]
      %v1089 = vld [vmem:[%s1086 + $0xc] sm:$0xff]
      %v1090 = vld [vmem:[%s1086 + $0x14] sm:$0xf]
      %v1091 = vld [vmem:[%s1086 + $0x18] sm:$0xff]
      %v1092 = vld [vmem:[%s1086 + $0x20] sm:$0xf]
      %v1093 = vld [vmem:[%s1086 + $0x24] sm:$0xff]
      %v1094 = vld [vmem:[%s1086 + $0x2c] sm:$0xf]
      %v1103 = vunpack.c.l.b16 %v1078
      %v1104 = vunpack.c.h.b16 %v1078
      %v1105 = vunpack.c.l.b16 %v1079
      %v1106 = vunpack.c.l.b16 %v1080
      %v1107 = vunpack.c.h.b16 %v1080
      %v1108 = vunpack.c.l.b16 %v1081
      %v1109 = vunpack.c.l.b16 %v1082
      %v1110 = vunpack.c.h.b16 %v1082
      %v1111 = vunpack.c.l.b16 %v1083
      %v1112 = vunpack.c.l.b16 %v1084
      %v1113 = vunpack.c.h.b16 %v1084
      %v1114 = vunpack.c.l.b16 %v1085
      %v1115 = vpack.c.b16 %v1106, %v1103
      %v1116 = vpack.c.b16 %v1107, %v1104
      %v1117 = vpack.c.b16 %v1108, %v1105
      %v1118 = vpack.c.b16 %v1112, %v1109
      %v1119 = vpack.c.b16 %v1113, %v1110
      %v1120 = vpack.c.b16 %v1114, %v1111
      %v1175 = vunpack.c.l.b16 %v981
      %v1176 = vunpack.c.h.b16 %v981
      %v1177 = vunpack.c.l.b16 %v982
      %v1178 = vunpack.c.h.b16 %v982
      %v1179 = vunpack.c.l.b16 %v983
      %v1180 = vunpack.c.h.b16 %v983
      %v1181 = vunpack.c.l.b16 %v984
      %v1182 = vunpack.c.h.b16 %v984
      %v1183 = vunpack.c.l.b16 %v985
      %v1184 = vunpack.c.h.b16 %v985
      %v1185 = vunpack.c.l.b16 %v986
      %v1186 = vunpack.c.h.b16 %v986
      %v1187 = vunpack.c.l.b16 %v987
      %v1188 = vunpack.c.h.b16 %v987
      %v1189 = vunpack.c.l.b16 %v988
      %v1190 = vunpack.c.h.b16 %v988
      %v1191 = vunpack.c.l.b16 %v989
      %v1192 = vunpack.c.h.b16 %v989
      %v1193 = vunpack.c.l.b16 %v990
      %v1194 = vunpack.c.h.b16 %v990
      %v1195 = vunpack.c.l.b16 %v991
      %v1196 = vunpack.c.h.b16 %v991
      %v1197 = vunpack.c.l.b16 %v992
      %v1198 = vunpack.c.h.b16 %v992
      %v1199 = vunpack.c.l.b16 %v993
      %v1200 = vunpack.c.h.b16 %v993
      %v1201 = vunpack.c.l.b16 %v994
      %v1202 = vunpack.c.h.b16 %v994
      %v1203 = vunpack.c.l.b16 %v995
      %v1204 = vunpack.c.h.b16 %v995
      %v1205 = vunpack.c.l.b16 %v996
      %v1206 = vunpack.c.h.b16 %v996
      %v1207 = vunpack.c.l.b16 %v997
      %v1208 = vunpack.c.h.b16 %v997
      %v1209 = vunpack.c.l.b16 %v998
      %v1210 = vunpack.c.h.b16 %v998
      %v1211 = vunpack.c.l.b16 %v999
      %v1212 = vunpack.c.h.b16 %v999
      %v1213 = vunpack.c.l.b16 %v1000
      %v1214 = vunpack.c.h.b16 %v1000
      %v1215 = vunpack.c.l.b16 %v1001
      %v1216 = vunpack.c.h.b16 %v1001
      %v1217 = vunpack.c.l.b16 %v1002
      %v1218 = vunpack.c.h.b16 %v1002
      %v1219 = vunpack.c.l.b16 %v1003
      %v1220 = vunpack.c.h.b16 %v1003
      %v1221 = vunpack.c.l.b16 %v1004
      %v1222 = vunpack.c.h.b16 %v1004
      %v1223 = vunpack.c.l.b16 %v1005
      %v1224 = vunpack.c.h.b16 %v1005
      %v1225 = vunpack.c.l.b16 %v1006
      %v1226 = vunpack.c.h.b16 %v1006
      %v1227 = vunpack.c.l.b16 %v1007
      %v1228 = vunpack.c.h.b16 %v1007
      %v1229 = vunpack.c.l.b16 %v1008
      %v1230 = vunpack.c.h.b16 %v1008
      %v1231 = vunpack.c.l.b16 %v1009
      %v1232 = vunpack.c.h.b16 %v1009
      %v1233 = vunpack.c.l.b16 %v1010
      %v1234 = vunpack.c.h.b16 %v1010
      %v1235 = vunpack.c.l.b16 %v1011
      %v1236 = vunpack.c.h.b16 %v1011
      %v1237 = vunpack.c.l.b16 %v1012
      %v1238 = vunpack.c.h.b16 %v1012
      %v1239 = vunpack.c.l.b16 %v1013
      %v1240 = vunpack.c.h.b16 %v1013
      %v1241 = vunpack.c.l.b16 %v1014
      %v1242 = vunpack.c.h.b16 %v1014
      %v1243 = vunpack.c.l.b16 %v1015
      %v1244 = vunpack.c.h.b16 %v1015
      %v1245 = vunpack.c.l.b16 %v1016
      %v1246 = vunpack.c.h.b16 %v1016
      %v1247 = vunpack.c.l.b16 %v1017
      %v1248 = vunpack.c.h.b16 %v1017
      %v1249 = vunpack.c.l.b16 %v1018
      %v1250 = vunpack.c.h.b16 %v1018
      %v1251 = vunpack.c.l.b16 %v1019
      %v1252 = vunpack.c.h.b16 %v1019
      %v1253 = vunpack.c.l.b16 %v1020
      %v1254 = vunpack.c.h.b16 %v1020
      %v1255 = vunpack.c.l.b16 %v1021
      %v1256 = vunpack.c.h.b16 %v1021
      %v1257 = vunpack.c.l.b16 %v1022
      %v1258 = vunpack.c.h.b16 %v1022
      %v1259 = vunpack.c.l.b16 %v1023
      %v1260 = vunpack.c.h.b16 %v1023
      %v1261 = vunpack.c.l.b16 %v1024
      %v1262 = vunpack.c.h.b16 %v1024
      %v1263 = vunpack.c.l.b16 %v1025
      %v1264 = vunpack.c.h.b16 %v1025
      %v1265 = vunpack.c.l.b16 %v1026
      %v1266 = vunpack.c.h.b16 %v1026
      %v1267 = vunpack.c.l.b16 %v1027
      %v1268 = vunpack.c.h.b16 %v1027
      %v1269 = vunpack.c.l.b16 %v1028
      %v1270 = vunpack.c.h.b16 %v1028
      %v1271 = vpack.c.b16 %v1177, %v1175
      %v1272 = vpack.c.b16 %v1178, %v1176
      %v1273 = vpack.c.b16 %v1181, %v1179
      %v1274 = vpack.c.b16 %v1182, %v1180
      %v1275 = vpack.c.b16 %v1185, %v1183
      %v1276 = vpack.c.b16 %v1186, %v1184
      %v1277 = vpack.c.b16 %v1189, %v1187
      %v1278 = vpack.c.b16 %v1190, %v1188
      %v1279 = vpack.c.b16 %v1193, %v1191
      %v1280 = vpack.c.b16 %v1194, %v1192
      %v1281 = vpack.c.b16 %v1197, %v1195
      %v1282 = vpack.c.b16 %v1198, %v1196
      %v1283 = vpack.c.b16 %v1201, %v1199
      %v1284 = vpack.c.b16 %v1202, %v1200
      %v1285 = vpack.c.b16 %v1205, %v1203
      %v1286 = vpack.c.b16 %v1206, %v1204
      %v1287 = vpack.c.b16 %v1209, %v1207
      %v1288 = vpack.c.b16 %v1210, %v1208
      %v1289 = vpack.c.b16 %v1213, %v1211
      %v1290 = vpack.c.b16 %v1214, %v1212
      %v1291 = vpack.c.b16 %v1217, %v1215
      %v1292 = vpack.c.b16 %v1218, %v1216
      %v1293 = vpack.c.b16 %v1221, %v1219
      %v1294 = vpack.c.b16 %v1222, %v1220
      %v1295 = vpack.c.b16 %v1225, %v1223
      %v1296 = vpack.c.b16 %v1226, %v1224
      %v1297 = vpack.c.b16 %v1229, %v1227
      %v1298 = vpack.c.b16 %v1230, %v1228
      %v1299 = vpack.c.b16 %v1233, %v1231
      %v1300 = vpack.c.b16 %v1234, %v1232
      %v1301 = vpack.c.b16 %v1237, %v1235
      %v1302 = vpack.c.b16 %v1238, %v1236
      %v1303 = vpack.c.b16 %v1241, %v1239
      %v1304 = vpack.c.b16 %v1242, %v1240
      %v1305 = vpack.c.b16 %v1245, %v1243
      %v1306 = vpack.c.b16 %v1246, %v1244
      %v1307 = vpack.c.b16 %v1249, %v1247
      %v1308 = vpack.c.b16 %v1250, %v1248
      %v1309 = vpack.c.b16 %v1253, %v1251
      %v1310 = vpack.c.b16 %v1254, %v1252
      %v1311 = vpack.c.b16 %v1257, %v1255
      %v1312 = vpack.c.b16 %v1258, %v1256
      %v1313 = vpack.c.b16 %v1261, %v1259
      %v1314 = vpack.c.b16 %v1262, %v1260
      %v1315 = vpack.c.b16 %v1265, %v1263
      %v1316 = vpack.c.b16 %v1266, %v1264
      %v1317 = vpack.c.b16 %v1269, %v1267
      %v1318 = vpack.c.b16 %v1270, %v1268
      %1319 = vrot.lane.b32.xlu0 %v1271, 112
      %v1320 = vpop.permute.xlu0 %1319
      %1321 = vrot.lane.b32.xlu0 %v1272, 112
      %v1322 = vpop.permute.xlu0 %1321
      %1323 = vrot.lane.b32.xlu0 %v1273, 112
      %v1324 = vpop.permute.xlu0 %1323
      %1325 = vrot.lane.b32.xlu0 %v1274, 112
      %v1326 = vpop.permute.xlu0 %1325
      %1327 = vrot.lane.b32.xlu0 %v1275, 112
      %v1328 = vpop.permute.xlu0 %1327
      %1329 = vrot.lane.b32.xlu0 %v1276, 112
      %v1330 = vpop.permute.xlu0 %1329
      %1331 = vrot.lane.b32.xlu0 %v1277, 112
      %v1332 = vpop.permute.xlu0 %1331
      %1333 = vrot.lane.b32.xlu0 %v1278, 112
      %v1334 = vpop.permute.xlu0 %1333
      %1335 = vrot.lane.b32.xlu0 %v1279, 112
      %v1336 = vpop.permute.xlu0 %1335
      %1337 = vrot.lane.b32.xlu0 %v1280, 112
      %v1338 = vpop.permute.xlu0 %1337
      %1339 = vrot.lane.b32.xlu0 %v1281, 112
      %v1340 = vpop.permute.xlu0 %1339
      %1341 = vrot.lane.b32.xlu0 %v1282, 112
      %v1342 = vpop.permute.xlu0 %1341
      %1343 = vrot.lane.b32.xlu0 %v1283, 112
      %v1344 = vpop.permute.xlu0 %1343
      %1345 = vrot.lane.b32.xlu0 %v1284, 112
      %v1346 = vpop.permute.xlu0 %1345
      %1347 = vrot.lane.b32.xlu0 %v1285, 112
      %v1348 = vpop.permute.xlu0 %1347
      %1349 = vrot.lane.b32.xlu0 %v1286, 112
      %v1350 = vpop.permute.xlu0 %1349
      %1351 = vrot.lane.b32.xlu0 %v1287, 112
      %v1352 = vpop.permute.xlu0 %1351
      %1353 = vrot.lane.b32.xlu0 %v1288, 112
      %v1354 = vpop.permute.xlu0 %1353
      %1355 = vrot.lane.b32.xlu0 %v1289, 112
      %v1356 = vpop.permute.xlu0 %1355
      %1357 = vrot.lane.b32.xlu0 %v1290, 112
      %v1358 = vpop.permute.xlu0 %1357
      %1359 = vrot.lane.b32.xlu0 %v1291, 112
      %v1360 = vpop.permute.xlu0 %1359
      %1361 = vrot.lane.b32.xlu0 %v1292, 112
      %v1362 = vpop.permute.xlu0 %1361
      %1363 = vrot.lane.b32.xlu0 %v1293, 112
      %v1364 = vpop.permute.xlu0 %1363
      %1365 = vrot.lane.b32.xlu0 %v1294, 112
      %v1366 = vpop.permute.xlu0 %1365
      %1367 = vrot.lane.b32.xlu0 %v1295, 112
      %v1368 = vpop.permute.xlu0 %1367
      %1369 = vrot.lane.b32.xlu0 %v1296, 112
      %v1370 = vpop.permute.xlu0 %1369
      %1371 = vrot.lane.b32.xlu0 %v1297, 112
      %v1372 = vpop.permute.xlu0 %1371
      %1373 = vrot.lane.b32.xlu0 %v1298, 112
      %v1374 = vpop.permute.xlu0 %1373
      %1375 = vrot.lane.b32.xlu0 %v1299, 112
      %v1376 = vpop.permute.xlu0 %1375
      %1377 = vrot.lane.b32.xlu0 %v1300, 112
      %v1378 = vpop.permute.xlu0 %1377
      %1379 = vrot.lane.b32.xlu0 %v1301, 112
      %v1380 = vpop.permute.xlu0 %1379
      %1381 = vrot.lane.b32.xlu0 %v1302, 112
      %v1382 = vpop.permute.xlu0 %1381
      %1383 = vrot.lane.b32.xlu0 %v1303, 112
      %v1384 = vpop.permute.xlu0 %1383
      %1385 = vrot.lane.b32.xlu0 %v1304, 112
      %v1386 = vpop.permute.xlu0 %1385
      %1387 = vrot.lane.b32.xlu0 %v1305, 112
      %v1388 = vpop.permute.xlu0 %1387
      %1389 = vrot.lane.b32.xlu0 %v1306, 112
      %v1390 = vpop.permute.xlu0 %1389
      %1391 = vrot.lane.b32.xlu0 %v1307, 112
      %v1392 = vpop.permute.xlu0 %1391
      %1393 = vrot.lane.b32.xlu0 %v1308, 112
      %v1394 = vpop.permute.xlu0 %1393
      %1395 = vrot.lane.b32.xlu0 %v1309, 112
      %v1396 = vpop.permute.xlu0 %1395
      %1397 = vrot.lane.b32.xlu0 %v1310, 112
      %v1398 = vpop.permute.xlu0 %1397
      %1399 = vrot.lane.b32.xlu0 %v1311, 112
      %v1400 = vpop.permute.xlu0 %1399
      %1401 = vrot.lane.b32.xlu0 %v1312, 112
      %v1402 = vpop.permute.xlu0 %1401
      %1403 = vrot.lane.b32.xlu0 %v1313, 112
      %v1404 = vpop.permute.xlu0 %1403
      %1405 = vrot.lane.b32.xlu0 %v1314, 112
      %v1406 = vpop.permute.xlu0 %1405
      %1407 = vrot.lane.b32.xlu0 %v1315, 112
      %v1408 = vpop.permute.xlu0 %1407
      %1409 = vrot.lane.b32.xlu0 %v1316, 112
      %v1410 = vpop.permute.xlu0 %1409
      %1411 = vrot.lane.b32.xlu0 %v1317, 112
      %v1412 = vpop.permute.xlu0 %1411
      %1413 = vrot.lane.b32.xlu0 %v1318, 112
      %v1414 = vpop.permute.xlu0 %1413
      %vm1415 = vcmask 916480
      %v1416 = vsel %vm1415, %v1320, %v1322
      %v1417 = vsel %vm1415, %v1324, %v1326
      %v1418 = vsel %vm1415, %v1328, %v1330
      %v1419 = vsel %vm1415, %v1332, %v1334
      %v1420 = vsel %vm1415, %v1336, %v1338
      %v1421 = vsel %vm1415, %v1340, %v1342
      %v1422 = vsel %vm1415, %v1344, %v1346
      %v1423 = vsel %vm1415, %v1348, %v1350
      %v1424 = vsel %vm1415, %v1352, %v1354
      %v1425 = vsel %vm1415, %v1356, %v1358
      %v1426 = vsel %vm1415, %v1360, %v1362
      %v1427 = vsel %vm1415, %v1364, %v1366
      %v1428 = vsel %vm1415, %v1368, %v1370
      %v1429 = vsel %vm1415, %v1372, %v1374
      %v1430 = vsel %vm1415, %v1376, %v1378
      %v1431 = vsel %vm1415, %v1380, %v1382
      %v1432 = vsel %vm1415, %v1384, %v1386
      %v1433 = vsel %vm1415, %v1388, %v1390
      %v1434 = vsel %vm1415, %v1392, %v1394
      %v1435 = vsel %vm1415, %v1396, %v1398
      %v1436 = vsel %vm1415, %v1400, %v1402
      %v1437 = vsel %vm1415, %v1404, %v1406
      %v1438 = vsel %vm1415, %v1408, %v1410
      %v1439 = vsel %vm1415, %v1412, %v1414
      %1464 = vmatprep.subr.bf16.mxu0 0
      %1465 = vmatpush1.bf16.msra.mxu0 %v1416
      %1466 = vmatprep.subr.bf16.mxu0 0
      %1467 = vmatpush1.bf16.msra.mxu0 %v1417
      %1468 = vmatprep.subr.bf16.mxu0 0
      %1469 = vmatpush1.bf16.msra.mxu0 %v1418
      %1470 = vmatprep.subr.bf16.mxu0 0
      %1471 = vmatpush1.bf16.msra.mxu0 %v1419
      %1472 = vmatprep.subr.bf16.mxu0 0
      %1473 = vmatpush1.bf16.msra.mxu0 %v1420
      %1474 = vmatprep.subr.bf16.mxu0 0
      %1475 = vmatpush1.bf16.msra.mxu0 %v1421
      %1476 = vmatprep.subr.bf16.mxu0 0
      %1477 = vmatpush1.bf16.msra.mxu0 %v1422
      %1478 = vmatprep.subr.bf16.mxu0 0
      %1479 = vmatpush1.bf16.msra.mxu0 %v1423
      %1480 = vmatprep.subr.bf16.mxu0 0
      %1481 = vmatpush1.bf16.msra.mxu0 %v1424
      %1482 = vmatprep.subr.bf16.mxu0 0
      %1483 = vmatpush1.bf16.msra.mxu0 %v1425
      %1484 = vmatprep.subr.bf16.mxu0 0
      %1485 = vmatpush1.bf16.msra.mxu0 %v1426
      %1486 = vmatprep.subr.bf16.mxu0 0
      %1487 = vmatpush1.bf16.msra.mxu0 %v1427
      %1488 = vmatprep.subr.bf16.mxu0 0
      %1489 = vmatpush1.bf16.msra.mxu0 %v1428
      %1490 = vmatprep.subr.bf16.mxu0 0
      %1491 = vmatpush1.bf16.msra.mxu0 %v1429
      %1492 = vmatprep.subr.bf16.mxu0 0
      %1493 = vmatpush1.bf16.msra.mxu0 %v1430
      %1494 = vmatprep.subr.bf16.mxu0 0
      %1495 = vmatpush1.bf16.msra.mxu0 %v1431
      %1496 = vmatprep.mubr.bf16.mxu0 %v1116
      %1497 = vmatmul.mubr.bf16.gmra.mrb[0].mxu0 %v1115
      %v1498 = vpop.f32.mrb[0].mxu0
      %v1499 = vadd.f32 0.0, %v1498
      %v1500 = vpop.f32.mrb[0].mxu0
      %v1501 = vpop.f32.mrb[0].mxu0
      %v1502 = vadd.f32 0.0, %v1501
      %v1503 = vpop.f32.mrb[0].mxu0
      %1504 = vmatprep.mubr.bf16.mxu0 %v1119
      %1505 = vmatmul.mubr.bf16.gmra.mrb[0].mxu0 %v1118
      %v1506 = vpop.f32.mrb[0].mxu0
      %v1507 = vadd.f32 0.0, %v1506
      %v1508 = vpop.f32.mrb[0].mxu0
      %v1509 = vpop.f32.mrb[0].mxu0
      %v1510 = vadd.f32 0.0, %v1509
      %v1511 = vpop.f32.mrb[0].mxu0
      %1512 = vdwg.mxu0
      %1513 = vmatprep.subr.bf16.mxu0 0
      %1514 = vmatpush1.bf16.msra.mxu0 %v1432
      %1515 = vmatprep.subr.bf16.mxu0 0
      %1516 = vmatpush1.bf16.msra.mxu0 %v1433
      %1517 = vmatprep.subr.bf16.mxu0 0
      %1518 = vmatpush1.bf16.msra.mxu0 %v1434
      %1519 = vmatprep.subr.bf16.mxu0 0
      %1520 = vmatpush1.bf16.msra.mxu0 %v1435
      %1521 = vmatprep.subr.bf16.mxu0 0
      %1522 = vmatpush1.bf16.msra.mxu0 %v1436
      %1523 = vmatprep.subr.bf16.mxu0 0
      %1524 = vmatpush1.bf16.msra.mxu0 %v1437
      %1525 = vmatprep.subr.bf16.mxu0 0
      %1526 = vmatpush1.bf16.msra.mxu0 %v1438
      %1527 = vmatprep.subr.bf16.mxu0 0
      %1528 = vmatpush1.bf16.msra.mxu0 %v1439
      %1529 = vmatprep.subr.bf16.mxu0 0
      %1530 = vmatpush1.bf16.msra.mxu0 0
      %1531 = vmatprep.subr.bf16.mxu0 0
      %1532 = vmatpush1.bf16.msra.mxu0 0
      %1533 = vmatprep.subr.bf16.mxu0 0
      %1534 = vmatpush1.bf16.msra.mxu0 0
      %1535 = vmatprep.subr.bf16.mxu0 0
      %1536 = vmatpush1.bf16.msra.mxu0 0
      %1537 = vmatprep.subr.bf16.mxu0 0
      %1538 = vmatpush1.bf16.msra.mxu0 0
      %1539 = vmatprep.subr.bf16.mxu0 0
      %1540 = vmatpush1.bf16.msra.mxu0 0
      %1541 = vmatprep.subr.bf16.mxu0 0
      %1542 = vmatpush1.bf16.msra.mxu0 0
      %1543 = vmatprep.subr.bf16.mxu0 0
      %1544 = vmatpush1.bf16.msra.mxu0 0
      %1545 = vmatprep.mubr.bf16.mxu0 0
      %1546 = vmatmul.mubr.bf16.gmra.mrb[0].mxu0 %v1117
      %v1547 = vpop.f32.mrb[0].mxu0
      %v1548 = vadd.f32 %v1499, %v1547
      %v1549 = vpop.f32.mrb[0].mxu0
      %v1550 = vpop.f32.mrb[0].mxu0
      %v1551 = vadd.f32 %v1502, %v1550
      %v1552 = vpop.f32.mrb[0].mxu0
      %1553 = vmatprep.mubr.bf16.mxu0 0
      %1554 = vmatmul.mubr.bf16.gmra.mrb[0].mxu0 %v1120
      %v1555 = vpop.f32.mrb[0].mxu0
      %v1556 = vadd.f32 %v1507, %v1555
      %v1557 = vpop.f32.mrb[0].mxu0
      %v1558 = vpop.f32.mrb[0].mxu0
      %v1559 = vadd.f32 %v1510, %v1558
      %v1560 = vpop.f32.mrb[0].mxu0
      %1561 = vdwg.mxu0
      %v1562 = vadd.f32 %v977, %v1548
      %v1563 = vadd.f32 %v978, %v1551
      %v1564 = vadd.f32 %v979, %v1556
      %v1565 = vadd.f32 %v980, %v1559
      %v1614 = vunpack.c.l.b16 %v1029
      %v1615 = vunpack.c.h.b16 %v1029
      %v1616 = vunpack.c.l.b16 %v1030
      %v1617 = vunpack.c.h.b16 %v1030
      %v1618 = vunpack.c.l.b16 %v1031
      %v1619 = vunpack.c.h.b16 %v1031
      %v1620 = vunpack.c.l.b16 %v1032
      %v1621 = vunpack.c.h.b16 %v1032
      %v1622 = vunpack.c.l.b16 %v1033
      %v1623 = vunpack.c.h.b16 %v1033
      %v1624 = vunpack.c.l.b16 %v1034
      %v1625 = vunpack.c.h.b16 %v1034
      %v1626 = vunpack.c.l.b16 %v1035
      %v1627 = vunpack.c.h.b16 %v1035
      %v1628 = vunpack.c.l.b16 %v1036
      %v1629 = vunpack.c.h.b16 %v1036
      %v1630 = vunpack.c.l.b16 %v1037
      %v1631 = vunpack.c.h.b16 %v1037
      %v1632 = vunpack.c.l.b16 %v1038
      %v1633 = vunpack.c.h.b16 %v1038
      %v1634 = vunpack.c.l.b16 %v1039
      %v1635 = vunpack.c.h.b16 %v1039
      %v1636 = vunpack.c.l.b16 %v1040
      %v1637 = vunpack.c.h.b16 %v1040
      %v1638 = vunpack.c.l.b16 %v1041
      %v1639 = vunpack.c.h.b16 %v1041
      %v1640 = vunpack.c.l.b16 %v1042
      %v1641 = vunpack.c.h.b16 %v1042
      %v1642 = vunpack.c.l.b16 %v1043
      %v1643 = vunpack.c.h.b16 %v1043
      %v1644 = vunpack.c.l.b16 %v1044
      %v1645 = vunpack.c.h.b16 %v1044
      %v1646 = vunpack.c.l.b16 %v1045
      %v1647 = vunpack.c.h.b16 %v1045
      %v1648 = vunpack.c.l.b16 %v1046
      %v1649 = vunpack.c.h.b16 %v1046
      %v1650 = vunpack.c.l.b16 %v1047
      %v1651 = vunpack.c.h.b16 %v1047
      %v1652 = vunpack.c.l.b16 %v1048
      %v1653 = vunpack.c.h.b16 %v1048
      %v1654 = vunpack.c.l.b16 %v1049
      %v1655 = vunpack.c.h.b16 %v1049
      %v1656 = vunpack.c.l.b16 %v1050
      %v1657 = vunpack.c.h.b16 %v1050
      %v1658 = vunpack.c.l.b16 %v1051
      %v1659 = vunpack.c.h.b16 %v1051
      %v1660 = vunpack.c.l.b16 %v1052
      %v1661 = vunpack.c.h.b16 %v1052
      %v1662 = vunpack.c.l.b16 %v1053
      %v1663 = vunpack.c.h.b16 %v1053
      %v1664 = vunpack.c.l.b16 %v1054
      %v1665 = vunpack.c.h.b16 %v1054
      %v1666 = vunpack.c.l.b16 %v1055
      %v1667 = vunpack.c.h.b16 %v1055
      %v1668 = vunpack.c.l.b16 %v1056
      %v1669 = vunpack.c.h.b16 %v1056
      %v1670 = vunpack.c.l.b16 %v1057
      %v1671 = vunpack.c.h.b16 %v1057
      %v1672 = vunpack.c.l.b16 %v1058
      %v1673 = vunpack.c.h.b16 %v1058
      %v1674 = vunpack.c.l.b16 %v1059
      %v1675 = vunpack.c.h.b16 %v1059
      %v1676 = vunpack.c.l.b16 %v1060
      %v1677 = vunpack.c.h.b16 %v1060
      %v1678 = vunpack.c.l.b16 %v1061
      %v1679 = vunpack.c.h.b16 %v1061
      %v1680 = vunpack.c.l.b16 %v1062
      %v1681 = vunpack.c.h.b16 %v1062
      %v1682 = vunpack.c.l.b16 %v1063
      %v1683 = vunpack.c.h.b16 %v1063
      %v1684 = vunpack.c.l.b16 %v1064
      %v1685 = vunpack.c.h.b16 %v1064
      %v1686 = vunpack.c.l.b16 %v1065
      %v1687 = vunpack.c.h.b16 %v1065
      %v1688 = vunpack.c.l.b16 %v1066
      %v1689 = vunpack.c.h.b16 %v1066
      %v1690 = vunpack.c.l.b16 %v1067
      %v1691 = vunpack.c.h.b16 %v1067
      %v1692 = vunpack.c.l.b16 %v1068
      %v1693 = vunpack.c.h.b16 %v1068
      %v1694 = vunpack.c.l.b16 %v1069
      %v1695 = vunpack.c.h.b16 %v1069
      %v1696 = vunpack.c.l.b16 %v1070
      %v1697 = vunpack.c.h.b16 %v1070
      %v1698 = vunpack.c.l.b16 %v1071
      %v1699 = vunpack.c.h.b16 %v1071
      %v1700 = vunpack.c.l.b16 %v1072
      %v1701 = vunpack.c.h.b16 %v1072
      %v1702 = vunpack.c.l.b16 %v1073
      %v1703 = vunpack.c.h.b16 %v1073
      %v1704 = vunpack.c.l.b16 %v1074
      %v1705 = vunpack.c.h.b16 %v1074
      %v1706 = vunpack.c.l.b16 %v1075
      %v1707 = vunpack.c.h.b16 %v1075
      %v1708 = vunpack.c.l.b16 %v1076
      %v1709 = vunpack.c.h.b16 %v1076
      %v1710 = vpack.c.b16 %v1616, %v1614
      %v1711 = vpack.c.b16 %v1617, %v1615
      %v1712 = vpack.c.b16 %v1620, %v1618
      %v1713 = vpack.c.b16 %v1621, %v1619
      %v1714 = vpack.c.b16 %v1624, %v1622
      %v1715 = vpack.c.b16 %v1625, %v1623
      %v1716 = vpack.c.b16 %v1628, %v1626
      %v1717 = vpack.c.b16 %v1629, %v1627
      %v1718 = vpack.c.b16 %v1632, %v1630
      %v1719 = vpack.c.b16 %v1633, %v1631
      %v1720 = vpack.c.b16 %v1636, %v1634
      %v1721 = vpack.c.b16 %v1637, %v1635
      %v1722 = vpack.c.b16 %v1640, %v1638
      %v1723 = vpack.c.b16 %v1641, %v1639
      %v1724 = vpack.c.b16 %v1644, %v1642
      %v1725 = vpack.c.b16 %v1645, %v1643
      %v1726 = vpack.c.b16 %v1648, %v1646
      %v1727 = vpack.c.b16 %v1649, %v1647
      %v1728 = vpack.c.b16 %v1652, %v1650
      %v1729 = vpack.c.b16 %v1653, %v1651
      %v1730 = vpack.c.b16 %v1656, %v1654
      %v1731 = vpack.c.b16 %v1657, %v1655
      %v1732 = vpack.c.b16 %v1660, %v1658
      %v1733 = vpack.c.b16 %v1661, %v1659
      %v1734 = vpack.c.b16 %v1664, %v1662
      %v1735 = vpack.c.b16 %v1665, %v1663
      %v1736 = vpack.c.b16 %v1668, %v1666
      %v1737 = vpack.c.b16 %v1669, %v1667
      %v1738 = vpack.c.b16 %v1672, %v1670
      %v1739 = vpack.c.b16 %v1673, %v1671
      %v1740 = vpack.c.b16 %v1676, %v1674
      %v1741 = vpack.c.b16 %v1677, %v1675
      %v1742 = vpack.c.b16 %v1680, %v1678
      %v1743 = vpack.c.b16 %v1681, %v1679
      %v1744 = vpack.c.b16 %v1684, %v1682
      %v1745 = vpack.c.b16 %v1685, %v1683
      %v1746 = vpack.c.b16 %v1688, %v1686
      %v1747 = vpack.c.b16 %v1689, %v1687
      %v1748 = vpack.c.b16 %v1692, %v1690
      %v1749 = vpack.c.b16 %v1693, %v1691
      %v1750 = vpack.c.b16 %v1696, %v1694
      %v1751 = vpack.c.b16 %v1697, %v1695
      %v1752 = vpack.c.b16 %v1700, %v1698
      %v1753 = vpack.c.b16 %v1701, %v1699
      %v1754 = vpack.c.b16 %v1704, %v1702
      %v1755 = vpack.c.b16 %v1705, %v1703
      %v1756 = vpack.c.b16 %v1708, %v1706
      %v1757 = vpack.c.b16 %v1709, %v1707
      %1758 = vrot.lane.b32.xlu0 %v1710, 112
      %v1759 = vpop.permute.xlu0 %1758
      %1760 = vrot.lane.b32.xlu0 %v1711, 112
      %v1761 = vpop.permute.xlu0 %1760
      %1762 = vrot.lane.b32.xlu0 %v1712, 112
      %v1763 = vpop.permute.xlu0 %1762
      %1764 = vrot.lane.b32.xlu0 %v1713, 112
      %v1765 = vpop.permute.xlu0 %1764
      %1766 = vrot.lane.b32.xlu0 %v1714, 112
      %v1767 = vpop.permute.xlu0 %1766
      %1768 = vrot.lane.b32.xlu0 %v1715, 112
      %v1769 = vpop.permute.xlu0 %1768
      %1770 = vrot.lane.b32.xlu0 %v1716, 112
      %v1771 = vpop.permute.xlu0 %1770
      %1772 = vrot.lane.b32.xlu0 %v1717, 112
      %v1773 = vpop.permute.xlu0 %1772
      %1774 = vrot.lane.b32.xlu0 %v1718, 112
      %v1775 = vpop.permute.xlu0 %1774
      %1776 = vrot.lane.b32.xlu0 %v1719, 112
      %v1777 = vpop.permute.xlu0 %1776
      %1778 = vrot.lane.b32.xlu0 %v1720, 112
      %v1779 = vpop.permute.xlu0 %1778
      %1780 = vrot.lane.b32.xlu0 %v1721, 112
      %v1781 = vpop.permute.xlu0 %1780
      %1782 = vrot.lane.b32.xlu0 %v1722, 112
      %v1783 = vpop.permute.xlu0 %1782
      %1784 = vrot.lane.b32.xlu0 %v1723, 112
      %v1785 = vpop.permute.xlu0 %1784
      %1786 = vrot.lane.b32.xlu0 %v1724, 112
      %v1787 = vpop.permute.xlu0 %1786
      %1788 = vrot.lane.b32.xlu0 %v1725, 112
      %v1789 = vpop.permute.xlu0 %1788
      %1790 = vrot.lane.b32.xlu0 %v1726, 112
      %v1791 = vpop.permute.xlu0 %1790
      %1792 = vrot.lane.b32.xlu0 %v1727, 112
      %v1793 = vpop.permute.xlu0 %1792
      %1794 = vrot.lane.b32.xlu0 %v1728, 112
      %v1795 = vpop.permute.xlu0 %1794
      %1796 = vrot.lane.b32.xlu0 %v1729, 112
      %v1797 = vpop.permute.xlu0 %1796
      %1798 = vrot.lane.b32.xlu0 %v1730, 112
      %v1799 = vpop.permute.xlu0 %1798
      %1800 = vrot.lane.b32.xlu0 %v1731, 112
      %v1801 = vpop.permute.xlu0 %1800
      %1802 = vrot.lane.b32.xlu0 %v1732, 112
      %v1803 = vpop.permute.xlu0 %1802
      %1804 = vrot.lane.b32.xlu0 %v1733, 112
      %v1805 = vpop.permute.xlu0 %1804
      %1806 = vrot.lane.b32.xlu0 %v1734, 112
      %v1807 = vpop.permute.xlu0 %1806
      %1808 = vrot.lane.b32.xlu0 %v1735, 112
      %v1809 = vpop.permute.xlu0 %1808
      %1810 = vrot.lane.b32.xlu0 %v1736, 112
      %v1811 = vpop.permute.xlu0 %1810
      %1812 = vrot.lane.b32.xlu0 %v1737, 112
      %v1813 = vpop.permute.xlu0 %1812
      %1814 = vrot.lane.b32.xlu0 %v1738, 112
      %v1815 = vpop.permute.xlu0 %1814
      %1816 = vrot.lane.b32.xlu0 %v1739, 112
      %v1817 = vpop.permute.xlu0 %1816
      %1818 = vrot.lane.b32.xlu0 %v1740, 112
      %v1819 = vpop.permute.xlu0 %1818
      %1820 = vrot.lane.b32.xlu0 %v1741, 112
      %v1821 = vpop.permute.xlu0 %1820
      %1822 = vrot.lane.b32.xlu0 %v1742, 112
      %v1823 = vpop.permute.xlu0 %1822
      %1824 = vrot.lane.b32.xlu0 %v1743, 112
      %v1825 = vpop.permute.xlu0 %1824
      %1826 = vrot.lane.b32.xlu0 %v1744, 112
      %v1827 = vpop.permute.xlu0 %1826
      %1828 = vrot.lane.b32.xlu0 %v1745, 112
      %v1829 = vpop.permute.xlu0 %1828
      %1830 = vrot.lane.b32.xlu0 %v1746, 112
      %v1831 = vpop.permute.xlu0 %1830
      %1832 = vrot.lane.b32.xlu0 %v1747, 112
      %v1833 = vpop.permute.xlu0 %1832
      %1834 = vrot.lane.b32.xlu0 %v1748, 112
      %v1835 = vpop.permute.xlu0 %1834
      %1836 = vrot.lane.b32.xlu0 %v1749, 112
      %v1837 = vpop.permute.xlu0 %1836
      %1838 = vrot.lane.b32.xlu0 %v1750, 112
      %v1839 = vpop.permute.xlu0 %1838
      %1840 = vrot.lane.b32.xlu0 %v1751, 112
      %v1841 = vpop.permute.xlu0 %1840
      %1842 = vrot.lane.b32.xlu0 %v1752, 112
      %v1843 = vpop.permute.xlu0 %1842
      %1844 = vrot.lane.b32.xlu0 %v1753, 112
      %v1845 = vpop.permute.xlu0 %1844
      %1846 = vrot.lane.b32.xlu0 %v1754, 112
      %v1847 = vpop.permute.xlu0 %1846
      %1848 = vrot.lane.b32.xlu0 %v1755, 112
      %v1849 = vpop.permute.xlu0 %1848
      %1850 = vrot.lane.b32.xlu0 %v1756, 112
      %v1851 = vpop.permute.xlu0 %1850
      %1852 = vrot.lane.b32.xlu0 %v1757, 112
      %v1853 = vpop.permute.xlu0 %1852
      %v1854 = vsel %vm1415, %v1759, %v1761
      %v1855 = vsel %vm1415, %v1763, %v1765
      %v1856 = vsel %vm1415, %v1767, %v1769
      %v1857 = vsel %vm1415, %v1771, %v1773
      %v1858 = vsel %vm1415, %v1775, %v1777
      %v1859 = vsel %vm1415, %v1779, %v1781
      %v1860 = vsel %vm1415, %v1783, %v1785
      %v1861 = vsel %vm1415, %v1787, %v1789
      %v1862 = vsel %vm1415, %v1791, %v1793
      %v1863 = vsel %vm1415, %v1795, %v1797
      %v1864 = vsel %vm1415, %v1799, %v1801
      %v1865 = vsel %vm1415, %v1803, %v1805
      %v1866 = vsel %vm1415, %v1807, %v1809
      %v1867 = vsel %vm1415, %v1811, %v1813
      %v1868 = vsel %vm1415, %v1815, %v1817
      %v1869 = vsel %vm1415, %v1819, %v1821
      %v1870 = vsel %vm1415, %v1823, %v1825
      %v1871 = vsel %vm1415, %v1827, %v1829
      %v1872 = vsel %vm1415, %v1831, %v1833
      %v1873 = vsel %vm1415, %v1835, %v1837
      %v1874 = vsel %vm1415, %v1839, %v1841
      %v1875 = vsel %vm1415, %v1843, %v1845
      %v1876 = vsel %vm1415, %v1847, %v1849
      %v1877 = vsel %vm1415, %v1851, %v1853
      %1902 = vmatprep.subr.bf16.mxu0 0
      %1903 = vmatpush1.bf16.msra.mxu0 %v1854
      %1904 = vmatprep.subr.bf16.mxu0 0
      %1905 = vmatpush1.bf16.msra.mxu0 %v1855
      %1906 = vmatprep.subr.bf16.mxu0 0
      %1907 = vmatpush1.bf16.msra.mxu0 %v1856
      %1908 = vmatprep.subr.bf16.mxu0 0
      %1909 = vmatpush1.bf16.msra.mxu0 %v1857
      %1910 = vmatprep.subr.bf16.mxu0 0
      %1911 = vmatpush1.bf16.msra.mxu0 %v1858
      %1912 = vmatprep.subr.bf16.mxu0 0
      %1913 = vmatpush1.bf16.msra.mxu0 %v1859
      %1914 = vmatprep.subr.bf16.mxu0 0
      %1915 = vmatpush1.bf16.msra.mxu0 %v1860
      %1916 = vmatprep.subr.bf16.mxu0 0
      %1917 = vmatpush1.bf16.msra.mxu0 %v1861
      %1918 = vmatprep.subr.bf16.mxu0 0
      %1919 = vmatpush1.bf16.msra.mxu0 %v1862
      %1920 = vmatprep.subr.bf16.mxu0 0
      %1921 = vmatpush1.bf16.msra.mxu0 %v1863
      %1922 = vmatprep.subr.bf16.mxu0 0
      %1923 = vmatpush1.bf16.msra.mxu0 %v1864
      %1924 = vmatprep.subr.bf16.mxu0 0
      %1925 = vmatpush1.bf16.msra.mxu0 %v1865
      %1926 = vmatprep.subr.bf16.mxu0 0
      %1927 = vmatpush1.bf16.msra.mxu0 %v1866
      %1928 = vmatprep.subr.bf16.mxu0 0
      %1929 = vmatpush1.bf16.msra.mxu0 %v1867
      %1930 = vmatprep.subr.bf16.mxu0 0
      %1931 = vmatpush1.bf16.msra.mxu0 %v1868
      %1932 = vmatprep.subr.bf16.mxu0 0
      %1933 = vmatpush1.bf16.msra.mxu0 %v1869
      %1934 = vmatprep.mubr.bf16.mxu0 %v1116
      %1935 = vmatmul.mubr.bf16.gmra.mrb[0].mxu0 %v1115
      %v1936 = vpop.f32.mrb[0].mxu0
      %v1937 = vadd.f32 0.0, %v1936
      %v1938 = vpop.f32.mrb[0].mxu0
      %v1939 = vpop.f32.mrb[0].mxu0
      %v1940 = vadd.f32 0.0, %v1939
      %v1941 = vpop.f32.mrb[0].mxu0
      %1942 = vmatprep.mubr.bf16.mxu0 %v1119
      %1943 = vmatmul.mubr.bf16.gmra.mrb[0].mxu0 %v1118
      %v1944 = vpop.f32.mrb[0].mxu0
      %v1945 = vadd.f32 0.0, %v1944
      %v1946 = vpop.f32.mrb[0].mxu0
      %v1947 = vpop.f32.mrb[0].mxu0
      %v1948 = vadd.f32 0.0, %v1947
      %v1949 = vpop.f32.mrb[0].mxu0
      %1950 = vdwg.mxu0
      %1951 = vmatprep.subr.bf16.mxu0 0
      %1952 = vmatpush1.bf16.msra.mxu0 %v1870
      %1953 = vmatprep.subr.bf16.mxu0 0
      %1954 = vmatpush1.bf16.msra.mxu0 %v1871
      %1955 = vmatprep.subr.bf16.mxu0 0
      %1956 = vmatpush1.bf16.msra.mxu0 %v1872
      %1957 = vmatprep.subr.bf16.mxu0 0
      %1958 = vmatpush1.bf16.msra.mxu0 %v1873
      %1959 = vmatprep.subr.bf16.mxu0 0
      %1960 = vmatpush1.bf16.msra.mxu0 %v1874
      %1961 = vmatprep.subr.bf16.mxu0 0
      %1962 = vmatpush1.bf16.msra.mxu0 %v1875
      %1963 = vmatprep.subr.bf16.mxu0 0
      %1964 = vmatpush1.bf16.msra.mxu0 %v1876
      %1965 = vmatprep.subr.bf16.mxu0 0
      %1966 = vmatpush1.bf16.msra.mxu0 %v1877
      %1967 = vmatprep.subr.bf16.mxu0 0
      %1968 = vmatpush1.bf16.msra.mxu0 0
      %1969 = vmatprep.subr.bf16.mxu0 0
      %1970 = vmatpush1.bf16.msra.mxu0 0
      %1971 = vmatprep.subr.bf16.mxu0 0
      %1972 = vmatpush1.bf16.msra.mxu0 0
      %1973 = vmatprep.subr.bf16.mxu0 0
      %1974 = vmatpush1.bf16.msra.mxu0 0
      %1975 = vmatprep.subr.bf16.mxu0 0
      %1976 = vmatpush1.bf16.msra.mxu0 0
      %1977 = vmatprep.subr.bf16.mxu0 0
      %1978 = vmatpush1.bf16.msra.mxu0 0
      %1979 = vmatprep.subr.bf16.mxu0 0
      %1980 = vmatpush1.bf16.msra.mxu0 0
      %1981 = vmatprep.subr.bf16.mxu0 0
      %1982 = vmatpush1.bf16.msra.mxu0 0
      %1983 = vmatprep.mubr.bf16.mxu0 0
      %1984 = vmatmul.mubr.bf16.gmra.mrb[0].mxu0 %v1117
      %v1985 = vpop.f32.mrb[0].mxu0
      %v1986 = vadd.f32 %v1937, %v1985
      %v1987 = vpop.f32.mrb[0].mxu0
      %v1988 = vpop.f32.mrb[0].mxu0
      %v1989 = vadd.f32 %v1940, %v1988
      %v1990 = vpop.f32.mrb[0].mxu0
      %1991 = vmatprep.mubr.bf16.mxu0 0
      %1992 = vmatmul.mubr.bf16.gmra.mrb[0].mxu0 %v1120
      %v1993 = vpop.f32.mrb[0].mxu0
      %v1994 = vadd.f32 %v1945, %v1993
      %v1995 = vpop.f32.mrb[0].mxu0
      %v1996 = vpop.f32.mrb[0].mxu0
      %v1997 = vadd.f32 %v1948, %v1996
      %v1998 = vpop.f32.mrb[0].mxu0
      %1999 = vdwg.mxu0
      %v2000 = vadd.f32 %v1562, %v1986
      %v2001 = vadd.f32 %v1563, %v1989
      %v2002 = vadd.f32 %v1564, %v1994
      %v2003 = vadd.f32 %v1565, %v1997
      %v2012 = vunpack.c.l.b16 %v1087
      %v2013 = vunpack.c.h.b16 %v1087
      %v2014 = vunpack.c.l.b16 %v1088
      %v2015 = vunpack.c.l.b16 %v1089
      %v2016 = vunpack.c.h.b16 %v1089
      %v2017 = vunpack.c.l.b16 %v1090
      %v2018 = vunpack.c.l.b16 %v1091
      %v2019 = vunpack.c.h.b16 %v1091
      %v2020 = vunpack.c.l.b16 %v1092
      %v2021 = vunpack.c.l.b16 %v1093
      %v2022 = vunpack.c.h.b16 %v1093
      %v2023 = vunpack.c.l.b16 %v1094
      %v2024 = vpack.c.b16 %v2015, %v2012
      %v2025 = vpack.c.b16 %v2016, %v2013
      %v2026 = vpack.c.b16 %v2017, %v2014
      %v2027 = vpack.c.b16 %v2021, %v2018
      %v2028 = vpack.c.b16 %v2022, %v2019
      %v2029 = vpack.c.b16 %v2023, %v2020
      %2036 = vmatprep.subr.bf16.mxu0 0
      %2037 = vmatpush1.bf16.msra.mxu0 %v1416
      %2038 = vmatprep.subr.bf16.mxu0 0
      %2039 = vmatpush1.bf16.msra.mxu0 %v1417
      %2040 = vmatprep.subr.bf16.mxu0 0
      %2041 = vmatpush1.bf16.msra.mxu0 %v1418
      %2042 = vmatprep.subr.bf16.mxu0 0
      %2043 = vmatpush1.bf16.msra.mxu0 %v1419
      %2044 = vmatprep.subr.bf16.mxu0 0
      %2045 = vmatpush1.bf16.msra.mxu0 %v1420
      %2046 = vmatprep.subr.bf16.mxu0 0
      %2047 = vmatpush1.bf16.msra.mxu0 %v1421
      %2048 = vmatprep.subr.bf16.mxu0 0
      %2049 = vmatpush1.bf16.msra.mxu0 %v1422
      %2050 = vmatprep.subr.bf16.mxu0 0
      %2051 = vmatpush1.bf16.msra.mxu0 %v1423
      %2052 = vmatprep.subr.bf16.mxu0 0
      %2053 = vmatpush1.bf16.msra.mxu0 %v1424
      %2054 = vmatprep.subr.bf16.mxu0 0
      %2055 = vmatpush1.bf16.msra.mxu0 %v1425
      %2056 = vmatprep.subr.bf16.mxu0 0
      %2057 = vmatpush1.bf16.msra.mxu0 %v1426
      %2058 = vmatprep.subr.bf16.mxu0 0
      %2059 = vmatpush1.bf16.msra.mxu0 %v1427
      %2060 = vmatprep.subr.bf16.mxu0 0
      %2061 = vmatpush1.bf16.msra.mxu0 %v1428
      %2062 = vmatprep.subr.bf16.mxu0 0
      %2063 = vmatpush1.bf16.msra.mxu0 %v1429
      %2064 = vmatprep.subr.bf16.mxu0 0
      %2065 = vmatpush1.bf16.msra.mxu0 %v1430
      %2066 = vmatprep.subr.bf16.mxu0 0
      %2067 = vmatpush1.bf16.msra.mxu0 %v1431
      %2068 = vmatprep.mubr.bf16.mxu0 %v2025
      %2069 = vmatmul.mubr.bf16.gmra.mrb[0].mxu0 %v2024
      %v2070 = vpop.f32.mrb[0].mxu0
      %v2071 = vadd.f32 0.0, %v2070
      %v2072 = vpop.f32.mrb[0].mxu0
      %v2073 = vpop.f32.mrb[0].mxu0
      %v2074 = vadd.f32 0.0, %v2073
      %v2075 = vpop.f32.mrb[0].mxu0
      %2076 = vmatprep.mubr.bf16.mxu0 %v2028
      %2077 = vmatmul.mubr.bf16.gmra.mrb[0].mxu0 %v2027
      %v2078 = vpop.f32.mrb[0].mxu0
      %v2079 = vadd.f32 0.0, %v2078
      %v2080 = vpop.f32.mrb[0].mxu0
      %v2081 = vpop.f32.mrb[0].mxu0
      %v2082 = vadd.f32 0.0, %v2081
      %v2083 = vpop.f32.mrb[0].mxu0
      %2084 = vdwg.mxu0
      %2085 = vmatprep.subr.bf16.mxu0 0
      %2086 = vmatpush1.bf16.msra.mxu0 %v1432
      %2087 = vmatprep.subr.bf16.mxu0 0
      %2088 = vmatpush1.bf16.msra.mxu0 %v1433
      %2089 = vmatprep.subr.bf16.mxu0 0
      %2090 = vmatpush1.bf16.msra.mxu0 %v1434
      %2091 = vmatprep.subr.bf16.mxu0 0
      %2092 = vmatpush1.bf16.msra.mxu0 %v1435
      %2093 = vmatprep.subr.bf16.mxu0 0
      %2094 = vmatpush1.bf16.msra.mxu0 %v1436
      %2095 = vmatprep.subr.bf16.mxu0 0
      %2096 = vmatpush1.bf16.msra.mxu0 %v1437
      %2097 = vmatprep.subr.bf16.mxu0 0
      %2098 = vmatpush1.bf16.msra.mxu0 %v1438
      %2099 = vmatprep.subr.bf16.mxu0 0
      %2100 = vmatpush1.bf16.msra.mxu0 %v1439
      %2101 = vmatprep.subr.bf16.mxu0 0
      %2102 = vmatpush1.bf16.msra.mxu0 0
      %2103 = vmatprep.subr.bf16.mxu0 0
      %2104 = vmatpush1.bf16.msra.mxu0 0
      %2105 = vmatprep.subr.bf16.mxu0 0
      %2106 = vmatpush1.bf16.msra.mxu0 0
      %2107 = vmatprep.subr.bf16.mxu0 0
      %2108 = vmatpush1.bf16.msra.mxu0 0
      %2109 = vmatprep.subr.bf16.mxu0 0
      %2110 = vmatpush1.bf16.msra.mxu0 0
      %2111 = vmatprep.subr.bf16.mxu0 0
      %2112 = vmatpush1.bf16.msra.mxu0 0
      %2113 = vmatprep.subr.bf16.mxu0 0
      %2114 = vmatpush1.bf16.msra.mxu0 0
      %2115 = vmatprep.subr.bf16.mxu0 0
      %2116 = vmatpush1.bf16.msra.mxu0 0
      %2117 = vmatprep.mubr.bf16.mxu0 0
      %2118 = vmatmul.mubr.bf16.gmra.mrb[0].mxu0 %v2026
      %v2119 = vpop.f32.mrb[0].mxu0
      %v2120 = vadd.f32 %v2071, %v2119
      %v2121 = vpop.f32.mrb[0].mxu0
      %v2122 = vpop.f32.mrb[0].mxu0
      %v2123 = vadd.f32 %v2074, %v2122
      %v2124 = vpop.f32.mrb[0].mxu0
      %2125 = vmatprep.mubr.bf16.mxu0 0
      %2126 = vmatmul.mubr.bf16.gmra.mrb[0].mxu0 %v2029
      %v2127 = vpop.f32.mrb[0].mxu0
      %v2128 = vadd.f32 %v2079, %v2127
      %v2129 = vpop.f32.mrb[0].mxu0
      %v2130 = vpop.f32.mrb[0].mxu0
      %v2131 = vadd.f32 %v2082, %v2130
      %v2132 = vpop.f32.mrb[0].mxu0
      %2133 = vdwg.mxu0
      %v2134 = vadd.f32 %v2000, %v2120
      %v2135 = vadd.f32 %v2001, %v2123
      %v2136 = vadd.f32 %v2002, %v2128
      %v2137 = vadd.f32 %v2003, %v2131
      %s2138 = scalar_lea.vmem %s2, 96
      %v2139 = vld [vmem:[%s2138] sm:$0xff]
      %v2140 = vld [vmem:[%s2138 + $0x8] sm:$0xf]
      %v2141 = vld [vmem:[%s2138 + $0xc] sm:$0xff]
      %v2142 = vld [vmem:[%s2138 + $0x14] sm:$0xf]
      %v2143 = vld [vmem:[%s2138 + $0x18] sm:$0xff]
      %v2144 = vld [vmem:[%s2138 + $0x20] sm:$0xf]
      %v2145 = vld [vmem:[%s2138 + $0x24] sm:$0xff]
      %v2146 = vld [vmem:[%s2138 + $0x2c] sm:$0xf]
      %s2147 = scalar_lea.vmem %s3, 96
      %v2148 = vld [vmem:[%s2147] sm:$0xff]
      %v2149 = vld [vmem:[%s2147 + $0x8] sm:$0xf]
      %v2150 = vld [vmem:[%s2147 + $0xc] sm:$0xff]
      %v2151 = vld [vmem:[%s2147 + $0x14] sm:$0xf]
      %v2152 = vld [vmem:[%s2147 + $0x18] sm:$0xff]
      %v2153 = vld [vmem:[%s2147 + $0x20] sm:$0xf]
      %v2154 = vld [vmem:[%s2147 + $0x24] sm:$0xff]
      %v2155 = vld [vmem:[%s2147 + $0x2c] sm:$0xf]
      %v2164 = vunpack.c.l.b16 %v2139
      %v2165 = vunpack.c.h.b16 %v2139
      %v2166 = vunpack.c.l.b16 %v2140
      %v2167 = vunpack.c.l.b16 %v2141
      %v2168 = vunpack.c.h.b16 %v2141
      %v2169 = vunpack.c.l.b16 %v2142
      %v2170 = vunpack.c.l.b16 %v2143
      %v2171 = vunpack.c.h.b16 %v2143
      %v2172 = vunpack.c.l.b16 %v2144
      %v2173 = vunpack.c.l.b16 %v2145
      %v2174 = vunpack.c.h.b16 %v2145
      %v2175 = vunpack.c.l.b16 %v2146
      %v2176 = vpack.c.b16 %v2167, %v2164
      %v2177 = vpack.c.b16 %v2168, %v2165
      %v2178 = vpack.c.b16 %v2169, %v2166
      %v2179 = vpack.c.b16 %v2173, %v2170
      %v2180 = vpack.c.b16 %v2174, %v2171
      %v2181 = vpack.c.b16 %v2175, %v2172
      %2188 = vrot.lane.b32.xlu0 %v1271, 96
      %v2189 = vpop.permute.xlu0 %2188
      %2190 = vrot.lane.b32.xlu0 %v1272, 96
      %v2191 = vpop.permute.xlu0 %2190
      %2192 = vrot.lane.b32.xlu0 %v1273, 96
      %v2193 = vpop.permute.xlu0 %2192
      %2194 = vrot.lane.b32.xlu0 %v1274, 96
      %v2195 = vpop.permute.xlu0 %2194
      %2196 = vrot.lane.b32.xlu0 %v1275, 96
      %v2197 = vpop.permute.xlu0 %2196
      %2198 = vrot.lane.b32.xlu0 %v1276, 96
      %v2199 = vpop.permute.xlu0 %2198
      %2200 = vrot.lane.b32.xlu0 %v1277, 96
      %v2201 = vpop.permute.xlu0 %2200
      %2202 = vrot.lane.b32.xlu0 %v1278, 96
      %v2203 = vpop.permute.xlu0 %2202
      %2204 = vrot.lane.b32.xlu0 %v1279, 96
      %v2205 = vpop.permute.xlu0 %2204
      %2206 = vrot.lane.b32.xlu0 %v1280, 96
      %v2207 = vpop.permute.xlu0 %2206
      %2208 = vrot.lane.b32.xlu0 %v1281, 96
      %v2209 = vpop.permute.xlu0 %2208
      %2210 = vrot.lane.b32.xlu0 %v1282, 96
      %v2211 = vpop.permute.xlu0 %2210
      %2212 = vrot.lane.b32.xlu0 %v1283, 96
      %v2213 = vpop.permute.xlu0 %2212
      %2214 = vrot.lane.b32.xlu0 %v1284, 96
      %v2215 = vpop.permute.xlu0 %2214
      %2216 = vrot.lane.b32.xlu0 %v1285, 96
      %v2217 = vpop.permute.xlu0 %2216
      %2218 = vrot.lane.b32.xlu0 %v1286, 96
      %v2219 = vpop.permute.xlu0 %2218
      %2220 = vrot.lane.b32.xlu0 %v1287, 96
      %v2221 = vpop.permute.xlu0 %2220
      %2222 = vrot.lane.b32.xlu0 %v1288, 96
      %v2223 = vpop.permute.xlu0 %2222
      %2224 = vrot.lane.b32.xlu0 %v1289, 96
      %v2225 = vpop.permute.xlu0 %2224
      %2226 = vrot.lane.b32.xlu0 %v1290, 96
      %v2227 = vpop.permute.xlu0 %2226
      %2228 = vrot.lane.b32.xlu0 %v1291, 96
      %v2229 = vpop.permute.xlu0 %2228
      %2230 = vrot.lane.b32.xlu0 %v1292, 96
      %v2231 = vpop.permute.xlu0 %2230
      %2232 = vrot.lane.b32.xlu0 %v1293, 96
      %v2233 = vpop.permute.xlu0 %2232
      %2234 = vrot.lane.b32.xlu0 %v1294, 96
      %v2235 = vpop.permute.xlu0 %2234
      %2236 = vrot.lane.b32.xlu0 %v1295, 96
      %v2237 = vpop.permute.xlu0 %2236
      %2238 = vrot.lane.b32.xlu0 %v1296, 96
      %v2239 = vpop.permute.xlu0 %2238
      %2240 = vrot.lane.b32.xlu0 %v1297, 96
      %v2241 = vpop.permute.xlu0 %2240
      %2242 = vrot.lane.b32.xlu0 %v1298, 96
      %v2243 = vpop.permute.xlu0 %2242
      %2244 = vrot.lane.b32.xlu0 %v1299, 96
      %v2245 = vpop.permute.xlu0 %2244
      %2246 = vrot.lane.b32.xlu0 %v1300, 96
      %v2247 = vpop.permute.xlu0 %2246
      %2248 = vrot.lane.b32.xlu0 %v1301, 96
      %v2249 = vpop.permute.xlu0 %2248
      %2250 = vrot.lane.b32.xlu0 %v1302, 96
      %v2251 = vpop.permute.xlu0 %2250
      %2252 = vrot.lane.b32.xlu0 %v1303, 96
      %v2253 = vpop.permute.xlu0 %2252
      %2254 = vrot.lane.b32.xlu0 %v1304, 96
      %v2255 = vpop.permute.xlu0 %2254
      %2256 = vrot.lane.b32.xlu0 %v1305, 96
      %v2257 = vpop.permute.xlu0 %2256
      %2258 = vrot.lane.b32.xlu0 %v1306, 96
      %v2259 = vpop.permute.xlu0 %2258
      %2260 = vrot.lane.b32.xlu0 %v1307, 96
      %v2261 = vpop.permute.xlu0 %2260
      %2262 = vrot.lane.b32.xlu0 %v1308, 96
      %v2263 = vpop.permute.xlu0 %2262
      %2264 = vrot.lane.b32.xlu0 %v1309, 96
      %v2265 = vpop.permute.xlu0 %2264
      %2266 = vrot.lane.b32.xlu0 %v1310, 96
      %v2267 = vpop.permute.xlu0 %2266
      %2268 = vrot.lane.b32.xlu0 %v1311, 96
      %v2269 = vpop.permute.xlu0 %2268
      %2270 = vrot.lane.b32.xlu0 %v1312, 96
      %v2271 = vpop.permute.xlu0 %2270
      %2272 = vrot.lane.b32.xlu0 %v1313, 96
      %v2273 = vpop.permute.xlu0 %2272
      %2274 = vrot.lane.b32.xlu0 %v1314, 96
      %v2275 = vpop.permute.xlu0 %2274
      %2276 = vrot.lane.b32.xlu0 %v1315, 96
      %v2277 = vpop.permute.xlu0 %2276
      %2278 = vrot.lane.b32.xlu0 %v1316, 96
      %v2279 = vpop.permute.xlu0 %2278
      %2280 = vrot.lane.b32.xlu0 %v1317, 96
      %v2281 = vpop.permute.xlu0 %2280
      %2282 = vrot.lane.b32.xlu0 %v1318, 96
      %v2283 = vpop.permute.xlu0 %2282
      %vm2284 = vcmask 785408
      %v2285 = vsel %vm2284, %v2189, %v2191
      %v2286 = vsel %vm2284, %v2193, %v2195
      %v2287 = vsel %vm2284, %v2197, %v2199
      %v2288 = vsel %vm2284, %v2201, %v2203
      %v2289 = vsel %vm2284, %v2205, %v2207
      %v2290 = vsel %vm2284, %v2209, %v2211
      %v2291 = vsel %vm2284, %v2213, %v2215
      %v2292 = vsel %vm2284, %v2217, %v2219
      %v2293 = vsel %vm2284, %v2221, %v2223
      %v2294 = vsel %vm2284, %v2225, %v2227
      %v2295 = vsel %vm2284, %v2229, %v2231
      %v2296 = vsel %vm2284, %v2233, %v2235
      %v2297 = vsel %vm2284, %v2237, %v2239
      %v2298 = vsel %vm2284, %v2241, %v2243
      %v2299 = vsel %vm2284, %v2245, %v2247
      %v2300 = vsel %vm2284, %v2249, %v2251
      %v2301 = vsel %vm2284, %v2253, %v2255
      %v2302 = vsel %vm2284, %v2257, %v2259
      %v2303 = vsel %vm2284, %v2261, %v2263
      %v2304 = vsel %vm2284, %v2265, %v2267
      %v2305 = vsel %vm2284, %v2269, %v2271
      %v2306 = vsel %vm2284, %v2273, %v2275
      %v2307 = vsel %vm2284, %v2277, %v2279
      %v2308 = vsel %vm2284, %v2281, %v2283
      %2333 = vmatprep.subr.bf16.mxu0 0
      %2334 = vmatpush1.bf16.msra.mxu0 %v2285
      %2335 = vmatprep.subr.bf16.mxu0 0
      %2336 = vmatpush1.bf16.msra.mxu0 %v2286
      %2337 = vmatprep.subr.bf16.mxu0 0
      %2338 = vmatpush1.bf16.msra.mxu0 %v2287
      %2339 = vmatprep.subr.bf16.mxu0 0
      %2340 = vmatpush1.bf16.msra.mxu0 %v2288
      %2341 = vmatprep.subr.bf16.mxu0 0
      %2342 = vmatpush1.bf16.msra.mxu0 %v2289
      %2343 = vmatprep.subr.bf16.mxu0 0
      %2344 = vmatpush1.bf16.msra.mxu0 %v2290
      %2345 = vmatprep.subr.bf16.mxu0 0
      %2346 = vmatpush1.bf16.msra.mxu0 %v2291
      %2347 = vmatprep.subr.bf16.mxu0 0
      %2348 = vmatpush1.bf16.msra.mxu0 %v2292
      %2349 = vmatprep.subr.bf16.mxu0 0
      %2350 = vmatpush1.bf16.msra.mxu0 %v2293
      %2351 = vmatprep.subr.bf16.mxu0 0
      %2352 = vmatpush1.bf16.msra.mxu0 %v2294
      %2353 = vmatprep.subr.bf16.mxu0 0
      %2354 = vmatpush1.bf16.msra.mxu0 %v2295
      %2355 = vmatprep.subr.bf16.mxu0 0
      %2356 = vmatpush1.bf16.msra.mxu0 %v2296
      %2357 = vmatprep.subr.bf16.mxu0 0
      %2358 = vmatpush1.bf16.msra.mxu0 %v2297
      %2359 = vmatprep.subr.bf16.mxu0 0
      %2360 = vmatpush1.bf16.msra.mxu0 %v2298
      %2361 = vmatprep.subr.bf16.mxu0 0
      %2362 = vmatpush1.bf16.msra.mxu0 %v2299
      %2363 = vmatprep.subr.bf16.mxu0 0
      %2364 = vmatpush1.bf16.msra.mxu0 %v2300
      %2365 = vmatprep.mubr.bf16.mxu0 %v2177
      %2366 = vmatmul.mubr.bf16.gmra.mrb[0].mxu0 %v2176
      %v2367 = vpop.f32.mrb[0].mxu0
      %v2368 = vadd.f32 0.0, %v2367
      %v2369 = vpop.f32.mrb[0].mxu0
      %v2370 = vpop.f32.mrb[0].mxu0
      %v2371 = vadd.f32 0.0, %v2370
      %v2372 = vpop.f32.mrb[0].mxu0
      %2373 = vmatprep.mubr.bf16.mxu0 %v2180
      %2374 = vmatmul.mubr.bf16.gmra.mrb[0].mxu0 %v2179
      %v2375 = vpop.f32.mrb[0].mxu0
      %v2376 = vadd.f32 0.0, %v2375
      %v2377 = vpop.f32.mrb[0].mxu0
      %v2378 = vpop.f32.mrb[0].mxu0
      %v2379 = vadd.f32 0.0, %v2378
      %v2380 = vpop.f32.mrb[0].mxu0
      %2381 = vdwg.mxu0
      %2382 = vmatprep.subr.bf16.mxu0 0
      %2383 = vmatpush1.bf16.msra.mxu0 %v2301
      %2384 = vmatprep.subr.bf16.mxu0 0
      %2385 = vmatpush1.bf16.msra.mxu0 %v2302
      %2386 = vmatprep.subr.bf16.mxu0 0
      %2387 = vmatpush1.bf16.msra.mxu0 %v2303
      %2388 = vmatprep.subr.bf16.mxu0 0
      %2389 = vmatpush1.bf16.msra.mxu0 %v2304
      %2390 = vmatprep.subr.bf16.mxu0 0
      %2391 = vmatpush1.bf16.msra.mxu0 %v2305
      %2392 = vmatprep.subr.bf16.mxu0 0
      %2393 = vmatpush1.bf16.msra.mxu0 %v2306
      %2394 = vmatprep.subr.bf16.mxu0 0
      %2395 = vmatpush1.bf16.msra.mxu0 %v2307
      %2396 = vmatprep.subr.bf16.mxu0 0
      %2397 = vmatpush1.bf16.msra.mxu0 %v2308
      %2398 = vmatprep.subr.bf16.mxu0 0
      %2399 = vmatpush1.bf16.msra.mxu0 0
      %2400 = vmatprep.subr.bf16.mxu0 0
      %2401 = vmatpush1.bf16.msra.mxu0 0
      %2402 = vmatprep.subr.bf16.mxu0 0
      %2403 = vmatpush1.bf16.msra.mxu0 0
      %2404 = vmatprep.subr.bf16.mxu0 0
      %2405 = vmatpush1.bf16.msra.mxu0 0
      %2406 = vmatprep.subr.bf16.mxu0 0
      %2407 = vmatpush1.bf16.msra.mxu0 0
      %2408 = vmatprep.subr.bf16.mxu0 0
      %2409 = vmatpush1.bf16.msra.mxu0 0
      %2410 = vmatprep.subr.bf16.mxu0 0
      %2411 = vmatpush1.bf16.msra.mxu0 0
      %2412 = vmatprep.subr.bf16.mxu0 0
      %2413 = vmatpush1.bf16.msra.mxu0 0
      %2414 = vmatprep.mubr.bf16.mxu0 0
      %2415 = vmatmul.mubr.bf16.gmra.mrb[0].mxu0 %v2178
      %v2416 = vpop.f32.mrb[0].mxu0
      %v2417 = vadd.f32 %v2368, %v2416
      %v2418 = vpop.f32.mrb[0].mxu0
      %v2419 = vpop.f32.mrb[0].mxu0
      %v2420 = vadd.f32 %v2371, %v2419
      %v2421 = vpop.f32.mrb[0].mxu0
      %2422 = vmatprep.mubr.bf16.mxu0 0
      %2423 = vmatmul.mubr.bf16.gmra.mrb[0].mxu0 %v2181
      %v2424 = vpop.f32.mrb[0].mxu0
      %v2425 = vadd.f32 %v2376, %v2424
      %v2426 = vpop.f32.mrb[0].mxu0
      %v2427 = vpop.f32.mrb[0].mxu0
      %v2428 = vadd.f32 %v2379, %v2427
      %v2429 = vpop.f32.mrb[0].mxu0
      %2430 = vdwg.mxu0
      %v2431 = vadd.f32 %v2134, %v2417
      %v2432 = vadd.f32 %v2135, %v2420
      %v2433 = vadd.f32 %v2136, %v2425
      %v2434 = vadd.f32 %v2137, %v2428
      %2435 = vrot.lane.b32.xlu0 %v1710, 96
      %v2436 = vpop.permute.xlu0 %2435
      %2437 = vrot.lane.b32.xlu0 %v1711, 96
      %v2438 = vpop.permute.xlu0 %2437
      %2439 = vrot.lane.b32.xlu0 %v1712, 96
      %v2440 = vpop.permute.xlu0 %2439
      %2441 = vrot.lane.b32.xlu0 %v1713, 96
      %v2442 = vpop.permute.xlu0 %2441
      %2443 = vrot.lane.b32.xlu0 %v1714, 96
      %v2444 = vpop.permute.xlu0 %2443
      %2445 = vrot.lane.b32.xlu0 %v1715, 96
      %v2446 = vpop.permute.xlu0 %2445
      %2447 = vrot.lane.b32.xlu0 %v1716, 96
      %v2448 = vpop.permute.xlu0 %2447
      %2449 = vrot.lane.b32.xlu0 %v1717, 96
      %v2450 = vpop.permute.xlu0 %2449
      %2451 = vrot.lane.b32.xlu0 %v1718, 96
      %v2452 = vpop.permute.xlu0 %2451
      %2453 = vrot.lane.b32.xlu0 %v1719, 96
      %v2454 = vpop.permute.xlu0 %2453
      %2455 = vrot.lane.b32.xlu0 %v1720, 96
      %v2456 = vpop.permute.xlu0 %2455
      %2457 = vrot.lane.b32.xlu0 %v1721, 96
      %v2458 = vpop.permute.xlu0 %2457
      %2459 = vrot.lane.b32.xlu0 %v1722, 96
      %v2460 = vpop.permute.xlu0 %2459
      %2461 = vrot.lane.b32.xlu0 %v1723, 96
      %v2462 = vpop.permute.xlu0 %2461
      %2463 = vrot.lane.b32.xlu0 %v1724, 96
      %v2464 = vpop.permute.xlu0 %2463
      %2465 = vrot.lane.b32.xlu0 %v1725, 96
      %v2466 = vpop.permute.xlu0 %2465
      %2467 = vrot.lane.b32.xlu0 %v1726, 96
      %v2468 = vpop.permute.xlu0 %2467
      %2469 = vrot.lane.b32.xlu0 %v1727, 96
      %v2470 = vpop.permute.xlu0 %2469
      %2471 = vrot.lane.b32.xlu0 %v1728, 96
      %v2472 = vpop.permute.xlu0 %2471
      %2473 = vrot.lane.b32.xlu0 %v1729, 96
      %v2474 = vpop.permute.xlu0 %2473
      %2475 = vrot.lane.b32.xlu0 %v1730, 96
      %v2476 = vpop.permute.xlu0 %2475
      %2477 = vrot.lane.b32.xlu0 %v1731, 96
      %v2478 = vpop.permute.xlu0 %2477
      %2479 = vrot.lane.b32.xlu0 %v1732, 96
      %v2480 = vpop.permute.xlu0 %2479
      %2481 = vrot.lane.b32.xlu0 %v1733, 96
      %v2482 = vpop.permute.xlu0 %2481
      %2483 = vrot.lane.b32.xlu0 %v1734, 96
      %v2484 = vpop.permute.xlu0 %2483
      %2485 = vrot.lane.b32.xlu0 %v1735, 96
      %v2486 = vpop.permute.xlu0 %2485
      %2487 = vrot.lane.b32.xlu0 %v1736, 96
      %v2488 = vpop.permute.xlu0 %2487
      %2489 = vrot.lane.b32.xlu0 %v1737, 96
      %v2490 = vpop.permute.xlu0 %2489
      %2491 = vrot.lane.b32.xlu0 %v1738, 96
      %v2492 = vpop.permute.xlu0 %2491
      %2493 = vrot.lane.b32.xlu0 %v1739, 96
      %v2494 = vpop.permute.xlu0 %2493
      %2495 = vrot.lane.b32.xlu0 %v1740, 96
      %v2496 = vpop.permute.xlu0 %2495
      %2497 = vrot.lane.b32.xlu0 %v1741, 96
      %v2498 = vpop.permute.xlu0 %2497
      %2499 = vrot.lane.b32.xlu0 %v1742, 96
      %v2500 = vpop.permute.xlu0 %2499
      %2501 = vrot.lane.b32.xlu0 %v1743, 96
      %v2502 = vpop.permute.xlu0 %2501
      %2503 = vrot.lane.b32.xlu0 %v1744, 96
      %v2504 = vpop.permute.xlu0 %2503
      %2505 = vrot.lane.b32.xlu0 %v1745, 96
      %v2506 = vpop.permute.xlu0 %2505
      %2507 = vrot.lane.b32.xlu0 %v1746, 96
      %v2508 = vpop.permute.xlu0 %2507
      %2509 = vrot.lane.b32.xlu0 %v1747, 96
      %v2510 = vpop.permute.xlu0 %2509
      %2511 = vrot.lane.b32.xlu0 %v1748, 96
      %v2512 = vpop.permute.xlu0 %2511
      %2513 = vrot.lane.b32.xlu0 %v1749, 96
      %v2514 = vpop.permute.xlu0 %2513
      %2515 = vrot.lane.b32.xlu0 %v1750, 96
      %v2516 = vpop.permute.xlu0 %2515
      %2517 = vrot.lane.b32.xlu0 %v1751, 96
      %v2518 = vpop.permute.xlu0 %2517
      %2519 = vrot.lane.b32.xlu0 %v1752, 96
      %v2520 = vpop.permute.xlu0 %2519
      %2521 = vrot.lane.b32.xlu0 %v1753, 96
      %v2522 = vpop.permute.xlu0 %2521
      %2523 = vrot.lane.b32.xlu0 %v1754, 96
      %v2524 = vpop.permute.xlu0 %2523
      %2525 = vrot.lane.b32.xlu0 %v1755, 96
      %v2526 = vpop.permute.xlu0 %2525
      %2527 = vrot.lane.b32.xlu0 %v1756, 96
      %v2528 = vpop.permute.xlu0 %2527
      %2529 = vrot.lane.b32.xlu0 %v1757, 96
      %v2530 = vpop.permute.xlu0 %2529
      %v2531 = vsel %vm2284, %v2436, %v2438
      %v2532 = vsel %vm2284, %v2440, %v2442
      %v2533 = vsel %vm2284, %v2444, %v2446
      %v2534 = vsel %vm2284, %v2448, %v2450
      %v2535 = vsel %vm2284, %v2452, %v2454
      %v2536 = vsel %vm2284, %v2456, %v2458
      %v2537 = vsel %vm2284, %v2460, %v2462
      %v2538 = vsel %vm2284, %v2464, %v2466
      %v2539 = vsel %vm2284, %v2468, %v2470
      %v2540 = vsel %vm2284, %v2472, %v2474
      %v2541 = vsel %vm2284, %v2476, %v2478
      %v2542 = vsel %vm2284, %v2480, %v2482
      %v2543 = vsel %vm2284, %v2484, %v2486
      %v2544 = vsel %vm2284, %v2488, %v2490
      %v2545 = vsel %vm2284, %v2492, %v2494
      %v2546 = vsel %vm2284, %v2496, %v2498
      %v2547 = vsel %vm2284, %v2500, %v2502
      %v2548 = vsel %vm2284, %v2504, %v2506
      %v2549 = vsel %vm2284, %v2508, %v2510
      %v2550 = vsel %vm2284, %v2512, %v2514
      %v2551 = vsel %vm2284, %v2516, %v2518
      %v2552 = vsel %vm2284, %v2520, %v2522
      %v2553 = vsel %vm2284, %v2524, %v2526
      %v2554 = vsel %vm2284, %v2528, %v2530
      %2579 = vmatprep.subr.bf16.mxu0 0
      %2580 = vmatpush1.bf16.msra.mxu0 %v2531
      %2581 = vmatprep.subr.bf16.mxu0 0
      %2582 = vmatpush1.bf16.msra.mxu0 %v2532
      %2583 = vmatprep.subr.bf16.mxu0 0
      %2584 = vmatpush1.bf16.msra.mxu0 %v2533
      %2585 = vmatprep.subr.bf16.mxu0 0
      %2586 = vmatpush1.bf16.msra.mxu0 %v2534
      %2587 = vmatprep.subr.bf16.mxu0 0
      %2588 = vmatpush1.bf16.msra.mxu0 %v2535
      %2589 = vmatprep.subr.bf16.mxu0 0
      %2590 = vmatpush1.bf16.msra.mxu0 %v2536
      %2591 = vmatprep.subr.bf16.mxu0 0
      %2592 = vmatpush1.bf16.msra.mxu0 %v2537
      %2593 = vmatprep.subr.bf16.mxu0 0
      %2594 = vmatpush1.bf16.msra.mxu0 %v2538
      %2595 = vmatprep.subr.bf16.mxu0 0
      %2596 = vmatpush1.bf16.msra.mxu0 %v2539
      %2597 = vmatprep.subr.bf16.mxu0 0
      %2598 = vmatpush1.bf16.msra.mxu0 %v2540
      %2599 = vmatprep.subr.bf16.mxu0 0
      %2600 = vmatpush1.bf16.msra.mxu0 %v2541
      %2601 = vmatprep.subr.bf16.mxu0 0
      %2602 = vmatpush1.bf16.msra.mxu0 %v2542
      %2603 = vmatprep.subr.bf16.mxu0 0
      %2604 = vmatpush1.bf16.msra.mxu0 %v2543
      %2605 = vmatprep.subr.bf16.mxu0 0
      %2606 = vmatpush1.bf16.msra.mxu0 %v2544
      %2607 = vmatprep.subr.bf16.mxu0 0
      %2608 = vmatpush1.bf16.msra.mxu0 %v2545
      %2609 = vmatprep.subr.bf16.mxu0 0
      %2610 = vmatpush1.bf16.msra.mxu0 %v2546
      %2611 = vmatprep.mubr.bf16.mxu0 %v2177
      %2612 = vmatmul.mubr.bf16.gmra.mrb[0].mxu0 %v2176
      %v2613 = vpop.f32.mrb[0].mxu0
      %v2614 = vadd.f32 0.0, %v2613
      %v2615 = vpop.f32.mrb[0].mxu0
      %v2616 = vpop.f32.mrb[0].mxu0
      %v2617 = vadd.f32 0.0, %v2616
      %v2618 = vpop.f32.mrb[0].mxu0
      %2619 = vmatprep.mubr.bf16.mxu0 %v2180
      %2620 = vmatmul.mubr.bf16.gmra.mrb[0].mxu0 %v2179
      %v2621 = vpop.f32.mrb[0].mxu0
      %v2622 = vadd.f32 0.0, %v2621
      %v2623 = vpop.f32.mrb[0].mxu0
      %v2624 = vpop.f32.mrb[0].mxu0
      %v2625 = vadd.f32 0.0, %v2624
      %v2626 = vpop.f32.mrb[0].mxu0
      %2627 = vdwg.mxu0
      %2628 = vmatprep.subr.bf16.mxu0 0
      %2629 = vmatpush1.bf16.msra.mxu0 %v2547
      %2630 = vmatprep.subr.bf16.mxu0 0
      %2631 = vmatpush1.bf16.msra.mxu0 %v2548
      %2632 = vmatprep.subr.bf16.mxu0 0
      %2633 = vmatpush1.bf16.msra.mxu0 %v2549
      %2634 = vmatprep.subr.bf16.mxu0 0
      %2635 = vmatpush1.bf16.msra.mxu0 %v2550
      %2636 = vmatprep.subr.bf16.mxu0 0
      %2637 = vmatpush1.bf16.msra.mxu0 %v2551
      %2638 = vmatprep.subr.bf16.mxu0 0
      %2639 = vmatpush1.bf16.msra.mxu0 %v2552
      %2640 = vmatprep.subr.bf16.mxu0 0
      %2641 = vmatpush1.bf16.msra.mxu0 %v2553
      %2642 = vmatprep.subr.bf16.mxu0 0
      %2643 = vmatpush1.bf16.msra.mxu0 %v2554
      %2644 = vmatprep.subr.bf16.mxu0 0
      %2645 = vmatpush1.bf16.msra.mxu0 0
      %2646 = vmatprep.subr.bf16.mxu0 0
      %2647 = vmatpush1.bf16.msra.mxu0 0
      %2648 = vmatprep.subr.bf16.mxu0 0
      %2649 = vmatpush1.bf16.msra.mxu0 0
      %2650 = vmatprep.subr.bf16.mxu0 0
      %2651 = vmatpush1.bf16.msra.mxu0 0
      %2652 = vmatprep.subr.bf16.mxu0 0
      %2653 = vmatpush1.bf16.msra.mxu0 0
      %2654 = vmatprep.subr.bf16.mxu0 0
      %2655 = vmatpush1.bf16.msra.mxu0 0
      %2656 = vmatprep.subr.bf16.mxu0 0
      %2657 = vmatpush1.bf16.msra.mxu0 0
      %2658 = vmatprep.subr.bf16.mxu0 0
      %2659 = vmatpush1.bf16.msra.mxu0 0
      %2660 = vmatprep.mubr.bf16.mxu0 0
      %2661 = vmatmul.mubr.bf16.gmra.mrb[0].mxu0 %v2178
      %v2662 = vpop.f32.mrb[0].mxu0
      %v2663 = vadd.f32 %v2614, %v2662
      %v2664 = vpop.f32.mrb[0].mxu0
      %v2665 = vpop.f32.mrb[0].mxu0
      %v2666 = vadd.f32 %v2617, %v2665
      %v2667 = vpop.f32.mrb[0].mxu0
      %2668 = vmatprep.mubr.bf16.mxu0 0
      %2669 = vmatmul.mubr.bf16.gmra.mrb[0].mxu0 %v2181
      %v2670 = vpop.f32.mrb[0].mxu0
      %v2671 = vadd.f32 %v2622, %v2670
      %v2672 = vpop.f32.mrb[0].mxu0
      %v2673 = vpop.f32.mrb[0].mxu0
      %v2674 = vadd.f32 %v2625, %v2673
      %v2675 = vpop.f32.mrb[0].mxu0
      %2676 = vdwg.mxu0
      %v2677 = vadd.f32 %v2431, %v2663
      %v2678 = vadd.f32 %v2432, %v2666
      %v2679 = vadd.f32 %v2433, %v2671
      %v2680 = vadd.f32 %v2434, %v2674
      %v2689 = vunpack.c.l.b16 %v2148
      %v2690 = vunpack.c.h.b16 %v2148
      %v2691 = vunpack.c.l.b16 %v2149
      %v2692 = vunpack.c.l.b16 %v2150
      %v2693 = vunpack.c.h.b16 %v2150
      %v2694 = vunpack.c.l.b16 %v2151
      %v2695 = vunpack.c.l.b16 %v2152
      %v2696 = vunpack.c.h.b16 %v2152
      %v2697 = vunpack.c.l.b16 %v2153
      %v2698 = vunpack.c.l.b16 %v2154
      %v2699 = vunpack.c.h.b16 %v2154
      %v2700 = vunpack.c.l.b16 %v2155
      %v2701 = vpack.c.b16 %v2692, %v2689
      %v2702 = vpack.c.b16 %v2693, %v2690
      %v2703 = vpack.c.b16 %v2694, %v2691
      %v2704 = vpack.c.b16 %v2698, %v2695
      %v2705 = vpack.c.b16 %v2699, %v2696
      %v2706 = vpack.c.b16 %v2700, %v2697
      %2713 = vmatprep.subr.bf16.mxu0 0
      %2714 = vmatpush1.bf16.msra.mxu0 %v2285
      %2715 = vmatprep.subr.bf16.mxu0 0
      %2716 = vmatpush1.bf16.msra.mxu0 %v2286
      %2717 = vmatprep.subr.bf16.mxu0 0
      %2718 = vmatpush1.bf16.msra.mxu0 %v2287
      %2719 = vmatprep.subr.bf16.mxu0 0
      %2720 = vmatpush1.bf16.msra.mxu0 %v2288
      %2721 = vmatprep.subr.bf16.mxu0 0
      %2722 = vmatpush1.bf16.msra.mxu0 %v2289
      %2723 = vmatprep.subr.bf16.mxu0 0
      %2724 = vmatpush1.bf16.msra.mxu0 %v2290
      %2725 = vmatprep.subr.bf16.mxu0 0
      %2726 = vmatpush1.bf16.msra.mxu0 %v2291
      %2727 = vmatprep.subr.bf16.mxu0 0
      %2728 = vmatpush1.bf16.msra.mxu0 %v2292
      %2729 = vmatprep.subr.bf16.mxu0 0
      %2730 = vmatpush1.bf16.msra.mxu0 %v2293
      %2731 = vmatprep.subr.bf16.mxu0 0
      %2732 = vmatpush1.bf16.msra.mxu0 %v2294
      %2733 = vmatprep.subr.bf16.mxu0 0
      %2734 = vmatpush1.bf16.msra.mxu0 %v2295
      %2735 = vmatprep.subr.bf16.mxu0 0
      %2736 = vmatpush1.bf16.msra.mxu0 %v2296
      %2737 = vmatprep.subr.bf16.mxu0 0
      %2738 = vmatpush1.bf16.msra.mxu0 %v2297
      %2739 = vmatprep.subr.bf16.mxu0 0
      %2740 = vmatpush1.bf16.msra.mxu0 %v2298
      %2741 = vmatprep.subr.bf16.mxu0 0
      %2742 = vmatpush1.bf16.msra.mxu0 %v2299
      %2743 = vmatprep.subr.bf16.mxu0 0
      %2744 = vmatpush1.bf16.msra.mxu0 %v2300
      %2745 = vmatprep.mubr.bf16.mxu0 %v2702
      %2746 = vmatmul.mubr.bf16.gmra.mrb[0].mxu0 %v2701
      %v2747 = vpop.f32.mrb[0].mxu0
      %v2748 = vadd.f32 0.0, %v2747
      %v2749 = vpop.f32.mrb[0].mxu0
      %v2750 = vpop.f32.mrb[0].mxu0
      %v2751 = vadd.f32 0.0, %v2750
      %v2752 = vpop.f32.mrb[0].mxu0
      %2753 = vmatprep.mubr.bf16.mxu0 %v2705
      %2754 = vmatmul.mubr.bf16.gmra.mrb[0].mxu0 %v2704
      %v2755 = vpop.f32.mrb[0].mxu0
      %v2756 = vadd.f32 0.0, %v2755
      %v2757 = vpop.f32.mrb[0].mxu0
      %v2758 = vpop.f32.mrb[0].mxu0
      %v2759 = vadd.f32 0.0, %v2758
      %v2760 = vpop.f32.mrb[0].mxu0
      %2761 = vdwg.mxu0
      %2762 = vmatprep.subr.bf16.mxu0 0
      %2763 = vmatpush1.bf16.msra.mxu0 %v2301
      %2764 = vmatprep.subr.bf16.mxu0 0
      %2765 = vmatpush1.bf16.msra.mxu0 %v2302
      %2766 = vmatprep.subr.bf16.mxu0 0
      %2767 = vmatpush1.bf16.msra.mxu0 %v2303
      %2768 = vmatprep.subr.bf16.mxu0 0
      %2769 = vmatpush1.bf16.msra.mxu0 %v2304
      %2770 = vmatprep.subr.bf16.mxu0 0
      %2771 = vmatpush1.bf16.msra.mxu0 %v2305
      %2772 = vmatprep.subr.bf16.mxu0 0
      %2773 = vmatpush1.bf16.msra.mxu0 %v2306
      %2774 = vmatprep.subr.bf16.mxu0 0
      %2775 = vmatpush1.bf16.msra.mxu0 %v2307
      %2776 = vmatprep.subr.bf16.mxu0 0
      %2777 = vmatpush1.bf16.msra.mxu0 %v2308
      %2778 = vmatprep.subr.bf16.mxu0 0
      %2779 = vmatpush1.bf16.msra.mxu0 0
      %2780 = vmatprep.subr.bf16.mxu0 0
      %2781 = vmatpush1.bf16.msra.mxu0 0
      %2782 = vmatprep.subr.bf16.mxu0 0
      %2783 = vmatpush1.bf16.msra.mxu0 0
      %2784 = vmatprep.subr.bf16.mxu0 0
      %2785 = vmatpush1.bf16.msra.mxu0 0
      %2786 = vmatprep.subr.bf16.mxu0 0
      %2787 = vmatpush1.bf16.msra.mxu0 0
      %2788 = vmatprep.subr.bf16.mxu0 0
      %2789 = vmatpush1.bf16.msra.mxu0 0
      %2790 = vmatprep.subr.bf16.mxu0 0
      %2791 = vmatpush1.bf16.msra.mxu0 0
      %2792 = vmatprep.subr.bf16.mxu0 0
      %2793 = vmatpush1.bf16.msra.mxu0 0
      %2794 = vmatprep.mubr.bf16.mxu0 0
      %2795 = vmatmul.mubr.bf16.gmra.mrb[0].mxu0 %v2703
      %v2796 = vpop.f32.mrb[0].mxu0
      %v2797 = vadd.f32 %v2748, %v2796
      %v2798 = vpop.f32.mrb[0].mxu0
      %v2799 = vpop.f32.mrb[0].mxu0
      %v2800 = vadd.f32 %v2751, %v2799
      %v2801 = vpop.f32.mrb[0].mxu0
      %2802 = vmatprep.mubr.bf16.mxu0 0
      %2803 = vmatmul.mubr.bf16.gmra.mrb[0].mxu0 %v2706
      %v2804 = vpop.f32.mrb[0].mxu0
      %v2805 = vadd.f32 %v2756, %v2804
      %v2806 = vpop.f32.mrb[0].mxu0
      %v2807 = vpop.f32.mrb[0].mxu0
      %v2808 = vadd.f32 %v2759, %v2807
      %v2809 = vpop.f32.mrb[0].mxu0
      %2810 = vdwg.mxu0
      %v2811 = vadd.f32 %v2677, %v2797
      %v2812 = vadd.f32 %v2678, %v2800
      %v2813 = vadd.f32 %v2679, %v2805
      %v2814 = vadd.f32 %v2680, %v2808
      %s2815 = scalar_lea.vmem %s2, 144
      %v2816 = vld [vmem:[%s2815] sm:$0xff]
      %v2817 = vld [vmem:[%s2815 + $0x8] sm:$0xf]
      %v2818 = vld [vmem:[%s2815 + $0xc] sm:$0xff]
      %v2819 = vld [vmem:[%s2815 + $0x14] sm:$0xf]
      %v2820 = vld [vmem:[%s2815 + $0x18] sm:$0xff]
      %v2821 = vld [vmem:[%s2815 + $0x20] sm:$0xf]
      %v2822 = vld [vmem:[%s2815 + $0x24] sm:$0xff]
      %v2823 = vld [vmem:[%s2815 + $0x2c] sm:$0xf]
      %s2824 = scalar_lea.vmem %s3, 144
      %v2825 = vld [vmem:[%s2824] sm:$0xff]
      %v2826 = vld [vmem:[%s2824 + $0x8] sm:$0xf]
      %v2827 = vld [vmem:[%s2824 + $0xc] sm:$0xff]
      %v2828 = vld [vmem:[%s2824 + $0x14] sm:$0xf]
      %v2829 = vld [vmem:[%s2824 + $0x18] sm:$0xff]
      %v2830 = vld [vmem:[%s2824 + $0x20] sm:$0xf]
      %v2831 = vld [vmem:[%s2824 + $0x24] sm:$0xff]
      %v2832 = vld [vmem:[%s2824 + $0x2c] sm:$0xf]
      %v2841 = vunpack.c.l.b16 %v2816
      %v2842 = vunpack.c.h.b16 %v2816
      %v2843 = vunpack.c.l.b16 %v2817
      %v2844 = vunpack.c.l.b16 %v2818
      %v2845 = vunpack.c.h.b16 %v2818
      %v2846 = vunpack.c.l.b16 %v2819
      %v2847 = vunpack.c.l.b16 %v2820
      %v2848 = vunpack.c.h.b16 %v2820
      %v2849 = vunpack.c.l.b16 %v2821
      %v2850 = vunpack.c.l.b16 %v2822
      %v2851 = vunpack.c.h.b16 %v2822
      %v2852 = vunpack.c.l.b16 %v2823
      %v2853 = vpack.c.b16 %v2844, %v2841
      %v2854 = vpack.c.b16 %v2845, %v2842
      %v2855 = vpack.c.b16 %v2846, %v2843
      %v2856 = vpack.c.b16 %v2850, %v2847
      %v2857 = vpack.c.b16 %v2851, %v2848
      %v2858 = vpack.c.b16 %v2852, %v2849
      %2865 = vrot.lane.b32.xlu0 %v1271, 80
      %v2866 = vpop.permute.xlu0 %2865
      %2867 = vrot.lane.b32.xlu0 %v1272, 80
      %v2868 = vpop.permute.xlu0 %2867
      %2869 = vrot.lane.b32.xlu0 %v1273, 80
      %v2870 = vpop.permute.xlu0 %2869
      %2871 = vrot.lane.b32.xlu0 %v1274, 80
      %v2872 = vpop.permute.xlu0 %2871
      %2873 = vrot.lane.b32.xlu0 %v1275, 80
      %v2874 = vpop.permute.xlu0 %2873
      %2875 = vrot.lane.b32.xlu0 %v1276, 80
      %v2876 = vpop.permute.xlu0 %2875
      %2877 = vrot.lane.b32.xlu0 %v1277, 80
      %v2878 = vpop.permute.xlu0 %2877
      %2879 = vrot.lane.b32.xlu0 %v1278, 80
      %v2880 = vpop.permute.xlu0 %2879
      %2881 = vrot.lane.b32.xlu0 %v1279, 80
      %v2882 = vpop.permute.xlu0 %2881
      %2883 = vrot.lane.b32.xlu0 %v1280, 80
      %v2884 = vpop.permute.xlu0 %2883
      %2885 = vrot.lane.b32.xlu0 %v1281, 80
      %v2886 = vpop.permute.xlu0 %2885
      %2887 = vrot.lane.b32.xlu0 %v1282, 80
      %v2888 = vpop.permute.xlu0 %2887
      %2889 = vrot.lane.b32.xlu0 %v1283, 80
      %v2890 = vpop.permute.xlu0 %2889
      %2891 = vrot.lane.b32.xlu0 %v1284, 80
      %v2892 = vpop.permute.xlu0 %2891
      %2893 = vrot.lane.b32.xlu0 %v1285, 80
      %v2894 = vpop.permute.xlu0 %2893
      %2895 = vrot.lane.b32.xlu0 %v1286, 80
      %v2896 = vpop.permute.xlu0 %2895
      %2897 = vrot.lane.b32.xlu0 %v1287, 80
      %v2898 = vpop.permute.xlu0 %2897
      %2899 = vrot.lane.b32.xlu0 %v1288, 80
      %v2900 = vpop.permute.xlu0 %2899
      %2901 = vrot.lane.b32.xlu0 %v1289, 80
      %v2902 = vpop.permute.xlu0 %2901
      %2903 = vrot.lane.b32.xlu0 %v1290, 80
      %v2904 = vpop.permute.xlu0 %2903
      %2905 = vrot.lane.b32.xlu0 %v1291, 80
      %v2906 = vpop.permute.xlu0 %2905
      %2907 = vrot.lane.b32.xlu0 %v1292, 80
      %v2908 = vpop.permute.xlu0 %2907
      %2909 = vrot.lane.b32.xlu0 %v1293, 80
      %v2910 = vpop.permute.xlu0 %2909
      %2911 = vrot.lane.b32.xlu0 %v1294, 80
      %v2912 = vpop.permute.xlu0 %2911
      %2913 = vrot.lane.b32.xlu0 %v1295, 80
      %v2914 = vpop.permute.xlu0 %2913
      %2915 = vrot.lane.b32.xlu0 %v1296, 80
      %v2916 = vpop.permute.xlu0 %2915
      %2917 = vrot.lane.b32.xlu0 %v1297, 80
      %v2918 = vpop.permute.xlu0 %2917
      %2919 = vrot.lane.b32.xlu0 %v1298, 80
      %v2920 = vpop.permute.xlu0 %2919
      %2921 = vrot.lane.b32.xlu0 %v1299, 80
      %v2922 = vpop.permute.xlu0 %2921
      %2923 = vrot.lane.b32.xlu0 %v1300, 80
      %v2924 = vpop.permute.xlu0 %2923
      %2925 = vrot.lane.b32.xlu0 %v1301, 80
      %v2926 = vpop.permute.xlu0 %2925
      %2927 = vrot.lane.b32.xlu0 %v1302, 80
      %v2928 = vpop.permute.xlu0 %2927
      %2929 = vrot.lane.b32.xlu0 %v1303, 80
      %v2930 = vpop.permute.xlu0 %2929
      %2931 = vrot.lane.b32.xlu0 %v1304, 80
      %v2932 = vpop.permute.xlu0 %2931
      %2933 = vrot.lane.b32.xlu0 %v1305, 80
      %v2934 = vpop.permute.xlu0 %2933
      %2935 = vrot.lane.b32.xlu0 %v1306, 80
      %v2936 = vpop.permute.xlu0 %2935
      %2937 = vrot.lane.b32.xlu0 %v1307, 80
      %v2938 = vpop.permute.xlu0 %2937
      %2939 = vrot.lane.b32.xlu0 %v1308, 80
      %v2940 = vpop.permute.xlu0 %2939
      %2941 = vrot.lane.b32.xlu0 %v1309, 80
      %v2942 = vpop.permute.xlu0 %2941
      %2943 = vrot.lane.b32.xlu0 %v1310, 80
      %v2944 = vpop.permute.xlu0 %2943
      %2945 = vrot.lane.b32.xlu0 %v1311, 80
      %v2946 = vpop.permute.xlu0 %2945
      %2947 = vrot.lane.b32.xlu0 %v1312, 80
      %v2948 = vpop.permute.xlu0 %2947
      %2949 = vrot.lane.b32.xlu0 %v1313, 80
      %v2950 = vpop.permute.xlu0 %2949
      %2951 = vrot.lane.b32.xlu0 %v1314, 80
      %v2952 = vpop.permute.xlu0 %2951
      %2953 = vrot.lane.b32.xlu0 %v1315, 80
      %v2954 = vpop.permute.xlu0 %2953
      %2955 = vrot.lane.b32.xlu0 %v1316, 80
      %v2956 = vpop.permute.xlu0 %2955
      %2957 = vrot.lane.b32.xlu0 %v1317, 80
      %v2958 = vpop.permute.xlu0 %2957
      %2959 = vrot.lane.b32.xlu0 %v1318, 80
      %v2960 = vpop.permute.xlu0 %2959
      %vm2961 = vcmask 654336
      %v2962 = vsel %vm2961, %v2866, %v2868
      %v2963 = vsel %vm2961, %v2870, %v2872
      %v2964 = vsel %vm2961, %v2874, %v2876
      %v2965 = vsel %vm2961, %v2878, %v2880
      %v2966 = vsel %vm2961, %v2882, %v2884
      %v2967 = vsel %vm2961, %v2886, %v2888
      %v2968 = vsel %vm2961, %v2890, %v2892
      %v2969 = vsel %vm2961, %v2894, %v2896
      %v2970 = vsel %vm2961, %v2898, %v2900
      %v2971 = vsel %vm2961, %v2902, %v2904
      %v2972 = vsel %vm2961, %v2906, %v2908
      %v2973 = vsel %vm2961, %v2910, %v2912
      %v2974 = vsel %vm2961, %v2914, %v2916
      %v2975 = vsel %vm2961, %v2918, %v2920
      %v2976 = vsel %vm2961, %v2922, %v2924
      %v2977 = vsel %vm2961, %v2926, %v2928
      %v2978 = vsel %vm2961, %v2930, %v2932
      %v2979 = vsel %vm2961, %v2934, %v2936
      %v2980 = vsel %vm2961, %v2938, %v2940
      %v2981 = vsel %vm2961, %v2942, %v2944
      %v2982 = vsel %vm2961, %v2946, %v2948
      %v2983 = vsel %vm2961, %v2950, %v2952
      %v2984 = vsel %vm2961, %v2954, %v2956
      %v2985 = vsel %vm2961, %v2958, %v2960
      %3010 = vmatprep.subr.bf16.mxu0 0
      %3011 = vmatpush1.bf16.msra.mxu0 %v2962
      %3012 = vmatprep.subr.bf16.mxu0 0
      %3013 = vmatpush1.bf16.msra.mxu0 %v2963
      %3014 = vmatprep.subr.bf16.mxu0 0
      %3015 = vmatpush1.bf16.msra.mxu0 %v2964
      %3016 = vmatprep.subr.bf16.mxu0 0
      %3017 = vmatpush1.bf16.msra.mxu0 %v2965
      %3018 = vmatprep.subr.bf16.mxu0 0
      %3019 = vmatpush1.bf16.msra.mxu0 %v2966
      %3020 = vmatprep.subr.bf16.mxu0 0
      %3021 = vmatpush1.bf16.msra.mxu0 %v2967
      %3022 = vmatprep.subr.bf16.mxu0 0
      %3023 = vmatpush1.bf16.msra.mxu0 %v2968
      %3024 = vmatprep.subr.bf16.mxu0 0
      %3025 = vmatpush1.bf16.msra.mxu0 %v2969
      %3026 = vmatprep.subr.bf16.mxu0 0
      %3027 = vmatpush1.bf16.msra.mxu0 %v2970
      %3028 = vmatprep.subr.bf16.mxu0 0
      %3029 = vmatpush1.bf16.msra.mxu0 %v2971
      %3030 = vmatprep.subr.bf16.mxu0 0
      %3031 = vmatpush1.bf16.msra.mxu0 %v2972
      %3032 = vmatprep.subr.bf16.mxu0 0
      %3033 = vmatpush1.bf16.msra.mxu0 %v2973
      %3034 = vmatprep.subr.bf16.mxu0 0
      %3035 = vmatpush1.bf16.msra.mxu0 %v2974
      %3036 = vmatprep.subr.bf16.mxu0 0
      %3037 = vmatpush1.bf16.msra.mxu0 %v2975
      %3038 = vmatprep.subr.bf16.mxu0 0
      %3039 = vmatpush1.bf16.msra.mxu0 %v2976
      %3040 = vmatprep.subr.bf16.mxu0 0
      %3041 = vmatpush1.bf16.msra.mxu0 %v2977
      %3042 = vmatprep.mubr.bf16.mxu0 %v2854
      %3043 = vmatmul.mubr.bf16.gmra.mrb[0].mxu0 %v2853
      %v3044 = vpop.f32.mrb[0].mxu0
      %v3045 = vadd.f32 0.0, %v3044
      %v3046 = vpop.f32.mrb[0].mxu0
      %v3047 = vpop.f32.mrb[0].mxu0
      %v3048 = vadd.f32 0.0, %v3047
      %v3049 = vpop.f32.mrb[0].mxu0
      %3050 = vmatprep.mubr.bf16.mxu0 %v2857
      %3051 = vmatmul.mubr.bf16.gmra.mrb[0].mxu0 %v2856
      %v3052 = vpop.f32.mrb[0].mxu0
      %v3053 = vadd.f32 0.0, %v3052
      %v3054 = vpop.f32.mrb[0].mxu0
      %v3055 = vpop.f32.mrb[0].mxu0
      %v3056 = vadd.f32 0.0, %v3055
      %v3057 = vpop.f32.mrb[0].mxu0
      %3058 = vdwg.mxu0
      %3059 = vmatprep.subr.bf16.mxu0 0
      %3060 = vmatpush1.bf16.msra.mxu0 %v2978
      %3061 = vmatprep.subr.bf16.mxu0 0
      %3062 = vmatpush1.bf16.msra.mxu0 %v2979
      %3063 = vmatprep.subr.bf16.mxu0 0
      %3064 = vmatpush1.bf16.msra.mxu0 %v2980
      %3065 = vmatprep.subr.bf16.mxu0 0
      %3066 = vmatpush1.bf16.msra.mxu0 %v2981
      %3067 = vmatprep.subr.bf16.mxu0 0
      %3068 = vmatpush1.bf16.msra.mxu0 %v2982
      %3069 = vmatprep.subr.bf16.mxu0 0
      %3070 = vmatpush1.bf16.msra.mxu0 %v2983
      %3071 = vmatprep.subr.bf16.mxu0 0
      %3072 = vmatpush1.bf16.msra.mxu0 %v2984
      %3073 = vmatprep.subr.bf16.mxu0 0
      %3074 = vmatpush1.bf16.msra.mxu0 %v2985
      %3075 = vmatprep.subr.bf16.mxu0 0
      %3076 = vmatpush1.bf16.msra.mxu0 0
      %3077 = vmatprep.subr.bf16.mxu0 0
      %3078 = vmatpush1.bf16.msra.mxu0 0
      %3079 = vmatprep.subr.bf16.mxu0 0
      %3080 = vmatpush1.bf16.msra.mxu0 0
      %3081 = vmatprep.subr.bf16.mxu0 0
      %3082 = vmatpush1.bf16.msra.mxu0 0
      %3083 = vmatprep.subr.bf16.mxu0 0
      %3084 = vmatpush1.bf16.msra.mxu0 0
      %3085 = vmatprep.subr.bf16.mxu0 0
      %3086 = vmatpush1.bf16.msra.mxu0 0
      %3087 = vmatprep.subr.bf16.mxu0 0
      %3088 = vmatpush1.bf16.msra.mxu0 0
      %3089 = vmatprep.subr.bf16.mxu0 0
      %3090 = vmatpush1.bf16.msra.mxu0 0
      %3091 = vmatprep.mubr.bf16.mxu0 0
      %3092 = vmatmul.mubr.bf16.gmra.mrb[0].mxu0 %v2855
      %v3093 = vpop.f32.mrb[0].mxu0
      %v3094 = vadd.f32 %v3045, %v3093
      %v3095 = vpop.f32.mrb[0].mxu0
      %v3096 = vpop.f32.mrb[0].mxu0
      %v3097 = vadd.f32 %v3048, %v3096
      %v3098 = vpop.f32.mrb[0].mxu0
      %3099 = vmatprep.mubr.bf16.mxu0 0
      %3100 = vmatmul.mubr.bf16.gmra.mrb[0].mxu0 %v2858
      %v3101 = vpop.f32.mrb[0].mxu0
      %v3102 = vadd.f32 %v3053, %v3101
      %v3103 = vpop.f32.mrb[0].mxu0
      %v3104 = vpop.f32.mrb[0].mxu0
      %v3105 = vadd.f32 %v3056, %v3104
      %v3106 = vpop.f32.mrb[0].mxu0
      %3107 = vdwg.mxu0
      %v3108 = vadd.f32 %v2811, %v3094
      %v3109 = vadd.f32 %v2812, %v3097
      %v3110 = vadd.f32 %v2813, %v3102
      %v3111 = vadd.f32 %v2814, %v3105
      %3112 = vrot.lane.b32.xlu0 %v1710, 80
      %v3113 = vpop.permute.xlu0 %3112
      %3114 = vrot.lane.b32.xlu0 %v1711, 80
      %v3115 = vpop.permute.xlu0 %3114
      %3116 = vrot.lane.b32.xlu0 %v1712, 80
      %v3117 = vpop.permute.xlu0 %3116
      %3118 = vrot.lane.b32.xlu0 %v1713, 80
      %v3119 = vpop.permute.xlu0 %3118
      %3120 = vrot.lane.b32.xlu0 %v1714, 80
      %v3121 = vpop.permute.xlu0 %3120
      %3122 = vrot.lane.b32.xlu0 %v1715, 80
      %v3123 = vpop.permute.xlu0 %3122
      %3124 = vrot.lane.b32.xlu0 %v1716, 80
      %v3125 = vpop.permute.xlu0 %3124
      %3126 = vrot.lane.b32.xlu0 %v1717, 80
      %v3127 = vpop.permute.xlu0 %3126
      %3128 = vrot.lane.b32.xlu0 %v1718, 80
      %v3129 = vpop.permute.xlu0 %3128
      %3130 = vrot.lane.b32.xlu0 %v1719, 80
      %v3131 = vpop.permute.xlu0 %3130
      %3132 = vrot.lane.b32.xlu0 %v1720, 80
      %v3133 = vpop.permute.xlu0 %3132
      %3134 = vrot.lane.b32.xlu0 %v1721, 80
      %v3135 = vpop.permute.xlu0 %3134
      %3136 = vrot.lane.b32.xlu0 %v1722, 80
      %v3137 = vpop.permute.xlu0 %3136
      %3138 = vrot.lane.b32.xlu0 %v1723, 80
      %v3139 = vpop.permute.xlu0 %3138
      %3140 = vrot.lane.b32.xlu0 %v1724, 80
      %v3141 = vpop.permute.xlu0 %3140
      %3142 = vrot.lane.b32.xlu0 %v1725, 80
      %v3143 = vpop.permute.xlu0 %3142
      %3144 = vrot.lane.b32.xlu0 %v1726, 80
      %v3145 = vpop.permute.xlu0 %3144
      %3146 = vrot.lane.b32.xlu0 %v1727, 80
      %v3147 = vpop.permute.xlu0 %3146
      %3148 = vrot.lane.b32.xlu0 %v1728, 80
      %v3149 = vpop.permute.xlu0 %3148
      %3150 = vrot.lane.b32.xlu0 %v1729, 80
      %v3151 = vpop.permute.xlu0 %3150
      %3152 = vrot.lane.b32.xlu0 %v1730, 80
      %v3153 = vpop.permute.xlu0 %3152
      %3154 = vrot.lane.b32.xlu0 %v1731, 80
      %v3155 = vpop.permute.xlu0 %3154
      %3156 = vrot.lane.b32.xlu0 %v1732, 80
      %v3157 = vpop.permute.xlu0 %3156
      %3158 = vrot.lane.b32.xlu0 %v1733, 80
      %v3159 = vpop.permute.xlu0 %3158
      %3160 = vrot.lane.b32.xlu0 %v1734, 80
      %v3161 = vpop.permute.xlu0 %3160
      %3162 = vrot.lane.b32.xlu0 %v1735, 80
      %v3163 = vpop.permute.xlu0 %3162
      %3164 = vrot.lane.b32.xlu0 %v1736, 80
      %v3165 = vpop.permute.xlu0 %3164
      %3166 = vrot.lane.b32.xlu0 %v1737, 80
      %v3167 = vpop.permute.xlu0 %3166
      %3168 = vrot.lane.b32.xlu0 %v1738, 80
      %v3169 = vpop.permute.xlu0 %3168
      %3170 = vrot.lane.b32.xlu0 %v1739, 80
      %v3171 = vpop.permute.xlu0 %3170
      %3172 = vrot.lane.b32.xlu0 %v1740, 80
      %v3173 = vpop.permute.xlu0 %3172
      %3174 = vrot.lane.b32.xlu0 %v1741, 80
      %v3175 = vpop.permute.xlu0 %3174
      %3176 = vrot.lane.b32.xlu0 %v1742, 80
      %v3177 = vpop.permute.xlu0 %3176
      %3178 = vrot.lane.b32.xlu0 %v1743, 80
      %v3179 = vpop.permute.xlu0 %3178
      %3180 = vrot.lane.b32.xlu0 %v1744, 80
      %v3181 = vpop.permute.xlu0 %3180
      %3182 = vrot.lane.b32.xlu0 %v1745, 80
      %v3183 = vpop.permute.xlu0 %3182
      %3184 = vrot.lane.b32.xlu0 %v1746, 80
      %v3185 = vpop.permute.xlu0 %3184
      %3186 = vrot.lane.b32.xlu0 %v1747, 80
      %v3187 = vpop.permute.xlu0 %3186
      %3188 = vrot.lane.b32.xlu0 %v1748, 80
      %v3189 = vpop.permute.xlu0 %3188
      %3190 = vrot.lane.b32.xlu0 %v1749, 80
      %v3191 = vpop.permute.xlu0 %3190
      %3192 = vrot.lane.b32.xlu0 %v1750, 80
      %v3193 = vpop.permute.xlu0 %3192
      %3194 = vrot.lane.b32.xlu0 %v1751, 80
      %v3195 = vpop.permute.xlu0 %3194
      %3196 = vrot.lane.b32.xlu0 %v1752, 80
      %v3197 = vpop.permute.xlu0 %3196
      %3198 = vrot.lane.b32.xlu0 %v1753, 80
      %v3199 = vpop.permute.xlu0 %3198
      %3200 = vrot.lane.b32.xlu0 %v1754, 80
      %v3201 = vpop.permute.xlu0 %3200
      %3202 = vrot.lane.b32.xlu0 %v1755, 80
      %v3203 = vpop.permute.xlu0 %3202
      %3204 = vrot.lane.b32.xlu0 %v1756, 80
      %v3205 = vpop.permute.xlu0 %3204
      %3206 = vrot.lane.b32.xlu0 %v1757, 80
      %v3207 = vpop.permute.xlu0 %3206
      %v3208 = vsel %vm2961, %v3113, %v3115
      %v3209 = vsel %vm2961, %v3117, %v3119
      %v3210 = vsel %vm2961, %v3121, %v3123
      %v3211 = vsel %vm2961, %v3125, %v3127
      %v3212 = vsel %vm2961, %v3129, %v3131
      %v3213 = vsel %vm2961, %v3133, %v3135
      %v3214 = vsel %vm2961, %v3137, %v3139
      %v3215 = vsel %vm2961, %v3141, %v3143
      %v3216 = vsel %vm2961, %v3145, %v3147
      %v3217 = vsel %vm2961, %v3149, %v3151
      %v3218 = vsel %vm2961, %v3153, %v3155
      %v3219 = vsel %vm2961, %v3157, %v3159
      %v3220 = vsel %vm2961, %v3161, %v3163
      %v3221 = vsel %vm2961, %v3165, %v3167
      %v3222 = vsel %vm2961, %v3169, %v3171
      %v3223 = vsel %vm2961, %v3173, %v3175
      %v3224 = vsel %vm2961, %v3177, %v3179
      %v3225 = vsel %vm2961, %v3181, %v3183
      %v3226 = vsel %vm2961, %v3185, %v3187
      %v3227 = vsel %vm2961, %v3189, %v3191
      %v3228 = vsel %vm2961, %v3193, %v3195
      %v3229 = vsel %vm2961, %v3197, %v3199
      %v3230 = vsel %vm2961, %v3201, %v3203
      %v3231 = vsel %vm2961, %v3205, %v3207
      %3256 = vmatprep.subr.bf16.mxu0 0
      %3257 = vmatpush1.bf16.msra.mxu0 %v3208
      %3258 = vmatprep.subr.bf16.mxu0 0
      %3259 = vmatpush1.bf16.msra.mxu0 %v3209
      %3260 = vmatprep.subr.bf16.mxu0 0
      %3261 = vmatpush1.bf16.msra.mxu0 %v3210
      %3262 = vmatprep.subr.bf16.mxu0 0
      %3263 = vmatpush1.bf16.msra.mxu0 %v3211
      %3264 = vmatprep.subr.bf16.mxu0 0
      %3265 = vmatpush1.bf16.msra.mxu0 %v3212
      %3266 = vmatprep.subr.bf16.mxu0 0
      %3267 = vmatpush1.bf16.msra.mxu0 %v3213
      %3268 = vmatprep.subr.bf16.mxu0 0
      %3269 = vmatpush1.bf16.msra.mxu0 %v3214
      %3270 = vmatprep.subr.bf16.mxu0 0
      %3271 = vmatpush1.bf16.msra.mxu0 %v3215
      %3272 = vmatprep.subr.bf16.mxu0 0
      %3273 = vmatpush1.bf16.msra.mxu0 %v3216
      %3274 = vmatprep.subr.bf16.mxu0 0
      %3275 = vmatpush1.bf16.msra.mxu0 %v3217
      %3276 = vmatprep.subr.bf16.mxu0 0
      %3277 = vmatpush1.bf16.msra.mxu0 %v3218
      %3278 = vmatprep.subr.bf16.mxu0 0
      %3279 = vmatpush1.bf16.msra.mxu0 %v3219
      %3280 = vmatprep.subr.bf16.mxu0 0
      %3281 = vmatpush1.bf16.msra.mxu0 %v3220
      %3282 = vmatprep.subr.bf16.mxu0 0
      %3283 = vmatpush1.bf16.msra.mxu0 %v3221
      %3284 = vmatprep.subr.bf16.mxu0 0
      %3285 = vmatpush1.bf16.msra.mxu0 %v3222
      %3286 = vmatprep.subr.bf16.mxu0 0
      %3287 = vmatpush1.bf16.msra.mxu0 %v3223
      %3288 = vmatprep.mubr.bf16.mxu0 %v2854
      %3289 = vmatmul.mubr.bf16.gmra.mrb[0].mxu0 %v2853
      %v3290 = vpop.f32.mrb[0].mxu0
      %v3291 = vadd.f32 0.0, %v3290
      %v3292 = vpop.f32.mrb[0].mxu0
      %v3293 = vpop.f32.mrb[0].mxu0
      %v3294 = vadd.f32 0.0, %v3293
      %v3295 = vpop.f32.mrb[0].mxu0
      %3296 = vmatprep.mubr.bf16.mxu0 %v2857
      %3297 = vmatmul.mubr.bf16.gmra.mrb[0].mxu0 %v2856
      %v3298 = vpop.f32.mrb[0].mxu0
      %v3299 = vadd.f32 0.0, %v3298
      %v3300 = vpop.f32.mrb[0].mxu0
      %v3301 = vpop.f32.mrb[0].mxu0
      %v3302 = vadd.f32 0.0, %v3301
      %v3303 = vpop.f32.mrb[0].mxu0
      %3304 = vdwg.mxu0
      %3305 = vmatprep.subr.bf16.mxu0 0
      %3306 = vmatpush1.bf16.msra.mxu0 %v3224
      %3307 = vmatprep.subr.bf16.mxu0 0
      %3308 = vmatpush1.bf16.msra.mxu0 %v3225
      %3309 = vmatprep.subr.bf16.mxu0 0
      %3310 = vmatpush1.bf16.msra.mxu0 %v3226
      %3311 = vmatprep.subr.bf16.mxu0 0
      %3312 = vmatpush1.bf16.msra.mxu0 %v3227
      %3313 = vmatprep.subr.bf16.mxu0 0
      %3314 = vmatpush1.bf16.msra.mxu0 %v3228
      %3315 = vmatprep.subr.bf16.mxu0 0
      %3316 = vmatpush1.bf16.msra.mxu0 %v3229
      %3317 = vmatprep.subr.bf16.mxu0 0
      %3318 = vmatpush1.bf16.msra.mxu0 %v3230
      %3319 = vmatprep.subr.bf16.mxu0 0
      %3320 = vmatpush1.bf16.msra.mxu0 %v3231
      %3321 = vmatprep.subr.bf16.mxu0 0
      %3322 = vmatpush1.bf16.msra.mxu0 0
      %3323 = vmatprep.subr.bf16.mxu0 0
      %3324 = vmatpush1.bf16.msra.mxu0 0
      %3325 = vmatprep.subr.bf16.mxu0 0
      %3326 = vmatpush1.bf16.msra.mxu0 0
      %3327 = vmatprep.subr.bf16.mxu0 0
      %3328 = vmatpush1.bf16.msra.mxu0 0
      %3329 = vmatprep.subr.bf16.mxu0 0
      %3330 = vmatpush1.bf16.msra.mxu0 0
      %3331 = vmatprep.subr.bf16.mxu0 0
      %3332 = vmatpush1.bf16.msra.mxu0 0
      %3333 = vmatprep.subr.bf16.mxu0 0
      %3334 = vmatpush1.bf16.msra.mxu0 0
      %3335 = vmatprep.subr.bf16.mxu0 0
      %3336 = vmatpush1.bf16.msra.mxu0 0
      %3337 = vmatprep.mubr.bf16.mxu0 0
      %3338 = vmatmul.mubr.bf16.gmra.mrb[0].mxu0 %v2855
      %v3339 = vpop.f32.mrb[0].mxu0
      %v3340 = vadd.f32 %v3291, %v3339
      %v3341 = vpop.f32.mrb[0].mxu0
      %v3342 = vpop.f32.mrb[0].mxu0
      %v3343 = vadd.f32 %v3294, %v3342
      %v3344 = vpop.f32.mrb[0].mxu0
      %3345 = vmatprep.mubr.bf16.mxu0 0
      %3346 = vmatmul.mubr.bf16.gmra.mrb[0].mxu0 %v2858
      %v3347 = vpop.f32.mrb[0].mxu0
      %v3348 = vadd.f32 %v3299, %v3347
      %v3349 = vpop.f32.mrb[0].mxu0
      %v3350 = vpop.f32.mrb[0].mxu0
      %v3351 = vadd.f32 %v3302, %v3350
      %v3352 = vpop.f32.mrb[0].mxu0
      %3353 = vdwg.mxu0
      %v3354 = vadd.f32 %v3108, %v3340
      %v3355 = vadd.f32 %v3109, %v3343
      %v3356 = vadd.f32 %v3110, %v3348
      %v3357 = vadd.f32 %v3111, %v3351
      %v3366 = vunpack.c.l.b16 %v2825
      %v3367 = vunpack.c.h.b16 %v2825
      %v3368 = vunpack.c.l.b16 %v2826
      %v3369 = vunpack.c.l.b16 %v2827
      %v3370 = vunpack.c.h.b16 %v2827
      %v3371 = vunpack.c.l.b16 %v2828
      %v3372 = vunpack.c.l.b16 %v2829
      %v3373 = vunpack.c.h.b16 %v2829
      %v3374 = vunpack.c.l.b16 %v2830
      %v3375 = vunpack.c.l.b16 %v2831
      %v3376 = vunpack.c.h.b16 %v2831
      %v3377 = vunpack.c.l.b16 %v2832
      %v3378 = vpack.c.b16 %v3369, %v3366
      %v3379 = vpack.c.b16 %v3370, %v3367
      %v3380 = vpack.c.b16 %v3371, %v3368
      %v3381 = vpack.c.b16 %v3375, %v3372
      %v3382 = vpack.c.b16 %v3376, %v3373
      %v3383 = vpack.c.b16 %v3377, %v3374
      %3390 = vmatprep.subr.bf16.mxu0 0
      %3391 = vmatpush1.bf16.msra.mxu0 %v2962
      %3392 = vmatprep.subr.bf16.mxu0 0
      %3393 = vmatpush1.bf16.msra.mxu0 %v2963
      %3394 = vmatprep.subr.bf16.mxu0 0
      %3395 = vmatpush1.bf16.msra.mxu0 %v2964
      %3396 = vmatprep.subr.bf16.mxu0 0
      %3397 = vmatpush1.bf16.msra.mxu0 %v2965
      %3398 = vmatprep.subr.bf16.mxu0 0
      %3399 = vmatpush1.bf16.msra.mxu0 %v2966
      %3400 = vmatprep.subr.bf16.mxu0 0
      %3401 = vmatpush1.bf16.msra.mxu0 %v2967
      %3402 = vmatprep.subr.bf16.mxu0 0
      %3403 = vmatpush1.bf16.msra.mxu0 %v2968
      %3404 = vmatprep.subr.bf16.mxu0 0
      %3405 = vmatpush1.bf16.msra.mxu0 %v2969
      %3406 = vmatprep.subr.bf16.mxu0 0
      %3407 = vmatpush1.bf16.msra.mxu0 %v2970
      %3408 = vmatprep.subr.bf16.mxu0 0
      %3409 = vmatpush1.bf16.msra.mxu0 %v2971
      %3410 = vmatprep.subr.bf16.mxu0 0
      %3411 = vmatpush1.bf16.msra.mxu0 %v2972
      %3412 = vmatprep.subr.bf16.mxu0 0
      %3413 = vmatpush1.bf16.msra.mxu0 %v2973
      %3414 = vmatprep.subr.bf16.mxu0 0
      %3415 = vmatpush1.bf16.msra.mxu0 %v2974
      %3416 = vmatprep.subr.bf16.mxu0 0
      %3417 = vmatpush1.bf16.msra.mxu0 %v2975
      %3418 = vmatprep.subr.bf16.mxu0 0
      %3419 = vmatpush1.bf16.msra.mxu0 %v2976
      %3420 = vmatprep.subr.bf16.mxu0 0
      %3421 = vmatpush1.bf16.msra.mxu0 %v2977
      %3422 = vmatprep.mubr.bf16.mxu0 %v3379
      %3423 = vmatmul.mubr.bf16.gmra.mrb[0].mxu0 %v3378
      %v3424 = vpop.f32.mrb[0].mxu0
      %v3425 = vadd.f32 0.0, %v3424
      %v3426 = vpop.f32.mrb[0].mxu0
      %v3427 = vpop.f32.mrb[0].mxu0
      %v3428 = vadd.f32 0.0, %v3427
      %v3429 = vpop.f32.mrb[0].mxu0
      %3430 = vmatprep.mubr.bf16.mxu0 %v3382
      %3431 = vmatmul.mubr.bf16.gmra.mrb[0].mxu0 %v3381
      %v3432 = vpop.f32.mrb[0].mxu0
      %v3433 = vadd.f32 0.0, %v3432
      %v3434 = vpop.f32.mrb[0].mxu0
      %v3435 = vpop.f32.mrb[0].mxu0
      %v3436 = vadd.f32 0.0, %v3435
      %v3437 = vpop.f32.mrb[0].mxu0
      %3438 = vdwg.mxu0
      %3439 = vmatprep.subr.bf16.mxu0 0
      %3440 = vmatpush1.bf16.msra.mxu0 %v2978
      %3441 = vmatprep.subr.bf16.mxu0 0
      %3442 = vmatpush1.bf16.msra.mxu0 %v2979
      %3443 = vmatprep.subr.bf16.mxu0 0
      %3444 = vmatpush1.bf16.msra.mxu0 %v2980
      %3445 = vmatprep.subr.bf16.mxu0 0
      %3446 = vmatpush1.bf16.msra.mxu0 %v2981
      %3447 = vmatprep.subr.bf16.mxu0 0
      %3448 = vmatpush1.bf16.msra.mxu0 %v2982
      %3449 = vmatprep.subr.bf16.mxu0 0
      %3450 = vmatpush1.bf16.msra.mxu0 %v2983
      %3451 = vmatprep.subr.bf16.mxu0 0
      %3452 = vmatpush1.bf16.msra.mxu0 %v2984
      %3453 = vmatprep.subr.bf16.mxu0 0
      %3454 = vmatpush1.bf16.msra.mxu0 %v2985
      %3455 = vmatprep.subr.bf16.mxu0 0
      %3456 = vmatpush1.bf16.msra.mxu0 0
      %3457 = vmatprep.subr.bf16.mxu0 0
      %3458 = vmatpush1.bf16.msra.mxu0 0
      %3459 = vmatprep.subr.bf16.mxu0 0
      %3460 = vmatpush1.bf16.msra.mxu0 0
      %3461 = vmatprep.subr.bf16.mxu0 0
      %3462 = vmatpush1.bf16.msra.mxu0 0
      %3463 = vmatprep.subr.bf16.mxu0 0
      %3464 = vmatpush1.bf16.msra.mxu0 0
      %3465 = vmatprep.subr.bf16.mxu0 0
      %3466 = vmatpush1.bf16.msra.mxu0 0
      %3467 = vmatprep.subr.bf16.mxu0 0
      %3468 = vmatpush1.bf16.msra.mxu0 0
      %3469 = vmatprep.subr.bf16.mxu0 0
      %3470 = vmatpush1.bf16.msra.mxu0 0
      %3471 = vmatprep.mubr.bf16.mxu0 0
      %3472 = vmatmul.mubr.bf16.gmra.mrb[0].mxu0 %v3380
      %v3473 = vpop.f32.mrb[0].mxu0
      %v3474 = vadd.f32 %v3425, %v3473
      %v3475 = vpop.f32.mrb[0].mxu0
      %v3476 = vpop.f32.mrb[0].mxu0
      %v3477 = vadd.f32 %v3428, %v3476
      %v3478 = vpop.f32.mrb[0].mxu0
      %3479 = vmatprep.mubr.bf16.mxu0 0
      %3480 = vmatmul.mubr.bf16.gmra.mrb[0].mxu0 %v3383
      %v3481 = vpop.f32.mrb[0].mxu0
      %v3482 = vadd.f32 %v3433, %v3481
      %v3483 = vpop.f32.mrb[0].mxu0
      %v3484 = vpop.f32.mrb[0].mxu0
      %v3485 = vadd.f32 %v3436, %v3484
      %v3486 = vpop.f32.mrb[0].mxu0
      %3487 = vdwg.mxu0
      %v3488 = vadd.f32 %v3354, %v3474
      %v3489 = vadd.f32 %v3355, %v3477
      %v3490 = vadd.f32 %v3356, %v3482
      %v3491 = vadd.f32 %v3357, %v3485
      %s3492 = scalar_lea.vmem %s2, 192
      %v3493 = vld [vmem:[%s3492] sm:$0xff]
      %v3494 = vld [vmem:[%s3492 + $0x8] sm:$0xf]
      %v3495 = vld [vmem:[%s3492 + $0xc] sm:$0xff]
      %v3496 = vld [vmem:[%s3492 + $0x14] sm:$0xf]
      %v3497 = vld [vmem:[%s3492 + $0x18] sm:$0xff]
      %v3498 = vld [vmem:[%s3492 + $0x20] sm:$0xf]
      %v3499 = vld [vmem:[%s3492 + $0x24] sm:$0xff]
      %v3500 = vld [vmem:[%s3492 + $0x2c] sm:$0xf]
      %s3501 = scalar_lea.vmem %s3, 192
      %v3502 = vld [vmem:[%s3501] sm:$0xff]
      %v3503 = vld [vmem:[%s3501 + $0x8] sm:$0xf]
      %v3504 = vld [vmem:[%s3501 + $0xc] sm:$0xff]
      %v3505 = vld [vmem:[%s3501 + $0x14] sm:$0xf]
      %v3506 = vld [vmem:[%s3501 + $0x18] sm:$0xff]
      %v3507 = vld [vmem:[%s3501 + $0x20] sm:$0xf]
      %v3508 = vld [vmem:[%s3501 + $0x24] sm:$0xff]
      %v3509 = vld [vmem:[%s3501 + $0x2c] sm:$0xf]
      %v3518 = vunpack.c.l.b16 %v3493
      %v3519 = vunpack.c.h.b16 %v3493
      %v3520 = vunpack.c.l.b16 %v3494
      %v3521 = vunpack.c.l.b16 %v3495
      %v3522 = vunpack.c.h.b16 %v3495
      %v3523 = vunpack.c.l.b16 %v3496
      %v3524 = vunpack.c.l.b16 %v3497
      %v3525 = vunpack.c.h.b16 %v3497
      %v3526 = vunpack.c.l.b16 %v3498
      %v3527 = vunpack.c.l.b16 %v3499
      %v3528 = vunpack.c.h.b16 %v3499
      %v3529 = vunpack.c.l.b16 %v3500
      %v3530 = vpack.c.b16 %v3521, %v3518
      %v3531 = vpack.c.b16 %v3522, %v3519
      %v3532 = vpack.c.b16 %v3523, %v3520
      %v3533 = vpack.c.b16 %v3527, %v3524
      %v3534 = vpack.c.b16 %v3528, %v3525
      %v3535 = vpack.c.b16 %v3529, %v3526
      %3542 = vrot.lane.b32.xlu0 %v1271, 64
      %v3543 = vpop.permute.xlu0 %3542
      %3544 = vrot.lane.b32.xlu0 %v1272, 64
      %v3545 = vpop.permute.xlu0 %3544
      %3546 = vrot.lane.b32.xlu0 %v1273, 64
      %v3547 = vpop.permute.xlu0 %3546
      %3548 = vrot.lane.b32.xlu0 %v1274, 64
      %v3549 = vpop.permute.xlu0 %3548
      %3550 = vrot.lane.b32.xlu0 %v1275, 64
      %v3551 = vpop.permute.xlu0 %3550
      %3552 = vrot.lane.b32.xlu0 %v1276, 64
      %v3553 = vpop.permute.xlu0 %3552
      %3554 = vrot.lane.b32.xlu0 %v1277, 64
      %v3555 = vpop.permute.xlu0 %3554
      %3556 = vrot.lane.b32.xlu0 %v1278, 64
      %v3557 = vpop.permute.xlu0 %3556
      %3558 = vrot.lane.b32.xlu0 %v1279, 64
      %v3559 = vpop.permute.xlu0 %3558
      %3560 = vrot.lane.b32.xlu0 %v1280, 64
      %v3561 = vpop.permute.xlu0 %3560
      %3562 = vrot.lane.b32.xlu0 %v1281, 64
      %v3563 = vpop.permute.xlu0 %3562
      %3564 = vrot.lane.b32.xlu0 %v1282, 64
      %v3565 = vpop.permute.xlu0 %3564
      %3566 = vrot.lane.b32.xlu0 %v1283, 64
      %v3567 = vpop.permute.xlu0 %3566
      %3568 = vrot.lane.b32.xlu0 %v1284, 64
      %v3569 = vpop.permute.xlu0 %3568
      %3570 = vrot.lane.b32.xlu0 %v1285, 64
      %v3571 = vpop.permute.xlu0 %3570
      %3572 = vrot.lane.b32.xlu0 %v1286, 64
      %v3573 = vpop.permute.xlu0 %3572
      %3574 = vrot.lane.b32.xlu0 %v1287, 64
      %v3575 = vpop.permute.xlu0 %3574
      %3576 = vrot.lane.b32.xlu0 %v1288, 64
      %v3577 = vpop.permute.xlu0 %3576
      %3578 = vrot.lane.b32.xlu0 %v1289, 64
      %v3579 = vpop.permute.xlu0 %3578
      %3580 = vrot.lane.b32.xlu0 %v1290, 64
      %v3581 = vpop.permute.xlu0 %3580
      %3582 = vrot.lane.b32.xlu0 %v1291, 64
      %v3583 = vpop.permute.xlu0 %3582
      %3584 = vrot.lane.b32.xlu0 %v1292, 64
      %v3585 = vpop.permute.xlu0 %3584
      %3586 = vrot.lane.b32.xlu0 %v1293, 64
      %v3587 = vpop.permute.xlu0 %3586
      %3588 = vrot.lane.b32.xlu0 %v1294, 64
      %v3589 = vpop.permute.xlu0 %3588
      %3590 = vrot.lane.b32.xlu0 %v1295, 64
      %v3591 = vpop.permute.xlu0 %3590
      %3592 = vrot.lane.b32.xlu0 %v1296, 64
      %v3593 = vpop.permute.xlu0 %3592
      %3594 = vrot.lane.b32.xlu0 %v1297, 64
      %v3595 = vpop.permute.xlu0 %3594
      %3596 = vrot.lane.b32.xlu0 %v1298, 64
      %v3597 = vpop.permute.xlu0 %3596
      %3598 = vrot.lane.b32.xlu0 %v1299, 64
      %v3599 = vpop.permute.xlu0 %3598
      %3600 = vrot.lane.b32.xlu0 %v1300, 64
      %v3601 = vpop.permute.xlu0 %3600
      %3602 = vrot.lane.b32.xlu0 %v1301, 64
      %v3603 = vpop.permute.xlu0 %3602
      %3604 = vrot.lane.b32.xlu0 %v1302, 64
      %v3605 = vpop.permute.xlu0 %3604
      %3606 = vrot.lane.b32.xlu0 %v1303, 64
      %v3607 = vpop.permute.xlu0 %3606
      %3608 = vrot.lane.b32.xlu0 %v1304, 64
      %v3609 = vpop.permute.xlu0 %3608
      %3610 = vrot.lane.b32.xlu0 %v1305, 64
      %v3611 = vpop.permute.xlu0 %3610
      %3612 = vrot.lane.b32.xlu0 %v1306, 64
      %v3613 = vpop.permute.xlu0 %3612
      %3614 = vrot.lane.b32.xlu0 %v1307, 64
      %v3615 = vpop.permute.xlu0 %3614
      %3616 = vrot.lane.b32.xlu0 %v1308, 64
      %v3617 = vpop.permute.xlu0 %3616
      %3618 = vrot.lane.b32.xlu0 %v1309, 64
      %v3619 = vpop.permute.xlu0 %3618
      %3620 = vrot.lane.b32.xlu0 %v1310, 64
      %v3621 = vpop.permute.xlu0 %3620
      %3622 = vrot.lane.b32.xlu0 %v1311, 64
      %v3623 = vpop.permute.xlu0 %3622
      %3624 = vrot.lane.b32.xlu0 %v1312, 64
      %v3625 = vpop.permute.xlu0 %3624
      %3626 = vrot.lane.b32.xlu0 %v1313, 64
      %v3627 = vpop.permute.xlu0 %3626
      %3628 = vrot.lane.b32.xlu0 %v1314, 64
      %v3629 = vpop.permute.xlu0 %3628
      %3630 = vrot.lane.b32.xlu0 %v1315, 64
      %v3631 = vpop.permute.xlu0 %3630
      %3632 = vrot.lane.b32.xlu0 %v1316, 64
      %v3633 = vpop.permute.xlu0 %3632
      %3634 = vrot.lane.b32.xlu0 %v1317, 64
      %v3635 = vpop.permute.xlu0 %3634
      %3636 = vrot.lane.b32.xlu0 %v1318, 64
      %v3637 = vpop.permute.xlu0 %3636
      %vm3638 = vcmask 523264
      %v3639 = vsel %vm3638, %v3543, %v3545
      %v3640 = vsel %vm3638, %v3547, %v3549
      %v3641 = vsel %vm3638, %v3551, %v3553
      %v3642 = vsel %vm3638, %v3555, %v3557
      %v3643 = vsel %vm3638, %v3559, %v3561
      %v3644 = vsel %vm3638, %v3563, %v3565
      %v3645 = vsel %vm3638, %v3567, %v3569
      %v3646 = vsel %vm3638, %v3571, %v3573
      %v3647 = vsel %vm3638, %v3575, %v3577
      %v3648 = vsel %vm3638, %v3579, %v3581
      %v3649 = vsel %vm3638, %v3583, %v3585
      %v3650 = vsel %vm3638, %v3587, %v3589
      %v3651 = vsel %vm3638, %v3591, %v3593
      %v3652 = vsel %vm3638, %v3595, %v3597
      %v3653 = vsel %vm3638, %v3599, %v3601
      %v3654 = vsel %vm3638, %v3603, %v3605
      %v3655 = vsel %vm3638, %v3607, %v3609
      %v3656 = vsel %vm3638, %v3611, %v3613
      %v3657 = vsel %vm3638, %v3615, %v3617
      %v3658 = vsel %vm3638, %v3619, %v3621
      %v3659 = vsel %vm3638, %v3623, %v3625
      %v3660 = vsel %vm3638, %v3627, %v3629
      %v3661 = vsel %vm3638, %v3631, %v3633
      %v3662 = vsel %vm3638, %v3635, %v3637
      %3687 = vmatprep.subr.bf16.mxu0 0
      %3688 = vmatpush1.bf16.msra.mxu0 %v3639
      %3689 = vmatprep.subr.bf16.mxu0 0
      %3690 = vmatpush1.bf16.msra.mxu0 %v3640
      %3691 = vmatprep.subr.bf16.mxu0 0
      %3692 = vmatpush1.bf16.msra.mxu0 %v3641
      %3693 = vmatprep.subr.bf16.mxu0 0
      %3694 = vmatpush1.bf16.msra.mxu0 %v3642
      %3695 = vmatprep.subr.bf16.mxu0 0
      %3696 = vmatpush1.bf16.msra.mxu0 %v3643
      %3697 = vmatprep.subr.bf16.mxu0 0
      %3698 = vmatpush1.bf16.msra.mxu0 %v3644
      %3699 = vmatprep.subr.bf16.mxu0 0
      %3700 = vmatpush1.bf16.msra.mxu0 %v3645
      %3701 = vmatprep.subr.bf16.mxu0 0
      %3702 = vmatpush1.bf16.msra.mxu0 %v3646
      %3703 = vmatprep.subr.bf16.mxu0 0
      %3704 = vmatpush1.bf16.msra.mxu0 %v3647
      %3705 = vmatprep.subr.bf16.mxu0 0
      %3706 = vmatpush1.bf16.msra.mxu0 %v3648
      %3707 = vmatprep.subr.bf16.mxu0 0
      %3708 = vmatpush1.bf16.msra.mxu0 %v3649
      %3709 = vmatprep.subr.bf16.mxu0 0
      %3710 = vmatpush1.bf16.msra.mxu0 %v3650
      %3711 = vmatprep.subr.bf16.mxu0 0
      %3712 = vmatpush1.bf16.msra.mxu0 %v3651
      %3713 = vmatprep.subr.bf16.mxu0 0
      %3714 = vmatpush1.bf16.msra.mxu0 %v3652
      %3715 = vmatprep.subr.bf16.mxu0 0
      %3716 = vmatpush1.bf16.msra.mxu0 %v3653
      %3717 = vmatprep.subr.bf16.mxu0 0
      %3718 = vmatpush1.bf16.msra.mxu0 %v3654
      %3719 = vmatprep.mubr.bf16.mxu0 %v3531
      %3720 = vmatmul.mubr.bf16.gmra.mrb[0].mxu0 %v3530
      %v3721 = vpop.f32.mrb[0].mxu0
      %v3722 = vadd.f32 0.0, %v3721
      %v3723 = vpop.f32.mrb[0].mxu0
      %v3724 = vpop.f32.mrb[0].mxu0
      %v3725 = vadd.f32 0.0, %v3724
      %v3726 = vpop.f32.mrb[0].mxu0
      %3727 = vmatprep.mubr.bf16.mxu0 %v3534
      %3728 = vmatmul.mubr.bf16.gmra.mrb[0].mxu0 %v3533
      %v3729 = vpop.f32.mrb[0].mxu0
      %v3730 = vadd.f32 0.0, %v3729
      %v3731 = vpop.f32.mrb[0].mxu0
      %v3732 = vpop.f32.mrb[0].mxu0
      %v3733 = vadd.f32 0.0, %v3732
      %v3734 = vpop.f32.mrb[0].mxu0
      %3735 = vdwg.mxu0
      %3736 = vmatprep.subr.bf16.mxu0 0
      %3737 = vmatpush1.bf16.msra.mxu0 %v3655
      %3738 = vmatprep.subr.bf16.mxu0 0
      %3739 = vmatpush1.bf16.msra.mxu0 %v3656
      %3740 = vmatprep.subr.bf16.mxu0 0
      %3741 = vmatpush1.bf16.msra.mxu0 %v3657
      %3742 = vmatprep.subr.bf16.mxu0 0
      %3743 = vmatpush1.bf16.msra.mxu0 %v3658
      %3744 = vmatprep.subr.bf16.mxu0 0
      %3745 = vmatpush1.bf16.msra.mxu0 %v3659
      %3746 = vmatprep.subr.bf16.mxu0 0
      %3747 = vmatpush1.bf16.msra.mxu0 %v3660
      %3748 = vmatprep.subr.bf16.mxu0 0
      %3749 = vmatpush1.bf16.msra.mxu0 %v3661
      %3750 = vmatprep.subr.bf16.mxu0 0
      %3751 = vmatpush1.bf16.msra.mxu0 %v3662
      %3752 = vmatprep.subr.bf16.mxu0 0
      %3753 = vmatpush1.bf16.msra.mxu0 0
      %3754 = vmatprep.subr.bf16.mxu0 0
      %3755 = vmatpush1.bf16.msra.mxu0 0
      %3756 = vmatprep.subr.bf16.mxu0 0
      %3757 = vmatpush1.bf16.msra.mxu0 0
      %3758 = vmatprep.subr.bf16.mxu0 0
      %3759 = vmatpush1.bf16.msra.mxu0 0
      %3760 = vmatprep.subr.bf16.mxu0 0
      %3761 = vmatpush1.bf16.msra.mxu0 0
      %3762 = vmatprep.subr.bf16.mxu0 0
      %3763 = vmatpush1.bf16.msra.mxu0 0
      %3764 = vmatprep.subr.bf16.mxu0 0
      %3765 = vmatpush1.bf16.msra.mxu0 0
      %3766 = vmatprep.subr.bf16.mxu0 0
      %3767 = vmatpush1.bf16.msra.mxu0 0
      %3768 = vmatprep.mubr.bf16.mxu0 0
      %3769 = vmatmul.mubr.bf16.gmra.mrb[0].mxu0 %v3532
      %v3770 = vpop.f32.mrb[0].mxu0
      %v3771 = vadd.f32 %v3722, %v3770
      %v3772 = vpop.f32.mrb[0].mxu0
      %v3773 = vpop.f32.mrb[0].mxu0
      %v3774 = vadd.f32 %v3725, %v3773
      %v3775 = vpop.f32.mrb[0].mxu0
      %3776 = vmatprep.mubr.bf16.mxu0 0
      %3777 = vmatmul.mubr.bf16.gmra.mrb[0].mxu0 %v3535
      %v3778 = vpop.f32.mrb[0].mxu0
      %v3779 = vadd.f32 %v3730, %v3778
      %v3780 = vpop.f32.mrb[0].mxu0
      %v3781 = vpop.f32.mrb[0].mxu0
      %v3782 = vadd.f32 %v3733, %v3781
      %v3783 = vpop.f32.mrb[0].mxu0
      %3784 = vdwg.mxu0
      %v3785 = vadd.f32 %v3488, %v3771
      %v3786 = vadd.f32 %v3489, %v3774
      %v3787 = vadd.f32 %v3490, %v3779
      %v3788 = vadd.f32 %v3491, %v3782
      %3789 = vrot.lane.b32.xlu0 %v1710, 64
      %v3790 = vpop.permute.xlu0 %3789
      %3791 = vrot.lane.b32.xlu0 %v1711, 64
      %v3792 = vpop.permute.xlu0 %3791
      %3793 = vrot.lane.b32.xlu0 %v1712, 64
      %v3794 = vpop.permute.xlu0 %3793
      %3795 = vrot.lane.b32.xlu0 %v1713, 64
      %v3796 = vpop.permute.xlu0 %3795
      %3797 = vrot.lane.b32.xlu0 %v1714, 64
      %v3798 = vpop.permute.xlu0 %3797
      %3799 = vrot.lane.b32.xlu0 %v1715, 64
      %v3800 = vpop.permute.xlu0 %3799
      %3801 = vrot.lane.b32.xlu0 %v1716, 64
      %v3802 = vpop.permute.xlu0 %3801
      %3803 = vrot.lane.b32.xlu0 %v1717, 64
      %v3804 = vpop.permute.xlu0 %3803
      %3805 = vrot.lane.b32.xlu0 %v1718, 64
      %v3806 = vpop.permute.xlu0 %3805
      %3807 = vrot.lane.b32.xlu0 %v1719, 64
      %v3808 = vpop.permute.xlu0 %3807
      %3809 = vrot.lane.b32.xlu0 %v1720, 64
      %v3810 = vpop.permute.xlu0 %3809
      %3811 = vrot.lane.b32.xlu0 %v1721, 64
      %v3812 = vpop.permute.xlu0 %3811
      %3813 = vrot.lane.b32.xlu0 %v1722, 64
      %v3814 = vpop.permute.xlu0 %3813
      %3815 = vrot.lane.b32.xlu0 %v1723, 64
      %v3816 = vpop.permute.xlu0 %3815
      %3817 = vrot.lane.b32.xlu0 %v1724, 64
      %v3818 = vpop.permute.xlu0 %3817
      %3819 = vrot.lane.b32.xlu0 %v1725, 64
      %v3820 = vpop.permute.xlu0 %3819
      %3821 = vrot.lane.b32.xlu0 %v1726, 64
      %v3822 = vpop.permute.xlu0 %3821
      %3823 = vrot.lane.b32.xlu0 %v1727, 64
      %v3824 = vpop.permute.xlu0 %3823
      %3825 = vrot.lane.b32.xlu0 %v1728, 64
      %v3826 = vpop.permute.xlu0 %3825
      %3827 = vrot.lane.b32.xlu0 %v1729, 64
      %v3828 = vpop.permute.xlu0 %3827
      %3829 = vrot.lane.b32.xlu0 %v1730, 64
      %v3830 = vpop.permute.xlu0 %3829
      %3831 = vrot.lane.b32.xlu0 %v1731, 64
      %v3832 = vpop.permute.xlu0 %3831
      %3833 = vrot.lane.b32.xlu0 %v1732, 64
      %v3834 = vpop.permute.xlu0 %3833
      %3835 = vrot.lane.b32.xlu0 %v1733, 64
      %v3836 = vpop.permute.xlu0 %3835
      %3837 = vrot.lane.b32.xlu0 %v1734, 64
      %v3838 = vpop.permute.xlu0 %3837
      %3839 = vrot.lane.b32.xlu0 %v1735, 64
      %v3840 = vpop.permute.xlu0 %3839
      %3841 = vrot.lane.b32.xlu0 %v1736, 64
      %v3842 = vpop.permute.xlu0 %3841
      %3843 = vrot.lane.b32.xlu0 %v1737, 64
      %v3844 = vpop.permute.xlu0 %3843
      %3845 = vrot.lane.b32.xlu0 %v1738, 64
      %v3846 = vpop.permute.xlu0 %3845
      %3847 = vrot.lane.b32.xlu0 %v1739, 64
      %v3848 = vpop.permute.xlu0 %3847
      %3849 = vrot.lane.b32.xlu0 %v1740, 64
      %v3850 = vpop.permute.xlu0 %3849
      %3851 = vrot.lane.b32.xlu0 %v1741, 64
      %v3852 = vpop.permute.xlu0 %3851
      %3853 = vrot.lane.b32.xlu0 %v1742, 64
      %v3854 = vpop.permute.xlu0 %3853
      %3855 = vrot.lane.b32.xlu0 %v1743, 64
      %v3856 = vpop.permute.xlu0 %3855
      %3857 = vrot.lane.b32.xlu0 %v1744, 64
      %v3858 = vpop.permute.xlu0 %3857
      %3859 = vrot.lane.b32.xlu0 %v1745, 64
      %v3860 = vpop.permute.xlu0 %3859
      %3861 = vrot.lane.b32.xlu0 %v1746, 64
      %v3862 = vpop.permute.xlu0 %3861
      %3863 = vrot.lane.b32.xlu0 %v1747, 64
      %v3864 = vpop.permute.xlu0 %3863
      %3865 = vrot.lane.b32.xlu0 %v1748, 64
      %v3866 = vpop.permute.xlu0 %3865
      %3867 = vrot.lane.b32.xlu0 %v1749, 64
      %v3868 = vpop.permute.xlu0 %3867
      %3869 = vrot.lane.b32.xlu0 %v1750, 64
      %v3870 = vpop.permute.xlu0 %3869
      %3871 = vrot.lane.b32.xlu0 %v1751, 64
      %v3872 = vpop.permute.xlu0 %3871
      %3873 = vrot.lane.b32.xlu0 %v1752, 64
      %v3874 = vpop.permute.xlu0 %3873
      %3875 = vrot.lane.b32.xlu0 %v1753, 64
      %v3876 = vpop.permute.xlu0 %3875
      %3877 = vrot.lane.b32.xlu0 %v1754, 64
      %v3878 = vpop.permute.xlu0 %3877
      %3879 = vrot.lane.b32.xlu0 %v1755, 64
      %v3880 = vpop.permute.xlu0 %3879
      %3881 = vrot.lane.b32.xlu0 %v1756, 64
      %v3882 = vpop.permute.xlu0 %3881
      %3883 = vrot.lane.b32.xlu0 %v1757, 64
      %v3884 = vpop.permute.xlu0 %3883
      %v3885 = vsel %vm3638, %v3790, %v3792
      %v3886 = vsel %vm3638, %v3794, %v3796
      %v3887 = vsel %vm3638, %v3798, %v3800
      %v3888 = vsel %vm3638, %v3802, %v3804
      %v3889 = vsel %vm3638, %v3806, %v3808
      %v3890 = vsel %vm3638, %v3810, %v3812
      %v3891 = vsel %vm3638, %v3814, %v3816
      %v3892 = vsel %vm3638, %v3818, %v3820
      %v3893 = vsel %vm3638, %v3822, %v3824
      %v3894 = vsel %vm3638, %v3826, %v3828
      %v3895 = vsel %vm3638, %v3830, %v3832
      %v3896 = vsel %vm3638, %v3834, %v3836
      %v3897 = vsel %vm3638, %v3838, %v3840
      %v3898 = vsel %vm3638, %v3842, %v3844
      %v3899 = vsel %vm3638, %v3846, %v3848
      %v3900 = vsel %vm3638, %v3850, %v3852
      %v3901 = vsel %vm3638, %v3854, %v3856
      %v3902 = vsel %vm3638, %v3858, %v3860
      %v3903 = vsel %vm3638, %v3862, %v3864
      %v3904 = vsel %vm3638, %v3866, %v3868
      %v3905 = vsel %vm3638, %v3870, %v3872
      %v3906 = vsel %vm3638, %v3874, %v3876
      %v3907 = vsel %vm3638, %v3878, %v3880
      %v3908 = vsel %vm3638, %v3882, %v3884
      %3933 = vmatprep.subr.bf16.mxu0 0
      %3934 = vmatpush1.bf16.msra.mxu0 %v3885
      %3935 = vmatprep.subr.bf16.mxu0 0
      %3936 = vmatpush1.bf16.msra.mxu0 %v3886
      %3937 = vmatprep.subr.bf16.mxu0 0
      %3938 = vmatpush1.bf16.msra.mxu0 %v3887
      %3939 = vmatprep.subr.bf16.mxu0 0
      %3940 = vmatpush1.bf16.msra.mxu0 %v3888
      %3941 = vmatprep.subr.bf16.mxu0 0
      %3942 = vmatpush1.bf16.msra.mxu0 %v3889
      %3943 = vmatprep.subr.bf16.mxu0 0
      %3944 = vmatpush1.bf16.msra.mxu0 %v3890
      %3945 = vmatprep.subr.bf16.mxu0 0
      %3946 = vmatpush1.bf16.msra.mxu0 %v3891
      %3947 = vmatprep.subr.bf16.mxu0 0
      %3948 = vmatpush1.bf16.msra.mxu0 %v3892
      %3949 = vmatprep.subr.bf16.mxu0 0
      %3950 = vmatpush1.bf16.msra.mxu0 %v3893
      %3951 = vmatprep.subr.bf16.mxu0 0
      %3952 = vmatpush1.bf16.msra.mxu0 %v3894
      %3953 = vmatprep.subr.bf16.mxu0 0
      %3954 = vmatpush1.bf16.msra.mxu0 %v3895
      %3955 = vmatprep.subr.bf16.mxu0 0
      %3956 = vmatpush1.bf16.msra.mxu0 %v3896
      %3957 = vmatprep.subr.bf16.mxu0 0
      %3958 = vmatpush1.bf16.msra.mxu0 %v3897
      %3959 = vmatprep.subr.bf16.mxu0 0
      %3960 = vmatpush1.bf16.msra.mxu0 %v3898
      %3961 = vmatprep.subr.bf16.mxu0 0
      %3962 = vmatpush1.bf16.msra.mxu0 %v3899
      %3963 = vmatprep.subr.bf16.mxu0 0
      %3964 = vmatpush1.bf16.msra.mxu0 %v3900
      %3965 = vmatprep.mubr.bf16.mxu0 %v3531
      %3966 = vmatmul.mubr.bf16.gmra.mrb[0].mxu0 %v3530
      %v3967 = vpop.f32.mrb[0].mxu0
      %v3968 = vadd.f32 0.0, %v3967
      %v3969 = vpop.f32.mrb[0].mxu0
      %v3970 = vpop.f32.mrb[0].mxu0
      %v3971 = vadd.f32 0.0, %v3970
      %v3972 = vpop.f32.mrb[0].mxu0
      %3973 = vmatprep.mubr.bf16.mxu0 %v3534
      %3974 = vmatmul.mubr.bf16.gmra.mrb[0].mxu0 %v3533
      %v3975 = vpop.f32.mrb[0].mxu0
      %v3976 = vadd.f32 0.0, %v3975
      %v3977 = vpop.f32.mrb[0].mxu0
      %v3978 = vpop.f32.mrb[0].mxu0
      %v3979 = vadd.f32 0.0, %v3978
      %v3980 = vpop.f32.mrb[0].mxu0
      %3981 = vdwg.mxu0
      %3982 = vmatprep.subr.bf16.mxu0 0
      %3983 = vmatpush1.bf16.msra.mxu0 %v3901
      %3984 = vmatprep.subr.bf16.mxu0 0
      %3985 = vmatpush1.bf16.msra.mxu0 %v3902
      %3986 = vmatprep.subr.bf16.mxu0 0
      %3987 = vmatpush1.bf16.msra.mxu0 %v3903
      %3988 = vmatprep.subr.bf16.mxu0 0
      %3989 = vmatpush1.bf16.msra.mxu0 %v3904
      %3990 = vmatprep.subr.bf16.mxu0 0
      %3991 = vmatpush1.bf16.msra.mxu0 %v3905
      %3992 = vmatprep.subr.bf16.mxu0 0
      %3993 = vmatpush1.bf16.msra.mxu0 %v3906
      %3994 = vmatprep.subr.bf16.mxu0 0
      %3995 = vmatpush1.bf16.msra.mxu0 %v3907
      %3996 = vmatprep.subr.bf16.mxu0 0
      %3997 = vmatpush1.bf16.msra.mxu0 %v3908
      %3998 = vmatprep.subr.bf16.mxu0 0
      %3999 = vmatpush1.bf16.msra.mxu0 0
      %4000 = vmatprep.subr.bf16.mxu0 0
      %4001 = vmatpush1.bf16.msra.mxu0 0
      %4002 = vmatprep.subr.bf16.mxu0 0
      %4003 = vmatpush1.bf16.msra.mxu0 0
      %4004 = vmatprep.subr.bf16.mxu0 0
      %4005 = vmatpush1.bf16.msra.mxu0 0
      %4006 = vmatprep.subr.bf16.mxu0 0
      %4007 = vmatpush1.bf16.msra.mxu0 0
      %4008 = vmatprep.subr.bf16.mxu0 0
      %4009 = vmatpush1.bf16.msra.mxu0 0
      %4010 = vmatprep.subr.bf16.mxu0 0
      %4011 = vmatpush1.bf16.msra.mxu0 0
      %4012 = vmatprep.subr.bf16.mxu0 0
      %4013 = vmatpush1.bf16.msra.mxu0 0
      %4014 = vmatprep.mubr.bf16.mxu0 0
      %4015 = vmatmul.mubr.bf16.gmra.mrb[0].mxu0 %v3532
      %v4016 = vpop.f32.mrb[0].mxu0
      %v4017 = vadd.f32 %v3968, %v4016
      %v4018 = vpop.f32.mrb[0].mxu0
      %v4019 = vpop.f32.mrb[0].mxu0
      %v4020 = vadd.f32 %v3971, %v4019
      %v4021 = vpop.f32.mrb[0].mxu0
      %4022 = vmatprep.mubr.bf16.mxu0 0
      %4023 = vmatmul.mubr.bf16.gmra.mrb[0].mxu0 %v3535
      %v4024 = vpop.f32.mrb[0].mxu0
      %v4025 = vadd.f32 %v3976, %v4024
      %v4026 = vpop.f32.mrb[0].mxu0
      %v4027 = vpop.f32.mrb[0].mxu0
      %v4028 = vadd.f32 %v3979, %v4027
      %v4029 = vpop.f32.mrb[0].mxu0
      %4030 = vdwg.mxu0
      %v4031 = vadd.f32 %v3785, %v4017
      %v4032 = vadd.f32 %v3786, %v4020
      %v4033 = vadd.f32 %v3787, %v4025
      %v4034 = vadd.f32 %v3788, %v4028
      %v4043 = vunpack.c.l.b16 %v3502
      %v4044 = vunpack.c.h.b16 %v3502
      %v4045 = vunpack.c.l.b16 %v3503
      %v4046 = vunpack.c.l.b16 %v3504
      %v4047 = vunpack.c.h.b16 %v3504
      %v4048 = vunpack.c.l.b16 %v3505
      %v4049 = vunpack.c.l.b16 %v3506
      %v4050 = vunpack.c.h.b16 %v3506
      %v4051 = vunpack.c.l.b16 %v3507
      %v4052 = vunpack.c.l.b16 %v3508
      %v4053 = vunpack.c.h.b16 %v3508
      %v4054 = vunpack.c.l.b16 %v3509
      %v4055 = vpack.c.b16 %v4046, %v4043
      %v4056 = vpack.c.b16 %v4047, %v4044
      %v4057 = vpack.c.b16 %v4048, %v4045
      %v4058 = vpack.c.b16 %v4052, %v4049
      %v4059 = vpack.c.b16 %v4053, %v4050
      %v4060 = vpack.c.b16 %v4054, %v4051
      %4067 = vmatprep.subr.bf16.mxu0 0
      %4068 = vmatpush1.bf16.msra.mxu0 %v3639
      %4069 = vmatprep.subr.bf16.mxu0 0
      %4070 = vmatpush1.bf16.msra.mxu0 %v3640
      %4071 = vmatprep.subr.bf16.mxu0 0
      %4072 = vmatpush1.bf16.msra.mxu0 %v3641
      %4073 = vmatprep.subr.bf16.mxu0 0
      %4074 = vmatpush1.bf16.msra.mxu0 %v3642
      %4075 = vmatprep.subr.bf16.mxu0 0
      %4076 = vmatpush1.bf16.msra.mxu0 %v3643
      %4077 = vmatprep.subr.bf16.mxu0 0
      %4078 = vmatpush1.bf16.msra.mxu0 %v3644
      %4079 = vmatprep.subr.bf16.mxu0 0
      %4080 = vmatpush1.bf16.msra.mxu0 %v3645
      %4081 = vmatprep.subr.bf16.mxu0 0
      %4082 = vmatpush1.bf16.msra.mxu0 %v3646
      %4083 = vmatprep.subr.bf16.mxu0 0
      %4084 = vmatpush1.bf16.msra.mxu0 %v3647
      %4085 = vmatprep.subr.bf16.mxu0 0
      %4086 = vmatpush1.bf16.msra.mxu0 %v3648
      %4087 = vmatprep.subr.bf16.mxu0 0
      %4088 = vmatpush1.bf16.msra.mxu0 %v3649
      %4089 = vmatprep.subr.bf16.mxu0 0
      %4090 = vmatpush1.bf16.msra.mxu0 %v3650
      %4091 = vmatprep.subr.bf16.mxu0 0
      %4092 = vmatpush1.bf16.msra.mxu0 %v3651
      %4093 = vmatprep.subr.bf16.mxu0 0
      %4094 = vmatpush1.bf16.msra.mxu0 %v3652
      %4095 = vmatprep.subr.bf16.mxu0 0
      %4096 = vmatpush1.bf16.msra.mxu0 %v3653
      %4097 = vmatprep.subr.bf16.mxu0 0
      %4098 = vmatpush1.bf16.msra.mxu0 %v3654
      %4099 = vmatprep.mubr.bf16.mxu0 %v4056
      %4100 = vmatmul.mubr.bf16.gmra.mrb[0].mxu0 %v4055
      %v4101 = vpop.f32.mrb[0].mxu0
      %v4102 = vadd.f32 0.0, %v4101
      %v4103 = vpop.f32.mrb[0].mxu0
      %v4104 = vpop.f32.mrb[0].mxu0
      %v4105 = vadd.f32 0.0, %v4104
      %v4106 = vpop.f32.mrb[0].mxu0
      %4107 = vmatprep.mubr.bf16.mxu0 %v4059
      %4108 = vmatmul.mubr.bf16.gmra.mrb[0].mxu0 %v4058
      %v4109 = vpop.f32.mrb[0].mxu0
      %v4110 = vadd.f32 0.0, %v4109
      %v4111 = vpop.f32.mrb[0].mxu0
      %v4112 = vpop.f32.mrb[0].mxu0
      %v4113 = vadd.f32 0.0, %v4112
      %v4114 = vpop.f32.mrb[0].mxu0
      %4115 = vdwg.mxu0
      %4116 = vmatprep.subr.bf16.mxu0 0
      %4117 = vmatpush1.bf16.msra.mxu0 %v3655
      %4118 = vmatprep.subr.bf16.mxu0 0
      %4119 = vmatpush1.bf16.msra.mxu0 %v3656
      %4120 = vmatprep.subr.bf16.mxu0 0
      %4121 = vmatpush1.bf16.msra.mxu0 %v3657
      %4122 = vmatprep.subr.bf16.mxu0 0
      %4123 = vmatpush1.bf16.msra.mxu0 %v3658
      %4124 = vmatprep.subr.bf16.mxu0 0
      %4125 = vmatpush1.bf16.msra.mxu0 %v3659
      %4126 = vmatprep.subr.bf16.mxu0 0
      %4127 = vmatpush1.bf16.msra.mxu0 %v3660
      %4128 = vmatprep.subr.bf16.mxu0 0
      %4129 = vmatpush1.bf16.msra.mxu0 %v3661
      %4130 = vmatprep.subr.bf16.mxu0 0
      %4131 = vmatpush1.bf16.msra.mxu0 %v3662
      %4132 = vmatprep.subr.bf16.mxu0 0
      %4133 = vmatpush1.bf16.msra.mxu0 0
      %4134 = vmatprep.subr.bf16.mxu0 0
      %4135 = vmatpush1.bf16.msra.mxu0 0
      %4136 = vmatprep.subr.bf16.mxu0 0
      %4137 = vmatpush1.bf16.msra.mxu0 0
      %4138 = vmatprep.subr.bf16.mxu0 0
      %4139 = vmatpush1.bf16.msra.mxu0 0
      %4140 = vmatprep.subr.bf16.mxu0 0
      %4141 = vmatpush1.bf16.msra.mxu0 0
      %4142 = vmatprep.subr.bf16.mxu0 0
      %4143 = vmatpush1.bf16.msra.mxu0 0
      %4144 = vmatprep.subr.bf16.mxu0 0
      %4145 = vmatpush1.bf16.msra.mxu0 0
      %4146 = vmatprep.subr.bf16.mxu0 0
      %4147 = vmatpush1.bf16.msra.mxu0 0
      %4148 = vmatprep.mubr.bf16.mxu0 0
      %4149 = vmatmul.mubr.bf16.gmra.mrb[0].mxu0 %v4057
      %v4150 = vpop.f32.mrb[0].mxu0
      %v4151 = vadd.f32 %v4102, %v4150
      %v4152 = vpop.f32.mrb[0].mxu0
      %v4153 = vpop.f32.mrb[0].mxu0
      %v4154 = vadd.f32 %v4105, %v4153
      %v4155 = vpop.f32.mrb[0].mxu0
      %4156 = vmatprep.mubr.bf16.mxu0 0
      %4157 = vmatmul.mubr.bf16.gmra.mrb[0].mxu0 %v4060
      %v4158 = vpop.f32.mrb[0].mxu0
      %v4159 = vadd.f32 %v4110, %v4158
      %v4160 = vpop.f32.mrb[0].mxu0
      %v4161 = vpop.f32.mrb[0].mxu0
      %v4162 = vadd.f32 %v4113, %v4161
      %v4163 = vpop.f32.mrb[0].mxu0
      %4164 = vdwg.mxu0
      %v4165 = vadd.f32 %v4031, %v4151
      %v4166 = vadd.f32 %v4032, %v4154
      %v4167 = vadd.f32 %v4033, %v4159
      %v4168 = vadd.f32 %v4034, %v4162
      %s4169 = scalar_lea.vmem %s2, 240
      %v4170 = vld [vmem:[%s4169] sm:$0xff]
      %v4171 = vld [vmem:[%s4169 + $0x8] sm:$0xf]
      %v4172 = vld [vmem:[%s4169 + $0xc] sm:$0xff]
      %v4173 = vld [vmem:[%s4169 + $0x14] sm:$0xf]
      %v4174 = vld [vmem:[%s4169 + $0x18] sm:$0xff]
      %v4175 = vld [vmem:[%s4169 + $0x20] sm:$0xf]
      %v4176 = vld [vmem:[%s4169 + $0x24] sm:$0xff]
      %v4177 = vld [vmem:[%s4169 + $0x2c] sm:$0xf]
      %s4178 = scalar_lea.vmem %s3, 240
      %v4179 = vld [vmem:[%s4178] sm:$0xff]
      %v4180 = vld [vmem:[%s4178 + $0x8] sm:$0xf]
      %v4181 = vld [vmem:[%s4178 + $0xc] sm:$0xff]
      %v4182 = vld [vmem:[%s4178 + $0x14] sm:$0xf]
      %v4183 = vld [vmem:[%s4178 + $0x18] sm:$0xff]
      %v4184 = vld [vmem:[%s4178 + $0x20] sm:$0xf]
      %v4185 = vld [vmem:[%s4178 + $0x24] sm:$0xff]
      %v4186 = vld [vmem:[%s4178 + $0x2c] sm:$0xf]
      %v4195 = vunpack.c.l.b16 %v4170
      %v4196 = vunpack.c.h.b16 %v4170
      %v4197 = vunpack.c.l.b16 %v4171
      %v4198 = vunpack.c.l.b16 %v4172
      %v4199 = vunpack.c.h.b16 %v4172
      %v4200 = vunpack.c.l.b16 %v4173
      %v4201 = vunpack.c.l.b16 %v4174
      %v4202 = vunpack.c.h.b16 %v4174
      %v4203 = vunpack.c.l.b16 %v4175
      %v4204 = vunpack.c.l.b16 %v4176
      %v4205 = vunpack.c.h.b16 %v4176
      %v4206 = vunpack.c.l.b16 %v4177
      %v4207 = vpack.c.b16 %v4198, %v4195
      %v4208 = vpack.c.b16 %v4199, %v4196
      %v4209 = vpack.c.b16 %v4200, %v4197
      %v4210 = vpack.c.b16 %v4204, %v4201
      %v4211 = vpack.c.b16 %v4205, %v4202
      %v4212 = vpack.c.b16 %v4206, %v4203
      %4219 = vrot.lane.b32.xlu0 %v1271, 48
      %v4220 = vpop.permute.xlu0 %4219
      %4221 = vrot.lane.b32.xlu0 %v1272, 48
      %v4222 = vpop.permute.xlu0 %4221
      %4223 = vrot.lane.b32.xlu0 %v1273, 48
      %v4224 = vpop.permute.xlu0 %4223
      %4225 = vrot.lane.b32.xlu0 %v1274, 48
      %v4226 = vpop.permute.xlu0 %4225
      %4227 = vrot.lane.b32.xlu0 %v1275, 48
      %v4228 = vpop.permute.xlu0 %4227
      %4229 = vrot.lane.b32.xlu0 %v1276, 48
      %v4230 = vpop.permute.xlu0 %4229
      %4231 = vrot.lane.b32.xlu0 %v1277, 48
      %v4232 = vpop.permute.xlu0 %4231
      %4233 = vrot.lane.b32.xlu0 %v1278, 48
      %v4234 = vpop.permute.xlu0 %4233
      %4235 = vrot.lane.b32.xlu0 %v1279, 48
      %v4236 = vpop.permute.xlu0 %4235
      %4237 = vrot.lane.b32.xlu0 %v1280, 48
      %v4238 = vpop.permute.xlu0 %4237
      %4239 = vrot.lane.b32.xlu0 %v1281, 48
      %v4240 = vpop.permute.xlu0 %4239
      %4241 = vrot.lane.b32.xlu0 %v1282, 48
      %v4242 = vpop.permute.xlu0 %4241
      %4243 = vrot.lane.b32.xlu0 %v1283, 48
      %v4244 = vpop.permute.xlu0 %4243
      %4245 = vrot.lane.b32.xlu0 %v1284, 48
      %v4246 = vpop.permute.xlu0 %4245
      %4247 = vrot.lane.b32.xlu0 %v1285, 48
      %v4248 = vpop.permute.xlu0 %4247
      %4249 = vrot.lane.b32.xlu0 %v1286, 48
      %v4250 = vpop.permute.xlu0 %4249
      %4251 = vrot.lane.b32.xlu0 %v1287, 48
      %v4252 = vpop.permute.xlu0 %4251
      %4253 = vrot.lane.b32.xlu0 %v1288, 48
      %v4254 = vpop.permute.xlu0 %4253
      %4255 = vrot.lane.b32.xlu0 %v1289, 48
      %v4256 = vpop.permute.xlu0 %4255
      %4257 = vrot.lane.b32.xlu0 %v1290, 48
      %v4258 = vpop.permute.xlu0 %4257
      %4259 = vrot.lane.b32.xlu0 %v1291, 48
      %v4260 = vpop.permute.xlu0 %4259
      %4261 = vrot.lane.b32.xlu0 %v1292, 48
      %v4262 = vpop.permute.xlu0 %4261
      %4263 = vrot.lane.b32.xlu0 %v1293, 48
      %v4264 = vpop.permute.xlu0 %4263
      %4265 = vrot.lane.b32.xlu0 %v1294, 48
      %v4266 = vpop.permute.xlu0 %4265
      %4267 = vrot.lane.b32.xlu0 %v1295, 48
      %v4268 = vpop.permute.xlu0 %4267
      %4269 = vrot.lane.b32.xlu0 %v1296, 48
      %v4270 = vpop.permute.xlu0 %4269
      %4271 = vrot.lane.b32.xlu0 %v1297, 48
      %v4272 = vpop.permute.xlu0 %4271
      %4273 = vrot.lane.b32.xlu0 %v1298, 48
      %v4274 = vpop.permute.xlu0 %4273
      %4275 = vrot.lane.b32.xlu0 %v1299, 48
      %v4276 = vpop.permute.xlu0 %4275
      %4277 = vrot.lane.b32.xlu0 %v1300, 48
      %v4278 = vpop.permute.xlu0 %4277
      %4279 = vrot.lane.b32.xlu0 %v1301, 48
      %v4280 = vpop.permute.xlu0 %4279
      %4281 = vrot.lane.b32.xlu0 %v1302, 48
      %v4282 = vpop.permute.xlu0 %4281
      %4283 = vrot.lane.b32.xlu0 %v1303, 48
      %v4284 = vpop.permute.xlu0 %4283
      %4285 = vrot.lane.b32.xlu0 %v1304, 48
      %v4286 = vpop.permute.xlu0 %4285
      %4287 = vrot.lane.b32.xlu0 %v1305, 48
      %v4288 = vpop.permute.xlu0 %4287
      %4289 = vrot.lane.b32.xlu0 %v1306, 48
      %v4290 = vpop.permute.xlu0 %4289
      %4291 = vrot.lane.b32.xlu0 %v1307, 48
      %v4292 = vpop.permute.xlu0 %4291
      %4293 = vrot.lane.b32.xlu0 %v1308, 48
      %v4294 = vpop.permute.xlu0 %4293
      %4295 = vrot.lane.b32.xlu0 %v1309, 48
      %v4296 = vpop.permute.xlu0 %4295
      %4297 = vrot.lane.b32.xlu0 %v1310, 48
      %v4298 = vpop.permute.xlu0 %4297
      %4299 = vrot.lane.b32.xlu0 %v1311, 48
      %v4300 = vpop.permute.xlu0 %4299
      %4301 = vrot.lane.b32.xlu0 %v1312, 48
      %v4302 = vpop.permute.xlu0 %4301
      %4303 = vrot.lane.b32.xlu0 %v1313, 48
      %v4304 = vpop.permute.xlu0 %4303
      %4305 = vrot.lane.b32.xlu0 %v1314, 48
      %v4306 = vpop.permute.xlu0 %4305
      %4307 = vrot.lane.b32.xlu0 %v1315, 48
      %v4308 = vpop.permute.xlu0 %4307
      %4309 = vrot.lane.b32.xlu0 %v1316, 48
      %v4310 = vpop.permute.xlu0 %4309
      %4311 = vrot.lane.b32.xlu0 %v1317, 48
      %v4312 = vpop.permute.xlu0 %4311
      %4313 = vrot.lane.b32.xlu0 %v1318, 48
      %v4314 = vpop.permute.xlu0 %4313
      %vm4315 = vcmask 392192
      %v4316 = vsel %vm4315, %v4220, %v4222
      %v4317 = vsel %vm4315, %v4224, %v4226
      %v4318 = vsel %vm4315, %v4228, %v4230
      %v4319 = vsel %vm4315, %v4232, %v4234
      %v4320 = vsel %vm4315, %v4236, %v4238
      %v4321 = vsel %vm4315, %v4240, %v4242
      %v4322 = vsel %vm4315, %v4244, %v4246
      %v4323 = vsel %vm4315, %v4248, %v4250
      %v4324 = vsel %vm4315, %v4252, %v4254
      %v4325 = vsel %vm4315, %v4256, %v4258
      %v4326 = vsel %vm4315, %v4260, %v4262
      %v4327 = vsel %vm4315, %v4264, %v4266
      %v4328 = vsel %vm4315, %v4268, %v4270
      %v4329 = vsel %vm4315, %v4272, %v4274
      %v4330 = vsel %vm4315, %v4276, %v4278
      %v4331 = vsel %vm4315, %v4280, %v4282
      %v4332 = vsel %vm4315, %v4284, %v4286
      %v4333 = vsel %vm4315, %v4288, %v4290
      %v4334 = vsel %vm4315, %v4292, %v4294
      %v4335 = vsel %vm4315, %v4296, %v4298
      %v4336 = vsel %vm4315, %v4300, %v4302
      %v4337 = vsel %vm4315, %v4304, %v4306
      %v4338 = vsel %vm4315, %v4308, %v4310
      %v4339 = vsel %vm4315, %v4312, %v4314
      %4364 = vmatprep.subr.bf16.mxu0 0
      %4365 = vmatpush1.bf16.msra.mxu0 %v4316
      %4366 = vmatprep.subr.bf16.mxu0 0
      %4367 = vmatpush1.bf16.msra.mxu0 %v4317
      %4368 = vmatprep.subr.bf16.mxu0 0
      %4369 = vmatpush1.bf16.msra.mxu0 %v4318
      %4370 = vmatprep.subr.bf16.mxu0 0
      %4371 = vmatpush1.bf16.msra.mxu0 %v4319
      %4372 = vmatprep.subr.bf16.mxu0 0
      %4373 = vmatpush1.bf16.msra.mxu0 %v4320
      %4374 = vmatprep.subr.bf16.mxu0 0
      %4375 = vmatpush1.bf16.msra.mxu0 %v4321
      %4376 = vmatprep.subr.bf16.mxu0 0
      %4377 = vmatpush1.bf16.msra.mxu0 %v4322
      %4378 = vmatprep.subr.bf16.mxu0 0
      %4379 = vmatpush1.bf16.msra.mxu0 %v4323
      %4380 = vmatprep.subr.bf16.mxu0 0
      %4381 = vmatpush1.bf16.msra.mxu0 %v4324
      %4382 = vmatprep.subr.bf16.mxu0 0
      %4383 = vmatpush1.bf16.msra.mxu0 %v4325
      %4384 = vmatprep.subr.bf16.mxu0 0
      %4385 = vmatpush1.bf16.msra.mxu0 %v4326
      %4386 = vmatprep.subr.bf16.mxu0 0
      %4387 = vmatpush1.bf16.msra.mxu0 %v4327
      %4388 = vmatprep.subr.bf16.mxu0 0
      %4389 = vmatpush1.bf16.msra.mxu0 %v4328
      %4390 = vmatprep.subr.bf16.mxu0 0
      %4391 = vmatpush1.bf16.msra.mxu0 %v4329
      %4392 = vmatprep.subr.bf16.mxu0 0
      %4393 = vmatpush1.bf16.msra.mxu0 %v4330
      %4394 = vmatprep.subr.bf16.mxu0 0
      %4395 = vmatpush1.bf16.msra.mxu0 %v4331
      %4396 = vmatprep.mubr.bf16.mxu0 %v4208
      %4397 = vmatmul.mubr.bf16.gmra.mrb[0].mxu0 %v4207
      %v4398 = vpop.f32.mrb[0].mxu0
      %v4399 = vadd.f32 0.0, %v4398
      %v4400 = vpop.f32.mrb[0].mxu0
      %v4401 = vpop.f32.mrb[0].mxu0
      %v4402 = vadd.f32 0.0, %v4401
      %v4403 = vpop.f32.mrb[0].mxu0
      %4404 = vmatprep.mubr.bf16.mxu0 %v4211
      %4405 = vmatmul.mubr.bf16.gmra.mrb[0].mxu0 %v4210
      %v4406 = vpop.f32.mrb[0].mxu0
      %v4407 = vadd.f32 0.0, %v4406
      %v4408 = vpop.f32.mrb[0].mxu0
      %v4409 = vpop.f32.mrb[0].mxu0
      %v4410 = vadd.f32 0.0, %v4409
      %v4411 = vpop.f32.mrb[0].mxu0
      %4412 = vdwg.mxu0
      %4413 = vmatprep.subr.bf16.mxu0 0
      %4414 = vmatpush1.bf16.msra.mxu0 %v4332
      %4415 = vmatprep.subr.bf16.mxu0 0
      %4416 = vmatpush1.bf16.msra.mxu0 %v4333
      %4417 = vmatprep.subr.bf16.mxu0 0
      %4418 = vmatpush1.bf16.msra.mxu0 %v4334
      %4419 = vmatprep.subr.bf16.mxu0 0
      %4420 = vmatpush1.bf16.msra.mxu0 %v4335
      %4421 = vmatprep.subr.bf16.mxu0 0
      %4422 = vmatpush1.bf16.msra.mxu0 %v4336
      %4423 = vmatprep.subr.bf16.mxu0 0
      %4424 = vmatpush1.bf16.msra.mxu0 %v4337
      %4425 = vmatprep.subr.bf16.mxu0 0
      %4426 = vmatpush1.bf16.msra.mxu0 %v4338
      %4427 = vmatprep.subr.bf16.mxu0 0
      %4428 = vmatpush1.bf16.msra.mxu0 %v4339
      %4429 = vmatprep.subr.bf16.mxu0 0
      %4430 = vmatpush1.bf16.msra.mxu0 0
      %4431 = vmatprep.subr.bf16.mxu0 0
      %4432 = vmatpush1.bf16.msra.mxu0 0
      %4433 = vmatprep.subr.bf16.mxu0 0
      %4434 = vmatpush1.bf16.msra.mxu0 0
      %4435 = vmatprep.subr.bf16.mxu0 0
      %4436 = vmatpush1.bf16.msra.mxu0 0
      %4437 = vmatprep.subr.bf16.mxu0 0
      %4438 = vmatpush1.bf16.msra.mxu0 0
      %4439 = vmatprep.subr.bf16.mxu0 0
      %4440 = vmatpush1.bf16.msra.mxu0 0
      %4441 = vmatprep.subr.bf16.mxu0 0
      %4442 = vmatpush1.bf16.msra.mxu0 0
      %4443 = vmatprep.subr.bf16.mxu0 0
      %4444 = vmatpush1.bf16.msra.mxu0 0
      %4445 = vmatprep.mubr.bf16.mxu0 0
      %4446 = vmatmul.mubr.bf16.gmra.mrb[0].mxu0 %v4209
      %v4447 = vpop.f32.mrb[0].mxu0
      %v4448 = vadd.f32 %v4399, %v4447
      %v4449 = vpop.f32.mrb[0].mxu0
      %v4450 = vpop.f32.mrb[0].mxu0
      %v4451 = vadd.f32 %v4402, %v4450
      %v4452 = vpop.f32.mrb[0].mxu0
      %4453 = vmatprep.mubr.bf16.mxu0 0
      %4454 = vmatmul.mubr.bf16.gmra.mrb[0].mxu0 %v4212
      %v4455 = vpop.f32.mrb[0].mxu0
      %v4456 = vadd.f32 %v4407, %v4455
      %v4457 = vpop.f32.mrb[0].mxu0
      %v4458 = vpop.f32.mrb[0].mxu0
      %v4459 = vadd.f32 %v4410, %v4458
      %v4460 = vpop.f32.mrb[0].mxu0
      %4461 = vdwg.mxu0
      %v4462 = vadd.f32 %v4165, %v4448
      %v4463 = vadd.f32 %v4166, %v4451
      %v4464 = vadd.f32 %v4167, %v4456
      %v4465 = vadd.f32 %v4168, %v4459
      %4466 = vrot.lane.b32.xlu0 %v1710, 48
      %v4467 = vpop.permute.xlu0 %4466
      %4468 = vrot.lane.b32.xlu0 %v1711, 48
      %v4469 = vpop.permute.xlu0 %4468
      %4470 = vrot.lane.b32.xlu0 %v1712, 48
      %v4471 = vpop.permute.xlu0 %4470
      %4472 = vrot.lane.b32.xlu0 %v1713, 48
      %v4473 = vpop.permute.xlu0 %4472
      %4474 = vrot.lane.b32.xlu0 %v1714, 48
      %v4475 = vpop.permute.xlu0 %4474
      %4476 = vrot.lane.b32.xlu0 %v1715, 48
      %v4477 = vpop.permute.xlu0 %4476
      %4478 = vrot.lane.b32.xlu0 %v1716, 48
      %v4479 = vpop.permute.xlu0 %4478
      %4480 = vrot.lane.b32.xlu0 %v1717, 48
      %v4481 = vpop.permute.xlu0 %4480
      %4482 = vrot.lane.b32.xlu0 %v1718, 48
      %v4483 = vpop.permute.xlu0 %4482
      %4484 = vrot.lane.b32.xlu0 %v1719, 48
      %v4485 = vpop.permute.xlu0 %4484
      %4486 = vrot.lane.b32.xlu0 %v1720, 48
      %v4487 = vpop.permute.xlu0 %4486
      %4488 = vrot.lane.b32.xlu0 %v1721, 48
      %v4489 = vpop.permute.xlu0 %4488
      %4490 = vrot.lane.b32.xlu0 %v1722, 48
      %v4491 = vpop.permute.xlu0 %4490
      %4492 = vrot.lane.b32.xlu0 %v1723, 48
      %v4493 = vpop.permute.xlu0 %4492
      %4494 = vrot.lane.b32.xlu0 %v1724, 48
      %v4495 = vpop.permute.xlu0 %4494
      %4496 = vrot.lane.b32.xlu0 %v1725, 48
      %v4497 = vpop.permute.xlu0 %4496
      %4498 = vrot.lane.b32.xlu0 %v1726, 48
      %v4499 = vpop.permute.xlu0 %4498
      %4500 = vrot.lane.b32.xlu0 %v1727, 48
      %v4501 = vpop.permute.xlu0 %4500
      %4502 = vrot.lane.b32.xlu0 %v1728, 48
      %v4503 = vpop.permute.xlu0 %4502
      %4504 = vrot.lane.b32.xlu0 %v1729, 48
      %v4505 = vpop.permute.xlu0 %4504
      %4506 = vrot.lane.b32.xlu0 %v1730, 48
      %v4507 = vpop.permute.xlu0 %4506
      %4508 = vrot.lane.b32.xlu0 %v1731, 48
      %v4509 = vpop.permute.xlu0 %4508
      %4510 = vrot.lane.b32.xlu0 %v1732, 48
      %v4511 = vpop.permute.xlu0 %4510
      %4512 = vrot.lane.b32.xlu0 %v1733, 48
      %v4513 = vpop.permute.xlu0 %4512
      %4514 = vrot.lane.b32.xlu0 %v1734, 48
      %v4515 = vpop.permute.xlu0 %4514
      %4516 = vrot.lane.b32.xlu0 %v1735, 48
      %v4517 = vpop.permute.xlu0 %4516
      %4518 = vrot.lane.b32.xlu0 %v1736, 48
      %v4519 = vpop.permute.xlu0 %4518
      %4520 = vrot.lane.b32.xlu0 %v1737, 48
      %v4521 = vpop.permute.xlu0 %4520
      %4522 = vrot.lane.b32.xlu0 %v1738, 48
      %v4523 = vpop.permute.xlu0 %4522
      %4524 = vrot.lane.b32.xlu0 %v1739, 48
      %v4525 = vpop.permute.xlu0 %4524
      %4526 = vrot.lane.b32.xlu0 %v1740, 48
      %v4527 = vpop.permute.xlu0 %4526
      %4528 = vrot.lane.b32.xlu0 %v1741, 48
      %v4529 = vpop.permute.xlu0 %4528
      %4530 = vrot.lane.b32.xlu0 %v1742, 48
      %v4531 = vpop.permute.xlu0 %4530
      %4532 = vrot.lane.b32.xlu0 %v1743, 48
      %v4533 = vpop.permute.xlu0 %4532
      %4534 = vrot.lane.b32.xlu0 %v1744, 48
      %v4535 = vpop.permute.xlu0 %4534
      %4536 = vrot.lane.b32.xlu0 %v1745, 48
      %v4537 = vpop.permute.xlu0 %4536
      %4538 = vrot.lane.b32.xlu0 %v1746, 48
      %v4539 = vpop.permute.xlu0 %4538
      %4540 = vrot.lane.b32.xlu0 %v1747, 48
      %v4541 = vpop.permute.xlu0 %4540
      %4542 = vrot.lane.b32.xlu0 %v1748, 48
      %v4543 = vpop.permute.xlu0 %4542
      %4544 = vrot.lane.b32.xlu0 %v1749, 48
      %v4545 = vpop.permute.xlu0 %4544
      %4546 = vrot.lane.b32.xlu0 %v1750, 48
      %v4547 = vpop.permute.xlu0 %4546
      %4548 = vrot.lane.b32.xlu0 %v1751, 48
      %v4549 = vpop.permute.xlu0 %4548
      %4550 = vrot.lane.b32.xlu0 %v1752, 48
      %v4551 = vpop.permute.xlu0 %4550
      %4552 = vrot.lane.b32.xlu0 %v1753, 48
      %v4553 = vpop.permute.xlu0 %4552
      %4554 = vrot.lane.b32.xlu0 %v1754, 48
      %v4555 = vpop.permute.xlu0 %4554
      %4556 = vrot.lane.b32.xlu0 %v1755, 48
      %v4557 = vpop.permute.xlu0 %4556
      %4558 = vrot.lane.b32.xlu0 %v1756, 48
      %v4559 = vpop.permute.xlu0 %4558
      %4560 = vrot.lane.b32.xlu0 %v1757, 48
      %v4561 = vpop.permute.xlu0 %4560
      %v4562 = vsel %vm4315, %v4467, %v4469
      %v4563 = vsel %vm4315, %v4471, %v4473
      %v4564 = vsel %vm4315, %v4475, %v4477
      %v4565 = vsel %vm4315, %v4479, %v4481
      %v4566 = vsel %vm4315, %v4483, %v4485
      %v4567 = vsel %vm4315, %v4487, %v4489
      %v4568 = vsel %vm4315, %v4491, %v4493
      %v4569 = vsel %vm4315, %v4495, %v4497
      %v4570 = vsel %vm4315, %v4499, %v4501
      %v4571 = vsel %vm4315, %v4503, %v4505
      %v4572 = vsel %vm4315, %v4507, %v4509
      %v4573 = vsel %vm4315, %v4511, %v4513
      %v4574 = vsel %vm4315, %v4515, %v4517
      %v4575 = vsel %vm4315, %v4519, %v4521
      %v4576 = vsel %vm4315, %v4523, %v4525
      %v4577 = vsel %vm4315, %v4527, %v4529
      %v4578 = vsel %vm4315, %v4531, %v4533
      %v4579 = vsel %vm4315, %v4535, %v4537
      %v4580 = vsel %vm4315, %v4539, %v4541
      %v4581 = vsel %vm4315, %v4543, %v4545
      %v4582 = vsel %vm4315, %v4547, %v4549
      %v4583 = vsel %vm4315, %v4551, %v4553
      %v4584 = vsel %vm4315, %v4555, %v4557
      %v4585 = vsel %vm4315, %v4559, %v4561
      %4610 = vmatprep.subr.bf16.mxu0 0
      %4611 = vmatpush1.bf16.msra.mxu0 %v4562
      %4612 = vmatprep.subr.bf16.mxu0 0
      %4613 = vmatpush1.bf16.msra.mxu0 %v4563
      %4614 = vmatprep.subr.bf16.mxu0 0
      %4615 = vmatpush1.bf16.msra.mxu0 %v4564
      %4616 = vmatprep.subr.bf16.mxu0 0
      %4617 = vmatpush1.bf16.msra.mxu0 %v4565
      %4618 = vmatprep.subr.bf16.mxu0 0
      %4619 = vmatpush1.bf16.msra.mxu0 %v4566
      %4620 = vmatprep.subr.bf16.mxu0 0
      %4621 = vmatpush1.bf16.msra.mxu0 %v4567
      %4622 = vmatprep.subr.bf16.mxu0 0
      %4623 = vmatpush1.bf16.msra.mxu0 %v4568
      %4624 = vmatprep.subr.bf16.mxu0 0
      %4625 = vmatpush1.bf16.msra.mxu0 %v4569
      %4626 = vmatprep.subr.bf16.mxu0 0
      %4627 = vmatpush1.bf16.msra.mxu0 %v4570
      %4628 = vmatprep.subr.bf16.mxu0 0
      %4629 = vmatpush1.bf16.msra.mxu0 %v4571
      %4630 = vmatprep.subr.bf16.mxu0 0
      %4631 = vmatpush1.bf16.msra.mxu0 %v4572
      %4632 = vmatprep.subr.bf16.mxu0 0
      %4633 = vmatpush1.bf16.msra.mxu0 %v4573
      %4634 = vmatprep.subr.bf16.mxu0 0
      %4635 = vmatpush1.bf16.msra.mxu0 %v4574
      %4636 = vmatprep.subr.bf16.mxu0 0
      %4637 = vmatpush1.bf16.msra.mxu0 %v4575
      %4638 = vmatprep.subr.bf16.mxu0 0
      %4639 = vmatpush1.bf16.msra.mxu0 %v4576
      %4640 = vmatprep.subr.bf16.mxu0 0
      %4641 = vmatpush1.bf16.msra.mxu0 %v4577
      %4642 = vmatprep.mubr.bf16.mxu0 %v4208
      %4643 = vmatmul.mubr.bf16.gmra.mrb[0].mxu0 %v4207
      %v4644 = vpop.f32.mrb[0].mxu0
      %v4645 = vadd.f32 0.0, %v4644
      %v4646 = vpop.f32.mrb[0].mxu0
      %v4647 = vpop.f32.mrb[0].mxu0
      %v4648 = vadd.f32 0.0, %v4647
      %v4649 = vpop.f32.mrb[0].mxu0
      %4650 = vmatprep.mubr.bf16.mxu0 %v4211
      %4651 = vmatmul.mubr.bf16.gmra.mrb[0].mxu0 %v4210
      %v4652 = vpop.f32.mrb[0].mxu0
      %v4653 = vadd.f32 0.0, %v4652
      %v4654 = vpop.f32.mrb[0].mxu0
      %v4655 = vpop.f32.mrb[0].mxu0
      %v4656 = vadd.f32 0.0, %v4655
      %v4657 = vpop.f32.mrb[0].mxu0
      %4658 = vdwg.mxu0
      %4659 = vmatprep.subr.bf16.mxu0 0
      %4660 = vmatpush1.bf16.msra.mxu0 %v4578
      %4661 = vmatprep.subr.bf16.mxu0 0
      %4662 = vmatpush1.bf16.msra.mxu0 %v4579
      %4663 = vmatprep.subr.bf16.mxu0 0
      %4664 = vmatpush1.bf16.msra.mxu0 %v4580
      %4665 = vmatprep.subr.bf16.mxu0 0
      %4666 = vmatpush1.bf16.msra.mxu0 %v4581
      %4667 = vmatprep.subr.bf16.mxu0 0
      %4668 = vmatpush1.bf16.msra.mxu0 %v4582
      %4669 = vmatprep.subr.bf16.mxu0 0
      %4670 = vmatpush1.bf16.msra.mxu0 %v4583
      %4671 = vmatprep.subr.bf16.mxu0 0
      %4672 = vmatpush1.bf16.msra.mxu0 %v4584
      %4673 = vmatprep.subr.bf16.mxu0 0
      %4674 = vmatpush1.bf16.msra.mxu0 %v4585
      %4675 = vmatprep.subr.bf16.mxu0 0
      %4676 = vmatpush1.bf16.msra.mxu0 0
      %4677 = vmatprep.subr.bf16.mxu0 0
      %4678 = vmatpush1.bf16.msra.mxu0 0
      %4679 = vmatprep.subr.bf16.mxu0 0
      %4680 = vmatpush1.bf16.msra.mxu0 0
      %4681 = vmatprep.subr.bf16.mxu0 0
      %4682 = vmatpush1.bf16.msra.mxu0 0
      %4683 = vmatprep.subr.bf16.mxu0 0
      %4684 = vmatpush1.bf16.msra.mxu0 0
      %4685 = vmatprep.subr.bf16.mxu0 0
      %4686 = vmatpush1.bf16.msra.mxu0 0
      %4687 = vmatprep.subr.bf16.mxu0 0
      %4688 = vmatpush1.bf16.msra.mxu0 0
      %4689 = vmatprep.subr.bf16.mxu0 0
      %4690 = vmatpush1.bf16.msra.mxu0 0
      %4691 = vmatprep.mubr.bf16.mxu0 0
      %4692 = vmatmul.mubr.bf16.gmra.mrb[0].mxu0 %v4209
      %v4693 = vpop.f32.mrb[0].mxu0
      %v4694 = vadd.f32 %v4645, %v4693
      %v4695 = vpop.f32.mrb[0].mxu0
      %v4696 = vpop.f32.mrb[0].mxu0
      %v4697 = vadd.f32 %v4648, %v4696
      %v4698 = vpop.f32.mrb[0].mxu0
      %4699 = vmatprep.mubr.bf16.mxu0 0
      %4700 = vmatmul.mubr.bf16.gmra.mrb[0].mxu0 %v4212
      %v4701 = vpop.f32.mrb[0].mxu0
      %v4702 = vadd.f32 %v4653, %v4701
      %v4703 = vpop.f32.mrb[0].mxu0
      %v4704 = vpop.f32.mrb[0].mxu0
      %v4705 = vadd.f32 %v4656, %v4704
      %v4706 = vpop.f32.mrb[0].mxu0
      %4707 = vdwg.mxu0
      %v4708 = vadd.f32 %v4462, %v4694
      %v4709 = vadd.f32 %v4463, %v4697
      %v4710 = vadd.f32 %v4464, %v4702
      %v4711 = vadd.f32 %v4465, %v4705
      %v4720 = vunpack.c.l.b16 %v4179
      %v4721 = vunpack.c.h.b16 %v4179
      %v4722 = vunpack.c.l.b16 %v4180
      %v4723 = vunpack.c.l.b16 %v4181
      %v4724 = vunpack.c.h.b16 %v4181
      %v4725 = vunpack.c.l.b16 %v4182
      %v4726 = vunpack.c.l.b16 %v4183
      %v4727 = vunpack.c.h.b16 %v4183
      %v4728 = vunpack.c.l.b16 %v4184
      %v4729 = vunpack.c.l.b16 %v4185
      %v4730 = vunpack.c.h.b16 %v4185
      %v4731 = vunpack.c.l.b16 %v4186
      %v4732 = vpack.c.b16 %v4723, %v4720
      %v4733 = vpack.c.b16 %v4724, %v4721
      %v4734 = vpack.c.b16 %v4725, %v4722
      %v4735 = vpack.c.b16 %v4729, %v4726
      %v4736 = vpack.c.b16 %v4730, %v4727
      %v4737 = vpack.c.b16 %v4731, %v4728
      %4744 = vmatprep.subr.bf16.mxu0 0
      %4745 = vmatpush1.bf16.msra.mxu0 %v4316
      %4746 = vmatprep.subr.bf16.mxu0 0
      %4747 = vmatpush1.bf16.msra.mxu0 %v4317
      %4748 = vmatprep.subr.bf16.mxu0 0
      %4749 = vmatpush1.bf16.msra.mxu0 %v4318
      %4750 = vmatprep.subr.bf16.mxu0 0
      %4751 = vmatpush1.bf16.msra.mxu0 %v4319
      %4752 = vmatprep.subr.bf16.mxu0 0
      %4753 = vmatpush1.bf16.msra.mxu0 %v4320
      %4754 = vmatprep.subr.bf16.mxu0 0
      %4755 = vmatpush1.bf16.msra.mxu0 %v4321
      %4756 = vmatprep.subr.bf16.mxu0 0
      %4757 = vmatpush1.bf16.msra.mxu0 %v4322
      %4758 = vmatprep.subr.bf16.mxu0 0
      %4759 = vmatpush1.bf16.msra.mxu0 %v4323
      %4760 = vmatprep.subr.bf16.mxu0 0
      %4761 = vmatpush1.bf16.msra.mxu0 %v4324
      %4762 = vmatprep.subr.bf16.mxu0 0
      %4763 = vmatpush1.bf16.msra.mxu0 %v4325
      %4764 = vmatprep.subr.bf16.mxu0 0
      %4765 = vmatpush1.bf16.msra.mxu0 %v4326
      %4766 = vmatprep.subr.bf16.mxu0 0
      %4767 = vmatpush1.bf16.msra.mxu0 %v4327
      %4768 = vmatprep.subr.bf16.mxu0 0
      %4769 = vmatpush1.bf16.msra.mxu0 %v4328
      %4770 = vmatprep.subr.bf16.mxu0 0
      %4771 = vmatpush1.bf16.msra.mxu0 %v4329
      %4772 = vmatprep.subr.bf16.mxu0 0
      %4773 = vmatpush1.bf16.msra.mxu0 %v4330
      %4774 = vmatprep.subr.bf16.mxu0 0
      %4775 = vmatpush1.bf16.msra.mxu0 %v4331
      %4776 = vmatprep.mubr.bf16.mxu0 %v4733
      %4777 = vmatmul.mubr.bf16.gmra.mrb[0].mxu0 %v4732
      %v4778 = vpop.f32.mrb[0].mxu0
      %v4779 = vadd.f32 0.0, %v4778
      %v4780 = vpop.f32.mrb[0].mxu0
      %v4781 = vpop.f32.mrb[0].mxu0
      %v4782 = vadd.f32 0.0, %v4781
      %v4783 = vpop.f32.mrb[0].mxu0
      %4784 = vmatprep.mubr.bf16.mxu0 %v4736
      %4785 = vmatmul.mubr.bf16.gmra.mrb[0].mxu0 %v4735
      %v4786 = vpop.f32.mrb[0].mxu0
      %v4787 = vadd.f32 0.0, %v4786
      %v4788 = vpop.f32.mrb[0].mxu0
      %v4789 = vpop.f32.mrb[0].mxu0
      %v4790 = vadd.f32 0.0, %v4789
      %v4791 = vpop.f32.mrb[0].mxu0
      %4792 = vdwg.mxu0
      %4793 = vmatprep.subr.bf16.mxu0 0
      %4794 = vmatpush1.bf16.msra.mxu0 %v4332
      %4795 = vmatprep.subr.bf16.mxu0 0
      %4796 = vmatpush1.bf16.msra.mxu0 %v4333
      %4797 = vmatprep.subr.bf16.mxu0 0
      %4798 = vmatpush1.bf16.msra.mxu0 %v4334
      %4799 = vmatprep.subr.bf16.mxu0 0
      %4800 = vmatpush1.bf16.msra.mxu0 %v4335
      %4801 = vmatprep.subr.bf16.mxu0 0
      %4802 = vmatpush1.bf16.msra.mxu0 %v4336
      %4803 = vmatprep.subr.bf16.mxu0 0
      %4804 = vmatpush1.bf16.msra.mxu0 %v4337
      %4805 = vmatprep.subr.bf16.mxu0 0
      %4806 = vmatpush1.bf16.msra.mxu0 %v4338
      %4807 = vmatprep.subr.bf16.mxu0 0
      %4808 = vmatpush1.bf16.msra.mxu0 %v4339
      %4809 = vmatprep.subr.bf16.mxu0 0
      %4810 = vmatpush1.bf16.msra.mxu0 0
      %4811 = vmatprep.subr.bf16.mxu0 0
      %4812 = vmatpush1.bf16.msra.mxu0 0
      %4813 = vmatprep.subr.bf16.mxu0 0
      %4814 = vmatpush1.bf16.msra.mxu0 0
      %4815 = vmatprep.subr.bf16.mxu0 0
      %4816 = vmatpush1.bf16.msra.mxu0 0
      %4817 = vmatprep.subr.bf16.mxu0 0
      %4818 = vmatpush1.bf16.msra.mxu0 0
      %4819 = vmatprep.subr.bf16.mxu0 0
      %4820 = vmatpush1.bf16.msra.mxu0 0
      %4821 = vmatprep.subr.bf16.mxu0 0
      %4822 = vmatpush1.bf16.msra.mxu0 0
      %4823 = vmatprep.subr.bf16.mxu0 0
      %4824 = vmatpush1.bf16.msra.mxu0 0
      %4825 = vmatprep.mubr.bf16.mxu0 0
      %4826 = vmatmul.mubr.bf16.gmra.mrb[0].mxu0 %v4734
      %v4827 = vpop.f32.mrb[0].mxu0
      %v4828 = vadd.f32 %v4779, %v4827
      %v4829 = vpop.f32.mrb[0].mxu0
      %v4830 = vpop.f32.mrb[0].mxu0
      %v4831 = vadd.f32 %v4782, %v4830
      %v4832 = vpop.f32.mrb[0].mxu0
      %4833 = vmatprep.mubr.bf16.mxu0 0
      %4834 = vmatmul.mubr.bf16.gmra.mrb[0].mxu0 %v4737
      %v4835 = vpop.f32.mrb[0].mxu0
      %v4836 = vadd.f32 %v4787, %v4835
      %v4837 = vpop.f32.mrb[0].mxu0
      %v4838 = vpop.f32.mrb[0].mxu0
      %v4839 = vadd.f32 %v4790, %v4838
      %v4840 = vpop.f32.mrb[0].mxu0
      %4841 = vdwg.mxu0
      %v4842 = vadd.f32 %v4708, %v4828
      %v4843 = vadd.f32 %v4709, %v4831
      %v4844 = vadd.f32 %v4710, %v4836
      %v4845 = vadd.f32 %v4711, %v4839
      %vm4846 = vcmp.gt.f32.partialorder %v4842, 0.0
      %vm4847 = vcmp.gt.f32.partialorder %v4843, 0.0
      %vm4848 = vcmp.gt.f32.partialorder %v4844, 0.0
      %vm4849 = vcmp.gt.f32.partialorder %v4845, 0.0
      %v4850 = vmul.f32 %v4842, 0.284
      %v4851 = vmul.f32 %v4843, 0.284
      %v4852 = vmul.f32 %v4844, 0.284
      %v4853 = vmul.f32 %v4845, 0.284
      %v4854 = vsel %vm4846, %v4842, %v4850
      %v4855 = vsel %vm4847, %v4843, %v4851
      %v4856 = vsel %vm4848, %v4844, %v4852
      %v4857 = vsel %vm4849, %v4845, %v4853
      %4858 = vst [vmem:[%s217] sm:$0xff] %v4854
      %4859 = vst [vmem:[%s217 + $0x8] sm:$0xff] %v4855
      %4860 = vst [vmem:[%s217 + $0x10] sm:$0xff] %v4856
      %4861 = vst [vmem:[%s217 + $0x18] sm:$0xff] %v4857
      %p4862 = scmp.lt.s32.totalorder %s15, 2
      %s4863 = scalar_select %p4862, %s15, 2
      %s4864 = smul.addr %s4863, 4
      %s4865 = smul.addr %s4864, 8
      %s4866 = scalar_lea.vmem %s4, %s4865
      // Predicated region
      $region37: #{model_forward.1} parent=35 // pred_check
        %p4867 = pneg %p127
      $region38: #{model_forward.1} parent=35 // pred_check_branch
        %4869 = sbr.rel (%p4867) target = $region40
      $region39: #{model_forward.1} parent=35 // pred_region
        _
      $region40: #{model_forward.1} parent=35 // pred_fallthru
        _
    $region36: #{model_forward.1} parent=5 // pred_fallthru
      _
    %p4870 = scmp.le.s32.totalorder 2, %s10
    // Predicated region
    $region41: #{model_forward.1} parent=5 // pred_check
      %p4871 = pneg %p4870
    $region42: #{model_forward.1} parent=5 // pred_check_branch
      %4873 = sbr.rel (%p4871) target = $region44
    $region43: #{model_forward.1} parent=5 // pred_region
      %s4874 = ssub.s32 %s10, 2
      // Predicated region
      $region45: #{model_forward.1} parent=43 // pred_check
        %p4875 = pneg %p133
      $region46: #{model_forward.1} parent=43 // pred_check_branch
        %4877 = sbr.rel (%p4875) target = $region48
      $region47: #{model_forward.1} parent=43 // pred_region
        %p4878 = scmp.lt.s32.totalorder %s16, 2
        %s4879 = scalar_select %p4878, %s16, 2
        %s4880 = smul.addr %s4879, 4
        %s4881 = smul.addr %s4880, 8
        %s4882 = scalar_lea.vmem %s4, %s4881
      $region48: #{model_forward.1} parent=43 // pred_fallthru
        _
    $region44: #{model_forward.1} parent=5 // pred_fallthru
      _
  $region6: #{model_forward.1} parent=0 // loop_footer
    %s14 = sadd.s32 1, %s10
  $region7: #{model_forward.1} parent=0 // loop_footer_branch
    %9 = sbr.rel target = $region3
  $region8: #{model_forward.1} parent=0 // loop_exit
    _

</llo_original>
